<compile_context>
chip_gen: v7x
topology: tpu7x:2x2x1
jax: 0.10.0
libtpu: 0.0.40
codegen_flags: <defaults>
</compile_context>

<pallas_src>
import math
import functools

import jax
import jax.numpy as jnp
from jax.experimental import pallas as pl
from jax.experimental.pallas import tpu as pltpu


# ----------------------------------------------------------------------------
# Fused kernel: one grid step == one encoder layer (layer 0 also embeds)
# ----------------------------------------------------------------------------
def _encoder_stack_kernel(
    x_ref, pos_ref, emb_w_ref, emb_b_ref, mask_ref,
    wq_ref, wk_ref, wv_ref, wo_ref,
    g1_ref, be1_ref, w1_ref, bf1_ref, w2_ref, bf2_ref, g2_ref, be2_ref,
    out_ref, h_scr,
    *, B, S, D, H, dh, F):
    layer = pl.program_id(0)
    n_layers = pl.num_programs(0)
    BS = B * S
    G = B * H
    inv_sqrt_dh = 1.0 / math.sqrt(dh)
    bf16 = jnp.bfloat16

    # ---- layer 0 only: embedding Linear * sqrt(D) + positional encoding ----
    @pl.when(layer == 0)
    def _():
        x = x_ref[...].astype(bf16)                                   # (BS, I)
        emb = jnp.dot(x, emb_w_ref[...],
                      preferred_element_type=jnp.float32) + emb_b_ref[...]
        h_scr[...] = emb * math.sqrt(D) + pos_ref[...]                # (BS, D) f32

    h = h_scr[...]                                                    # (BS, D) f32

    # ---- multi-head self attention (use_bias=False) ----
    # Replicate activations per (batch, head) group so every matmul is a
    # single-leading-batch-dim batched einsum; no lane-dim slicing or concat.
    xg = jnp.broadcast_to(h.reshape(B, 1, S, D), (B, H, S, D))
    xg = xg.reshape(G, S, D).astype(bf16)                             # (G, S, D)

    def _proj(w_head_ref):                                            # (H, D, dh) bf16
        w = jnp.broadcast_to(w_head_ref[0][None], (B, H, D, dh)).reshape(G, D, dh)
        return jnp.einsum('gsd,gdk->gsk', xg, w,
                          preferred_element_type=jnp.float32)         # (G, S, dh)

    qg = _proj(wq_ref)
    kg = _proj(wk_ref)
    vg = _proj(wv_ref)

    scores = jnp.einsum('gqd,gkd->gqk',
                        qg.astype(bf16), kg.astype(bf16),
                        preferred_element_type=jnp.float32) * inv_sqrt_dh
    # d2l masked_softmax: invalid key positions set to -1e6 before softmax
    scores = jnp.where(mask_ref[...] > 0.5, scores, -1e6)             # (G, S, S)
    m = jnp.max(scores, axis=-1, keepdims=True)
    e = jnp.exp(scores - m)
    denom = jnp.sum(e, axis=-1, keepdims=True)
    attn = e * pl.reciprocal(denom, approx=True)                      # (G, S, S)

    ctx = jnp.einsum('gqk,gkd->gqd',
                     attn.astype(bf16), vg.astype(bf16),
                     preferred_element_type=jnp.float32)              # (G, S, dh)

    # Output projection does the head merge: sum_h ctx_h @ Wo[h*dh:(h+1)*dh, :]
    wo = jnp.broadcast_to(wo_ref[0][None], (B, H, dh, D)).reshape(G, dh, D)
    og = jnp.einsum('gqd,gdn->gqn', ctx.astype(bf16), wo,
                    preferred_element_type=jnp.float32)               # (G, S, D)
    attn_out = jnp.sum(og.reshape(B, H, S, D), axis=1).reshape(BS, D)

    # ---- AddNorm 1 (dropout == identity at inference) ----
    y = h + attn_out
    mean1 = jnp.mean(y, axis=-1, keepdims=True)
    var1 = jnp.mean(jnp.square(y - mean1), axis=-1, keepdims=True)
    y1 = (y - mean1) * jax.lax.rsqrt(var1 + 1e-5) * g1_ref[0] + be1_ref[0]

    # ---- position-wise FFN: Linear -> ReLU -> Linear ----
    h1 = jnp.dot(y1.astype(bf16), w1_ref[0],
                 preferred_element_type=jnp.float32) + bf1_ref[0]
    h1 = jnp.maximum(h1, 0.0)
    ffn = jnp.dot(h1.astype(bf16), w2_ref[0],
                  preferred_element_type=jnp.float32) + bf2_ref[0]

    # ---- AddNorm 2 ----
    z = y1 + ffn
    mean2 = jnp.mean(z, axis=-1, keepdims=True)
    var2 = jnp.mean(jnp.square(z - mean2), axis=-1, keepdims=True)
    h_new = (z - mean2) * jax.lax.rsqrt(var2 + 1e-5) * g2_ref[0] + be2_ref[0]

    h_scr[...] = h_new

    @pl.when(layer == n_layers - 1)
    def _():
        out_ref[...] = h_new


# ----------------------------------------------------------------------------
# Glue: positional-encoding table, parameter init (stacked, head-split), forward
# ----------------------------------------------------------------------------
def positional_encoding(seq_len, num_hiddens):
    pos = jnp.arange(seq_len, dtype=jnp.float32).reshape(-1, 1)
    div = jnp.power(10000.0,
                    jnp.arange(0, num_hiddens, 2, dtype=jnp.float32) / num_hiddens)
    angles = pos / div                                                # (S, D/2)
    P = jnp.zeros((seq_len, num_hiddens), dtype=jnp.float32)
    P = P.at[:, 0::2].set(jnp.sin(angles))
    P = P.at[:, 1::2].set(jnp.cos(angles))
    return P                                                          # (S, D)


def init_params(key, input_size, num_hiddens, ffn_hiddens, num_layers, num_heads):
    D, F, H, L = num_hiddens, ffn_hiddens, num_heads, num_layers
    assert D % H == 0, "num_hiddens must be divisible by num_heads"
    dh = D // H
    bf16 = jnp.bfloat16
    ks = jax.random.split(key, 2 + L)
    emb_w = jax.random.normal(ks[0], (input_size, D), jnp.float32) * 0.1
    emb_b = jax.random.normal(ks[1], (1, D), jnp.float32) * 0.1

    def split_cols(w):   # (D, D) -> (H, D, dh): per-head column blocks of W
        return jnp.transpose(w.reshape(D, H, dh), (1, 0, 2))

    wq, wk, wv, wo, w1, b1, w2, b2 = ([] for _ in range(8))
    for li in range(L):
        lk = jax.random.split(ks[2 + li], 8)
        wq.append(split_cols(jax.random.normal(lk[0], (D, D), jnp.float32) * 0.1))
        wk.append(split_cols(jax.random.normal(lk[1], (D, D), jnp.float32) * 0.1))
        wv.append(split_cols(jax.random.normal(lk[2], (D, D), jnp.float32) * 0.1))
        wo.append((jax.random.normal(lk[3], (D, D), jnp.float32) * 0.1).reshape(H, dh, D))
        w1.append(jax.random.normal(lk[4], (D, F), jnp.float32) * 0.1)
        b1.append(jax.random.normal(lk[5], (1, F), jnp.float32) * 0.1)
        w2.append(jax.random.normal(lk[6], (F, D), jnp.float32) * 0.1)
        b2.append(jax.random.normal(lk[7], (1, D), jnp.float32) * 0.1)

    return {
        "emb_w": emb_w.astype(bf16), "emb_b": emb_b,
        "wq": jnp.stack(wq).astype(bf16),        # (L, H, D, dh)
        "wk": jnp.stack(wk).astype(bf16),        # (L, H, D, dh)
        "wv": jnp.stack(wv).astype(bf16),        # (L, H, D, dh)
        "wo": jnp.stack(wo).astype(bf16),        # (L, H, dh, D)
        "gamma1": jnp.ones((L, 1, D), jnp.float32),
        "beta1": jnp.zeros((L, 1, D), jnp.float32),
        "w1": jnp.stack(w1).astype(bf16),        # (L, D, F)
        "b1": jnp.stack(b1),                     # (L, 1, F)
        "w2": jnp.stack(w2).astype(bf16),        # (L, F, D)
        "b2": jnp.stack(b2),                     # (L, 1, D)
        "gamma2": jnp.ones((L, 1, D), jnp.float32),
        "beta2": jnp.zeros((L, 1, D), jnp.float32),
    }


def transformer_encoder_forward(x, valid_lens, params, num_heads):
    B, S, I = x.shape
    D = params["emb_w"].shape[1]
    H = num_heads
    dh = D // H
    L = params["wq"].shape[0]
    F = params["w1"].shape[2]
    BS, G = B * S, B * H

    if valid_lens is None:
        valid_lens = jnp.full((B,), S, dtype=jnp.int32)
    valid_lens = valid_lens.astype(jnp.int32)

    # Hoisted out of the kernel: positional table and key-validity mask.
    pos_full = jnp.tile(positional_encoding(S, D), (B, 1))            # (BS, D)
    key_ids = jnp.arange(S, dtype=jnp.int32)[None, :]                 # (1, S)
    keep = (key_ids < valid_lens[:, None]).astype(jnp.float32)        # (B, S)
    mask_g = jnp.repeat(keep, H, axis=0)[:, None, :]                  # (G, 1, S)

    x2 = x.reshape(BS, I)

    kern = functools.partial(_encoder_stack_kernel, B=B, S=S, D=D, H=H, dh=dh, F=F)
    fixed2 = lambda l: (0, 0)
    fixed3 = lambda l: (0, 0, 0)
    per_layer3 = lambda l: (l, 0, 0)
    per_layer4 = lambda l: (l, 0, 0, 0)

    out_flat = pl.pallas_call(
        kern,
        out_shape=jax.ShapeDtypeStruct((BS, D), jnp.float32),
        grid=(L,),
        in_specs=[
            pl.BlockSpec((BS, I), fixed2),                 # x (flattened rows)
            pl.BlockSpec((BS, D), fixed2),                 # positional encoding
            pl.BlockSpec((I, D), fixed2),                  # embedding weight
            pl.BlockSpec((1, D), fixed2),                  # embedding bias
            pl.BlockSpec((G, 1, S), fixed3),               # key-validity mask
            pl.BlockSpec((1, H, D, dh), per_layer4),       # wq (per-head)
            pl.BlockSpec((1, H, D, dh), per_layer4),       # wk
            pl.BlockSpec((1, H, D, dh), per_layer4),       # wv
            pl.BlockSpec((1, H, dh, D), per_layer4),       # wo (per-head rows)
            pl.BlockSpec((1, 1, D), per_layer3),           # gamma1
            pl.BlockSpec((1, 1, D), per_layer3),           # beta1
            pl.BlockSpec((1, D, F), per_layer3),           # ffn w1
            pl.BlockSpec((1, 1, F), per_layer3),           # ffn b1
            pl.BlockSpec((1, F, D), per_layer3),           # ffn w2
            pl.BlockSpec((1, 1, D), per_layer3),           # ffn b2
            pl.BlockSpec((1, 1, D), per_layer3),           # gamma2
            pl.BlockSpec((1, 1, D), per_layer3),           # beta2
        ],
        out_specs=pl.BlockSpec((BS, D), fixed2),
        scratch_shapes=[pltpu.VMEM((BS, D), jnp.float32)],
        compiler_params=pltpu.CompilerParams(
            dimension_semantics=("arbitrary",),            # sequential layer carry
            vmem_limit_bytes=32 * 1024 * 1024),
    )(x2, pos_full, params["emb_w"], params["emb_b"], mask_g,
      params["wq"], params["wk"], params["wv"], params["wo"],
      params["gamma1"], params["beta1"],
      params["w1"], params["b1"], params["w2"], params["b2"],
      params["gamma2"], params["beta2"])

    # TODO(synk): per-layer attention_weights (PyTorch module side-effect) are
    # not returned; not needed for the forward output.
    return out_flat.reshape(B, S, D)


if __name__ == "__main__":
    # Small shapes consistent with forward(X: (bs, seq, feature), valid_lens: (bs,)).
    # D and FFN chosen as multiples of 128 so activation last dims are lane-dense.
    B, S, INPUT = 2, 8, 16
    D, HEADS, FFN = 128, 4, 256
    NUM_LAYERS = 2

    key = jax.random.PRNGKey(0)
    kx, kp = jax.random.split(key)
    x = jax.random.normal(kx, (B, S, INPUT), dtype=jnp.float32)
    valid_lens = jnp.array([8, 5], dtype=jnp.int32)

    params = init_params(kp, INPUT, D, FFN, NUM_LAYERS, HEADS)

    out = transformer_encoder_forward(x, valid_lens, params, HEADS)
    jax.block_until_ready(out)
    assert out.shape == (B, S, D)
    print("KERNEL_OK")
</pallas_src>

<mosaic_0001>
module attributes {stable_mosaic.version = 11 : i64} {
  func.func @_encoder_stack_kernel(%arg0: i32, %arg1: memref<16x16xf32, #tpu.memory_space<vmem>>, %arg2: memref<16x128xf32, #tpu.memory_space<vmem>>, %arg3: memref<16x128xbf16, #tpu.memory_space<vmem>>, %arg4: memref<1x128xf32, #tpu.memory_space<vmem>>, %arg5: memref<8x1x8xf32, #tpu.memory_space<vmem>>, %arg6: memref<1x4x128x32xbf16, #tpu.memory_space<vmem>>, %arg7: memref<1x4x128x32xbf16, #tpu.memory_space<vmem>>, %arg8: memref<1x4x128x32xbf16, #tpu.memory_space<vmem>>, %arg9: memref<1x4x32x128xbf16, #tpu.memory_space<vmem>>, %arg10: memref<1x1x128xf32, #tpu.memory_space<vmem>>, %arg11: memref<1x1x128xf32, #tpu.memory_space<vmem>>, %arg12: memref<1x128x256xbf16, #tpu.memory_space<vmem>>, %arg13: memref<1x1x256xf32, #tpu.memory_space<vmem>>, %arg14: memref<1x256x128xbf16, #tpu.memory_space<vmem>>, %arg15: memref<1x1x128xf32, #tpu.memory_space<vmem>>, %arg16: memref<1x1x128xf32, #tpu.memory_space<vmem>>, %arg17: memref<1x1x128xf32, #tpu.memory_space<vmem>>, %arg18: memref<16x128xf32, #tpu.memory_space<vmem>>, %arg19: memref<16x128xf32, #tpu.memory_space<vmem>>) attributes {dimension_semantics = [#tpu.dimension_semantics<arbitrary>], iteration_bounds = array<i64: 2>, scalar_prefetch = 0 : i64, scratch_operands = 1 : i64, tpu.core_type = #tpu.core_type<tc>, window_params = [{pipeline_mode = #tpu.pipeline_mode<synchronous>, transform_indices = @transform_0, window_bounds = array<i64: 16, 16>}, {pipeline_mode = #tpu.pipeline_mode<synchronous>, transform_indices = @transform_1, window_bounds = array<i64: 16, 128>}, {pipeline_mode = #tpu.pipeline_mode<synchronous>, transform_indices = @transform_2, window_bounds = array<i64: 16, 128>}, {pipeline_mode = #tpu.pipeline_mode<synchronous>, transform_indices = @transform_3, window_bounds = array<i64: 1, 128>}, {pipeline_mode = #tpu.pipeline_mode<synchronous>, transform_indices = @transform_4, window_bounds = array<i64: 8, 1, 8>}, {transform_indices = @transform_5, window_bounds = array<i64: 1, 4, 128, 32>}, {transform_indices = @transform_6, window_bounds = array<i64: 1, 4, 128, 32>}, {transform_indices = @transform_7, window_bounds = array<i64: 1, 4, 128, 32>}, {transform_indices = @transform_8, window_bounds = array<i64: 1, 4, 32, 128>}, {transform_indices = @transform_9, window_bounds = array<i64: 1, 1, 128>}, {transform_indices = @transform_10, window_bounds = array<i64: 1, 1, 128>}, {transform_indices = @transform_11, window_bounds = array<i64: 1, 128, 256>}, {transform_indices = @transform_12, window_bounds = array<i64: 1, 1, 256>}, {transform_indices = @transform_13, window_bounds = array<i64: 1, 256, 128>}, {transform_indices = @transform_14, window_bounds = array<i64: 1, 1, 128>}, {transform_indices = @transform_15, window_bounds = array<i64: 1, 1, 128>}, {transform_indices = @transform_16, window_bounds = array<i64: 1, 1, 128>}, {pipeline_mode = #tpu.pipeline_mode<synchronous>, transform_indices = @transform_17, window_bounds = array<i64: 16, 128>}]} {
    %c0_i32 = arith.constant 0 : i32
    %0 = arith.cmpi eq, %arg0, %c0_i32 : i32
    %1 = arith.extui %0 : i1 to i32
    %c0_i32_0 = arith.constant 0 : i32
    %2 = arith.cmpi ne, %1, %c0_i32_0 : i32
    scf.if %2 {
      %c0_72 = arith.constant 0 : index
      %c0_73 = arith.constant 0 : index
      %142 = vector.load %arg1[%c0_72, %c0_73] : memref<16x16xf32, #tpu.memory_space<vmem>>, vector<16x16xf32>
      %143 = arith.truncf %142 : vector<16x16xf32> to vector<16x16xbf16>
      %c0_74 = arith.constant 0 : index
      %c0_75 = arith.constant 0 : index
      %144 = vector.load %arg3[%c0_74, %c0_75] : memref<16x128xbf16, #tpu.memory_space<vmem>>, vector<16x128xbf16>
      %cst_76 = arith.constant dense<0.000000e+00> : vector<16x128xf32>
      %145 = tpu.matmul %143, %144, %cst_76 {dimension_numbers = #tpu.dot_dimension_numbers<[1], [0], [0], [1], [0, 0, 1, 1], [], []>} : vector<16x16xbf16>, vector<16x128xbf16>, vector<16x128xf32> -> vector<16x128xf32>
      %c0_77 = arith.constant 0 : index
      %c0_78 = arith.constant 0 : index
      %146 = vector.load %arg4[%c0_77, %c0_78] : memref<1x128xf32, #tpu.memory_space<vmem>>, vector<1x128xf32>
      %147 = vector.broadcast %146 : vector<1x128xf32> to vector<16x128xf32>
      %148 = arith.addf %145, %147 : vector<16x128xf32>
      %cst_79 = arith.constant 11.3137083 : f32
      %149 = vector.broadcast %cst_79 : f32 to vector<16x128xf32>
      %150 = arith.mulf %148, %149 : vector<16x128xf32>
      %c0_80 = arith.constant 0 : index
      %c0_81 = arith.constant 0 : index
      %151 = vector.load %arg2[%c0_80, %c0_81] : memref<16x128xf32, #tpu.memory_space<vmem>>, vector<16x128xf32>
      %152 = arith.addf %150, %151 : vector<16x128xf32>
      %c0_82 = arith.constant 0 : index
      %c0_83 = arith.constant 0 : index
      %153 = vector.load %arg19[%c0_82, %c0_83] : memref<16x128xf32, #tpu.memory_space<vmem>>, vector<16x128xf32>
      tpu.vector_store %arg19[%c0_82, %c0_83], %152 {strides = array<i32>} : memref<16x128xf32, #tpu.memory_space<vmem>>, vector<16x128xf32>,
    } else {
    }
    %c0 = arith.constant 0 : index
    %c0_1 = arith.constant 0 : index
    %3 = vector.load %arg19[%c0, %c0_1] : memref<16x128xf32, #tpu.memory_space<vmem>>, vector<16x128xf32>
    %4 = vector.shape_cast %3 : vector<16x128xf32> to vector<2x1x8x128xf32>
    %5 = vector.shape_cast %4 : vector<2x1x8x128xf32> to vector<2x1x8x128xf32>
    %6 = vector.broadcast %5 : vector<2x1x8x128xf32> to vector<2x4x8x128xf32>
    %7 = vector.shape_cast %6 : vector<2x4x8x128xf32> to vector<8x8x128xf32>
    %8 = arith.truncf %7 : vector<8x8x128xf32> to vector<8x8x128xbf16>
    %c0_2 = arith.constant 0 : index
    %c0_3 = arith.constant 0 : index
    %c0_4 = arith.constant 0 : index
    %c0_5 = arith.constant 0 : index
    %9 = vector.load %arg6[%c0_2, %c0_3, %c0_4, %c0_5] : memref<1x4x128x32xbf16, #tpu.memory_space<vmem>>, vector<1x4x128x32xbf16>
    %10 = vector.shape_cast %9 : vector<1x4x128x32xbf16> to vector<4x128x32xbf16>
    %11 = vector.shape_cast %10 : vector<4x128x32xbf16> to vector<1x4x128x32xbf16>
    %12 = vector.shape_cast %11 : vector<1x4x128x32xbf16> to vector<1x4x128x32xbf16>
    %13 = vector.broadcast %12 : vector<1x4x128x32xbf16> to vector<2x4x128x32xbf16>
    %14 = vector.shape_cast %13 : vector<2x4x128x32xbf16> to vector<8x128x32xbf16>
    "tpu.trace_start"() <{level = 10 : i32, message = "gsd,gdk->gsk"}> : () -> ()
    %cst = arith.constant dense<0.000000e+00> : vector<8x8x32xf32>
    %15 = tpu.matmul %8, %14, %cst {dimension_numbers = #tpu.dot_dimension_numbers<[2], [1], [1], [2], [0, 0, 0, 1, 1, 2], [0], [0]>} : vector<8x8x128xbf16>, vector<8x128x32xbf16>, vector<8x8x32xf32> -> vector<8x8x32xf32>
    "tpu.trace_stop"() : () -> ()
    %c0_6 = arith.constant 0 : index
    %c0_7 = arith.constant 0 : index
    %c0_8 = arith.constant 0 : index
    %c0_9 = arith.constant 0 : index
    %16 = vector.load %arg7[%c0_6, %c0_7, %c0_8, %c0_9] : memref<1x4x128x32xbf16, #tpu.memory_space<vmem>>, vector<1x4x128x32xbf16>
    %17 = vector.shape_cast %16 : vector<1x4x128x32xbf16> to vector<4x128x32xbf16>
    %18 = vector.shape_cast %17 : vector<4x128x32xbf16> to vector<1x4x128x32xbf16>
    %19 = vector.shape_cast %18 : vector<1x4x128x32xbf16> to vector<1x4x128x32xbf16>
    %20 = vector.broadcast %19 : vector<1x4x128x32xbf16> to vector<2x4x128x32xbf16>
    %21 = vector.shape_cast %20 : vector<2x4x128x32xbf16> to vector<8x128x32xbf16>
    "tpu.trace_start"() <{level = 10 : i32, message = "gsd,gdk->gsk"}> : () -> ()
    %cst_10 = arith.constant dense<0.000000e+00> : vector<8x8x32xf32>
    %22 = tpu.matmul %8, %21, %cst_10 {dimension_numbers = #tpu.dot_dimension_numbers<[2], [1], [1], [2], [0, 0, 0, 1, 1, 2], [0], [0]>} : vector<8x8x128xbf16>, vector<8x128x32xbf16>, vector<8x8x32xf32> -> vector<8x8x32xf32>
    "tpu.trace_stop"() : () -> ()
    %c0_11 = arith.constant 0 : index
    %c0_12 = arith.constant 0 : index
    %c0_13 = arith.constant 0 : index
    %c0_14 = arith.constant 0 : index
    %23 = vector.load %arg8[%c0_11, %c0_12, %c0_13, %c0_14] : memref<1x4x128x32xbf16, #tpu.memory_space<vmem>>, vector<1x4x128x32xbf16>
    %24 = vector.shape_cast %23 : vector<1x4x128x32xbf16> to vector<4x128x32xbf16>
    %25 = vector.shape_cast %24 : vector<4x128x32xbf16> to vector<1x4x128x32xbf16>
    %26 = vector.shape_cast %25 : vector<1x4x128x32xbf16> to vector<1x4x128x32xbf16>
    %27 = vector.broadcast %26 : vector<1x4x128x32xbf16> to vector<2x4x128x32xbf16>
    %28 = vector.shape_cast %27 : vector<2x4x128x32xbf16> to vector<8x128x32xbf16>
    "tpu.trace_start"() <{level = 10 : i32, message = "gsd,gdk->gsk"}> : () -> ()
    %cst_15 = arith.constant dense<0.000000e+00> : vector<8x8x32xf32>
    %29 = tpu.matmul %8, %28, %cst_15 {dimension_numbers = #tpu.dot_dimension_numbers<[2], [1], [1], [2], [0, 0, 0, 1, 1, 2], [0], [0]>} : vector<8x8x128xbf16>, vector<8x128x32xbf16>, vector<8x8x32xf32> -> vector<8x8x32xf32>
    "tpu.trace_stop"() : () -> ()
    %30 = arith.truncf %15 : vector<8x8x32xf32> to vector<8x8x32xbf16>
    %31 = arith.truncf %22 : vector<8x8x32xf32> to vector<8x8x32xbf16>
    "tpu.trace_start"() <{level = 10 : i32, message = "gqd,gkd->gqk"}> : () -> ()
    %cst_16 = arith.constant dense<0.000000e+00> : vector<8x8x8xf32>
    %32 = tpu.matmul %30, %31, %cst_16 {dimension_numbers = #tpu.dot_dimension_numbers<[2], [2], [1], [1], [0, 0, 0, 1, 1, 1], [0], [0]>} : vector<8x8x32xbf16>, vector<8x8x32xbf16>, vector<8x8x8xf32> -> vector<8x8x8xf32>
    "tpu.trace_stop"() : () -> ()
    %cst_17 = arith.constant 0.176776692 : f32
    %33 = vector.broadcast %cst_17 : f32 to vector<8x8x8xf32>
    %34 = arith.mulf %32, %33 : vector<8x8x8xf32>
    %c0_18 = arith.constant 0 : index
    %c0_19 = arith.constant 0 : index
    %c0_20 = arith.constant 0 : index
    %35 = vector.load %arg5[%c0_18, %c0_19, %c0_20] : memref<8x1x8xf32, #tpu.memory_space<vmem>>, vector<8x1x8xf32>
    %cst_21 = arith.constant 5.000000e-01 : f32
    %36 = vector.broadcast %cst_21 : f32 to vector<8x1x8xf32>
    %37 = arith.cmpf ogt, %35, %36 : vector<8x1x8xf32>
    %cst_22 = arith.constant -1.000000e+06 : f32
    %38 = vector.shape_cast %37 : vector<8x1x8xi1> to vector<8x1x8xi1>
    %39 = vector.broadcast %38 : vector<8x1x8xi1> to vector<8x8x8xi1>
    %40 = vector.broadcast %cst_22 : f32 to vector<8x8x8xf32>
    %41 = arith.select %39, %34, %40 : vector<8x8x8xi1>, vector<8x8x8xf32>
    %cst_23 = arith.constant dense<0xFF800000> : vector<8x8xf32>
    %42 = vector.multi_reduction <maximumf>, %41, %cst_23 [2] : vector<8x8x8xf32> to vector<8x8xf32>
    %43 = vector.shape_cast %42 : vector<8x8xf32> to vector<8x8x1xf32>
    %44 = vector.broadcast %43 : vector<8x8x1xf32> to vector<8x8x8xf32>
    %45 = arith.subf %41, %44 : vector<8x8x8xf32>
    %46 = math.exp %45 : vector<8x8x8xf32>
    %cst_24 = arith.constant dense<0.000000e+00> : vector<8x8xf32>
    %47 = vector.multi_reduction <add>, %46, %cst_24 [2] : vector<8x8x8xf32> to vector<8x8xf32>
    %48 = vector.shape_cast %47 : vector<8x8xf32> to vector<8x8x1xf32>
    %49 = tpu.reciprocal %48 {approx = true} : vector<8x8x1xf32> -> vector<8x8x1xf32>
    %50 = vector.broadcast %49 : vector<8x8x1xf32> to vector<8x8x8xf32>
    %51 = arith.mulf %46, %50 : vector<8x8x8xf32>
    %52 = arith.truncf %51 : vector<8x8x8xf32> to vector<8x8x8xbf16>
    %53 = arith.truncf %29 : vector<8x8x32xf32> to vector<8x8x32xbf16>
    "tpu.trace_start"() <{level = 10 : i32, message = "gqk,gkd->gqd"}> : () -> ()
    %cst_25 = arith.constant dense<0.000000e+00> : vector<8x8x32xf32>
    %54 = tpu.matmul %52, %53, %cst_25 {dimension_numbers = #tpu.dot_dimension_numbers<[2], [1], [1], [2], [0, 0, 0, 1, 1, 2], [0], [0]>} : vector<8x8x8xbf16>, vector<8x8x32xbf16>, vector<8x8x32xf32> -> vector<8x8x32xf32>
    "tpu.trace_stop"() : () -> ()
    %c0_26 = arith.constant 0 : index
    %c0_27 = arith.constant 0 : index
    %c0_28 = arith.constant 0 : index
    %c0_29 = arith.constant 0 : index
    %55 = vector.load %arg9[%c0_26, %c0_27, %c0_28, %c0_29] : memref<1x4x32x128xbf16, #tpu.memory_space<vmem>>, vector<1x4x32x128xbf16>
    %56 = vector.shape_cast %55 : vector<1x4x32x128xbf16> to vector<4x32x128xbf16>
    %57 = vector.shape_cast %56 : vector<4x32x128xbf16> to vector<1x4x32x128xbf16>
    %58 = vector.shape_cast %57 : vector<1x4x32x128xbf16> to vector<1x4x32x128xbf16>
    %59 = vector.broadcast %58 : vector<1x4x32x128xbf16> to vector<2x4x32x128xbf16>
    %60 = vector.shape_cast %59 : vector<2x4x32x128xbf16> to vector<8x32x128xbf16>
    %61 = arith.truncf %54 : vector<8x8x32xf32> to vector<8x8x32xbf16>
    "tpu.trace_start"() <{level = 10 : i32, message = "gqd,gdn->gqn"}> : () -> ()
    %cst_30 = arith.constant dense<0.000000e+00> : vector<8x8x128xf32>
    %62 = tpu.matmul %61, %60, %cst_30 {dimension_numbers = #tpu.dot_dimension_numbers<[2], [1], [1], [2], [0, 0, 0, 1, 1, 2], [0], [0]>} : vector<8x8x32xbf16>, vector<8x32x128xbf16>, vector<8x8x128xf32> -> vector<8x8x128xf32>
    "tpu.trace_stop"() : () -> ()
    %63 = vector.shape_cast %62 : vector<8x8x128xf32> to vector<2x4x8x128xf32>
    %cst_31 = arith.constant dense<0.000000e+00> : vector<2x8x128xf32>
    %64 = vector.multi_reduction <add>, %63, %cst_31 [1] : vector<2x4x8x128xf32> to vector<2x8x128xf32>
    %65 = vector.shape_cast %64 : vector<2x8x128xf32> to vector<16x128xf32>
    %66 = arith.addf %3, %65 : vector<16x128xf32>
    %cst_32 = arith.constant dense<0.000000e+00> : vector<16xf32>
    %67 = vector.multi_reduction <add>, %66, %cst_32 [1] : vector<16x128xf32> to vector<16xf32>
    %68 = vector.shape_cast %67 : vector<16xf32> to vector<16x1xf32>
    %cst_33 = arith.constant 1.280000e+02 : f32
    %69 = vector.broadcast %cst_33 : f32 to vector<16x1xf32>
    %70 = arith.divf %68, %69 : vector<16x1xf32>
    %71 = vector.broadcast %70 : vector<16x1xf32> to vector<16x128xf32>
    %72 = arith.subf %66, %71 : vector<16x128xf32>
    %73 = arith.mulf %72, %72 : vector<16x128xf32>
    %cst_34 = arith.constant dense<0.000000e+00> : vector<16xf32>
    %74 = vector.multi_reduction <add>, %73, %cst_34 [1] : vector<16x128xf32> to vector<16xf32>
    %75 = vector.shape_cast %74 : vector<16xf32> to vector<16x1xf32>
    %cst_35 = arith.constant 1.280000e+02 : f32
    %76 = vector.broadcast %cst_35 : f32 to vector<16x1xf32>
    %77 = arith.divf %75, %76 : vector<16x1xf32>
    %78 = vector.broadcast %70 : vector<16x1xf32> to vector<16x128xf32>
    %79 = arith.subf %66, %78 : vector<16x128xf32>
    %cst_36 = arith.constant 9.99999974E-6 : f32
    %80 = vector.broadcast %cst_36 : f32 to vector<16x1xf32>
    %81 = arith.addf %77, %80 : vector<16x1xf32>
    %82 = math.rsqrt %81 : vector<16x1xf32>
    %83 = vector.broadcast %82 : vector<16x1xf32> to vector<16x128xf32>
    %84 = arith.mulf %79, %83 : vector<16x128xf32>
    %c0_37 = arith.constant 0 : index
    %c0_38 = arith.constant 0 : index
    %c0_39 = arith.constant 0 : index
    %85 = vector.load %arg10[%c0_37, %c0_38, %c0_39] : memref<1x1x128xf32, #tpu.memory_space<vmem>>, vector<1x1x128xf32>
    %86 = vector.shape_cast %85 : vector<1x1x128xf32> to vector<1x128xf32>
    %87 = vector.broadcast %86 : vector<1x128xf32> to vector<16x128xf32>
    %88 = arith.mulf %84, %87 : vector<16x128xf32>
    %c0_40 = arith.constant 0 : index
    %c0_41 = arith.constant 0 : index
    %c0_42 = arith.constant 0 : index
    %89 = vector.load %arg11[%c0_40, %c0_41, %c0_42] : memref<1x1x128xf32, #tpu.memory_space<vmem>>, vector<1x1x128xf32>
    %90 = vector.shape_cast %89 : vector<1x1x128xf32> to vector<1x128xf32>
    %91 = vector.broadcast %90 : vector<1x128xf32> to vector<16x128xf32>
    %92 = arith.addf %88, %91 : vector<16x128xf32>
    %93 = arith.truncf %92 : vector<16x128xf32> to vector<16x128xbf16>
    %c0_43 = arith.constant 0 : index
    %c0_44 = arith.constant 0 : index
    %c0_45 = arith.constant 0 : index
    %94 = vector.load %arg12[%c0_43, %c0_44, %c0_45] : memref<1x128x256xbf16, #tpu.memory_space<vmem>>, vector<1x128x256xbf16>
    %95 = vector.shape_cast %94 : vector<1x128x256xbf16> to vector<128x256xbf16>
    %cst_46 = arith.constant dense<0.000000e+00> : vector<16x256xf32>
    %96 = tpu.matmul %93, %95, %cst_46 {dimension_numbers = #tpu.dot_dimension_numbers<[1], [0], [0], [1], [0, 0, 1, 1], [], []>} : vector<16x128xbf16>, vector<128x256xbf16>, vector<16x256xf32> -> vector<16x256xf32>
    %c0_47 = arith.constant 0 : index
    %c0_48 = arith.constant 0 : index
    %c0_49 = arith.constant 0 : index
    %97 = vector.load %arg13[%c0_47, %c0_48, %c0_49] : memref<1x1x256xf32, #tpu.memory_space<vmem>>, vector<1x1x256xf32>
    %98 = vector.shape_cast %97 : vector<1x1x256xf32> to vector<1x256xf32>
    %99 = vector.broadcast %98 : vector<1x256xf32> to vector<16x256xf32>
    %100 = arith.addf %96, %99 : vector<16x256xf32>
    %cst_50 = arith.constant 0.000000e+00 : f32
    %101 = vector.broadcast %cst_50 : f32 to vector<16x256xf32>
    %102 = arith.maximumf %100, %101 : vector<16x256xf32>
    %103 = arith.truncf %102 : vector<16x256xf32> to vector<16x256xbf16>
    %c0_51 = arith.constant 0 : index
    %c0_52 = arith.constant 0 : index
    %c0_53 = arith.constant 0 : index
    %104 = vector.load %arg14[%c0_51, %c0_52, %c0_53] : memref<1x256x128xbf16, #tpu.memory_space<vmem>>, vector<1x256x128xbf16>
    %105 = vector.shape_cast %104 : vector<1x256x128xbf16> to vector<256x128xbf16>
    %cst_54 = arith.constant dense<0.000000e+00> : vector<16x128xf32>
    %106 = tpu.matmul %103, %105, %cst_54 {dimension_numbers = #tpu.dot_dimension_numbers<[1], [0], [0], [1], [0, 0, 1, 1], [], []>} : vector<16x256xbf16>, vector<256x128xbf16>, vector<16x128xf32> -> vector<16x128xf32>
    %c0_55 = arith.constant 0 : index
    %c0_56 = arith.constant 0 : index
    %c0_57 = arith.constant 0 : index
    %107 = vector.load %arg15[%c0_55, %c0_56, %c0_57] : memref<1x1x128xf32, #tpu.memory_space<vmem>>, vector<1x1x128xf32>
    %108 = vector.shape_cast %107 : vector<1x1x128xf32> to vector<1x128xf32>
    %109 = vector.broadcast %108 : vector<1x128xf32> to vector<16x128xf32>
    %110 = arith.addf %106, %109 : vector<16x128xf32>
    %111 = arith.addf %92, %110 : vector<16x128xf32>
    %cst_58 = arith.constant dense<0.000000e+00> : vector<16xf32>
    %112 = vector.multi_reduction <add>, %111, %cst_58 [1] : vector<16x128xf32> to vector<16xf32>
    %113 = vector.shape_cast %112 : vector<16xf32> to vector<16x1xf32>
    %cst_59 = arith.constant 1.280000e+02 : f32
    %114 = vector.broadcast %cst_59 : f32 to vector<16x1xf32>
    %115 = arith.divf %113, %114 : vector<16x1xf32>
    %116 = vector.broadcast %115 : vector<16x1xf32> to vector<16x128xf32>
    %117 = arith.subf %111, %116 : vector<16x128xf32>
    %118 = arith.mulf %117, %117 : vector<16x128xf32>
    %cst_60 = arith.constant dense<0.000000e+00> : vector<16xf32>
    %119 = vector.multi_reduction <add>, %118, %cst_60 [1] : vector<16x128xf32> to vector<16xf32>
    %120 = vector.shape_cast %119 : vector<16xf32> to vector<16x1xf32>
    %cst_61 = arith.constant 1.280000e+02 : f32
    %121 = vector.broadcast %cst_61 : f32 to vector<16x1xf32>
    %122 = arith.divf %120, %121 : vector<16x1xf32>
    %123 = vector.broadcast %115 : vector<16x1xf32> to vector<16x128xf32>
    %124 = arith.subf %111, %123 : vector<16x128xf32>
    %cst_62 = arith.constant 9.99999974E-6 : f32
    %125 = vector.broadcast %cst_62 : f32 to vector<16x1xf32>
    %126 = arith.addf %122, %125 : vector<16x1xf32>
    %127 = math.rsqrt %126 : vector<16x1xf32>
    %128 = vector.broadcast %127 : vector<16x1xf32> to vector<16x128xf32>
    %129 = arith.mulf %124, %128 : vector<16x128xf32>
    %c0_63 = arith.constant 0 : index
    %c0_64 = arith.constant 0 : index
    %c0_65 = arith.constant 0 : index
    %130 = vector.load %arg16[%c0_63, %c0_64, %c0_65] : memref<1x1x128xf32, #tpu.memory_space<vmem>>, vector<1x1x128xf32>
    %131 = vector.shape_cast %130 : vector<1x1x128xf32> to vector<1x128xf32>
    %132 = vector.broadcast %131 : vector<1x128xf32> to vector<16x128xf32>
    %133 = arith.mulf %129, %132 : vector<16x128xf32>
    %c0_66 = arith.constant 0 : index
    %c0_67 = arith.constant 0 : index
    %c0_68 = arith.constant 0 : index
    %134 = vector.load %arg17[%c0_66, %c0_67, %c0_68] : memref<1x1x128xf32, #tpu.memory_space<vmem>>, vector<1x1x128xf32>
    %135 = vector.shape_cast %134 : vector<1x1x128xf32> to vector<1x128xf32>
    %136 = vector.broadcast %135 : vector<1x128xf32> to vector<16x128xf32>
    %137 = arith.addf %133, %136 : vector<16x128xf32>
    %c0_69 = arith.constant 0 : index
    %c0_70 = arith.constant 0 : index
    %138 = vector.load %arg19[%c0_69, %c0_70] : memref<16x128xf32, #tpu.memory_space<vmem>>, vector<16x128xf32>
    tpu.vector_store %arg19[%c0_69, %c0_70], %137 {strides = array<i32>} : memref<16x128xf32, #tpu.memory_space<vmem>>, vector<16x128xf32>,
    %c1_i32 = arith.constant 1 : i32
    %139 = arith.cmpi eq, %arg0, %c1_i32 : i32
    %140 = arith.extui %139 : i1 to i32
    %c0_i32_71 = arith.constant 0 : i32
    %141 = arith.cmpi ne, %140, %c0_i32_71 : i32
    scf.if %141 {
      %c0_72 = arith.constant 0 : index
      %c0_73 = arith.constant 0 : index
      %142 = vector.load %arg18[%c0_72, %c0_73] : memref<16x128xf32, #tpu.memory_space<vmem>>, vector<16x128xf32>
      tpu.vector_store %arg18[%c0_72, %c0_73], %137 {strides = array<i32>} : memref<16x128xf32, #tpu.memory_space<vmem>>, vector<16x128xf32>,
    } else {
    }
    return
  }
  func.func @transform_0(%arg0: i32) -> (i32, i32) {
    %c0_i32 = arith.constant 0 : i32
    %c0_i32_0 = arith.constant 0 : i32
    %c0_i32_1 = arith.constant 0 : i32
    return %c0_i32, %c0_i32_0 : i32, i32
  }
  func.func @transform_1(%arg0: i32) -> (i32, i32) {
    %c0_i32 = arith.constant 0 : i32
    %c0_i32_0 = arith.constant 0 : i32
    %c0_i32_1 = arith.constant 0 : i32
    return %c0_i32, %c0_i32_0 : i32, i32
  }
  func.func @transform_2(%arg0: i32) -> (i32, i32) {
    %c0_i32 = arith.constant 0 : i32
    %c0_i32_0 = arith.constant 0 : i32
    %c0_i32_1 = arith.constant 0 : i32
    return %c0_i32, %c0_i32_0 : i32, i32
  }
  func.func @transform_3(%arg0: i32) -> (i32, i32) {
    %c0_i32 = arith.constant 0 : i32
    %c0_i32_0 = arith.constant 0 : i32
    %c0_i32_1 = arith.constant 0 : i32
    return %c0_i32, %c0_i32_0 : i32, i32
  }
  func.func @transform_4(%arg0: i32) -> (i32, i32, i32) {
    %c0_i32 = arith.constant 0 : i32
    %c0_i32_0 = arith.constant 0 : i32
    %c0_i32_1 = arith.constant 0 : i32
    %c0_i32_2 = arith.constant 0 : i32
    return %c0_i32, %c0_i32_0, %c0_i32_1 : i32, i32, i32
  }
  func.func @transform_5(%arg0: i32) -> (i32, i32, i32, i32) {
    %c0_i32 = arith.constant 0 : i32
    %c0_i32_0 = arith.constant 0 : i32
    %c0_i32_1 = arith.constant 0 : i32
    %c0_i32_2 = arith.constant 0 : i32
    return %arg0, %c0_i32, %c0_i32_0, %c0_i32_1 : i32, i32, i32, i32
  }
  func.func @transform_6(%arg0: i32) -> (i32, i32, i32, i32) {
    %c0_i32 = arith.constant 0 : i32
    %c0_i32_0 = arith.constant 0 : i32
    %c0_i32_1 = arith.constant 0 : i32
    %c0_i32_2 = arith.constant 0 : i32
    return %arg0, %c0_i32, %c0_i32_0, %c0_i32_1 : i32, i32, i32, i32
  }
  func.func @transform_7(%arg0: i32) -> (i32, i32, i32, i32) {
    %c0_i32 = arith.constant 0 : i32
    %c0_i32_0 = arith.constant 0 : i32
    %c0_i32_1 = arith.constant 0 : i32
    %c0_i32_2 = arith.constant 0 : i32
    return %arg0, %c0_i32, %c0_i32_0, %c0_i32_1 : i32, i32, i32, i32
  }
  func.func @transform_8(%arg0: i32) -> (i32, i32, i32, i32) {
    %c0_i32 = arith.constant 0 : i32
    %c0_i32_0 = arith.constant 0 : i32
    %c0_i32_1 = arith.constant 0 : i32
    %c0_i32_2 = arith.constant 0 : i32
    return %arg0, %c0_i32, %c0_i32_0, %c0_i32_1 : i32, i32, i32, i32
  }
  func.func @transform_9(%arg0: i32) -> (i32, i32, i32) {
    %c0_i32 = arith.constant 0 : i32
    %c0_i32_0 = arith.constant 0 : i32
    %c0_i32_1 = arith.constant 0 : i32
    return %arg0, %c0_i32, %c0_i32_0 : i32, i32, i32
  }
  func.func @transform_10(%arg0: i32) -> (i32, i32, i32) {
    %c0_i32 = arith.constant 0 : i32
    %c0_i32_0 = arith.constant 0 : i32
    %c0_i32_1 = arith.constant 0 : i32
    return %arg0, %c0_i32, %c0_i32_0 : i32, i32, i32
  }
  func.func @transform_11(%arg0: i32) -> (i32, i32, i32) {
    %c0_i32 = arith.constant 0 : i32
    %c0_i32_0 = arith.constant 0 : i32
    %c0_i32_1 = arith.constant 0 : i32
    return %arg0, %c0_i32, %c0_i32_0 : i32, i32, i32
  }
  func.func @transform_12(%arg0: i32) -> (i32, i32, i32) {
    %c0_i32 = arith.constant 0 : i32
    %c0_i32_0 = arith.constant 0 : i32
    %c0_i32_1 = arith.constant 0 : i32
    return %arg0, %c0_i32, %c0_i32_0 : i32, i32, i32
  }
  func.func @transform_13(%arg0: i32) -> (i32, i32, i32) {
    %c0_i32 = arith.constant 0 : i32
    %c0_i32_0 = arith.constant 0 : i32
    %c0_i32_1 = arith.constant 0 : i32
    return %arg0, %c0_i32, %c0_i32_0 : i32, i32, i32
  }
  func.func @transform_14(%arg0: i32) -> (i32, i32, i32) {
    %c0_i32 = arith.constant 0 : i32
    %c0_i32_0 = arith.constant 0 : i32
    %c0_i32_1 = arith.constant 0 : i32
    return %arg0, %c0_i32, %c0_i32_0 : i32, i32, i32
  }
  func.func @transform_15(%arg0: i32) -> (i32, i32, i32) {
    %c0_i32 = arith.constant 0 : i32
    %c0_i32_0 = arith.constant 0 : i32
    %c0_i32_1 = arith.constant 0 : i32
    return %arg0, %c0_i32, %c0_i32_0 : i32, i32, i32
  }
  func.func @transform_16(%arg0: i32) -> (i32, i32, i32) {
    %c0_i32 = arith.constant 0 : i32
    %c0_i32_0 = arith.constant 0 : i32
    %c0_i32_1 = arith.constant 0 : i32
    return %arg0, %c0_i32, %c0_i32_0 : i32, i32, i32
  }
  func.func @transform_17(%arg0: i32) -> (i32, i32) {
    %c0_i32 = arith.constant 0 : i32
    %c0_i32_0 = arith.constant 0 : i32
    %c0_i32_1 = arith.constant 0 : i32
    return %c0_i32, %c0_i32_0 : i32, i32
  }
}

</mosaic_0001>

<llo_original>
// kernel: tpu_custom_call.1
$region0: #{tpu_custom_call.1}
  #allocation0 [shape = 'u32[]', space=smem, size = 0x4, offset = 0x4, fixed_abs, tag = 'smem constant byte address 0x4 - core index']
  #allocation1 [shape = 'u32[144,128]{1,0:T(1,128)}', space=vmem, size = 0x12000, scoped, tag = 'internal scratch']
  #allocation2 [shape = 'f32[16,128]{1,0:T(8,128)}', space=vmem, size = 0x2000, scoped, tag = 'scratch operand']
  %s0 = inlined_call_operand.vmem [shape: f32[16,16], index: 0, kind: input, shape index: {}]
  %s1 = inlined_call_operand.vmem [shape: f32[16,128], index: 1, kind: input, shape index: {}]
  %s2 = inlined_call_operand.vmem [shape: bf16[16,128], index: 2, kind: input, shape index: {}]
  %s3 = inlined_call_operand.vmem [shape: f32[1,128], index: 3, kind: input, shape index: {}]
  %s4 = inlined_call_operand.vmem [shape: f32[8,1,8], index: 4, kind: input, shape index: {}]
  %s5 = inlined_call_operand.vmem [shape: bf16[2,4,128,32], index: 5, kind: input, shape index: {}]
  %s6 = inlined_call_operand.vmem [shape: bf16[2,4,128,32], index: 6, kind: input, shape index: {}]
  %s7 = inlined_call_operand.vmem [shape: bf16[2,4,128,32], index: 7, kind: input, shape index: {}]
  %s8 = inlined_call_operand.vmem [shape: bf16[2,4,32,128], index: 8, kind: input, shape index: {}]
  %s9 = inlined_call_operand.vmem [shape: f32[2,1,128], index: 9, kind: input, shape index: {}]
  %s10 = inlined_call_operand.vmem [shape: f32[2,1,128], index: 10, kind: input, shape index: {}]
  %s11 = inlined_call_operand.vmem [shape: bf16[2,128,256], index: 11, kind: input, shape index: {}]
  %s12 = inlined_call_operand.vmem [shape: f32[2,1,256], index: 12, kind: input, shape index: {}]
  %s13 = inlined_call_operand.vmem [shape: bf16[2,256,128], index: 13, kind: input, shape index: {}]
  %s14 = inlined_call_operand.vmem [shape: f32[2,1,128], index: 14, kind: input, shape index: {}]
  %s15 = inlined_call_operand.vmem [shape: f32[2,1,128], index: 15, kind: input, shape index: {}]
  %s16 = inlined_call_operand.vmem [shape: f32[2,1,128], index: 16, kind: input, shape index: {}]
  %s17 = inlined_call_operand.hbm [shape: f32[16,128], index: 17, kind: output, shape index: {}]
  %s18 = sld [smem:[#allocation0]]
  $region109: #{tpu_custom_call.1} parent=0
    _
  %s20 = ssub.s32 1, %s18
  %s21 = scalar_select 0, %s20, %s18
  $region1: #{tpu_custom_call.1} parent=0
    #allocation3 [shape = 'u8[8192]{0}', space=vmem, size = 0x2000, scoped, tag = 'output window, operand 0, single buffered']
    #allocation4 [shape = 's32[2]{0}', space=sflag, size = 0x8, scoped, tag = 'scoped memory for tpu_custom_call.1']
    %22 = vsyncpa [#allocation4], 0
    loop: start=0, step=1, limit=4
    $region2: #{tpu_custom_call.1} parent=1 // loop_pre_header
      _
    $region3: #{tpu_custom_call.1} parent=1 // loop_header
      %s24 = sphi 0, %s28
      %p25 = scmp.ge.s32.totalorder %s24, 4
      %s32 = sphi 0, %s32
      %s34 = sphi 0, %s32
      %s35 = sphi 0, %s34
      %s49 = sphi 0, %s35
      %s53 = sphi 0, %s53
      %s55 = sphi 0, %s53
      %s56 = sphi 0, %s55
      %s70 = sphi 0, %s56
      %s74 = sphi 0, %s74
      %s76 = sphi 0, %s74
      %s77 = sphi 0, %s76
      %s91 = sphi 0, %s77
      %s95 = sphi 0, %s95
      %s97 = sphi 0, %s95
      %s98 = sphi 0, %s97
      %s112 = sphi 0, %s98
      %s116 = sphi 0, %s116
      %s118 = sphi 0, %s116
      %s119 = sphi 0, %s118
      %s133 = sphi 0, %s119
      %s139 = sphi 0, %s141
      %s142 = sphi 0, %s139
      %s143 = sphi 0, %s142
      %s159 = sphi 0, %s143
      %s165 = sphi 0, %s167
      %s168 = sphi 0, %s165
      %s169 = sphi 0, %s168
      %s185 = sphi 0, %s169
      %s191 = sphi 0, %s193
      %s194 = sphi 0, %s191
      %s195 = sphi 0, %s194
      %s211 = sphi 0, %s195
      %s217 = sphi 0, %s219
      %s220 = sphi 0, %s217
      %s221 = sphi 0, %s220
      %s237 = sphi 0, %s221
      %s243 = sphi 0, %s245
      %s246 = sphi 0, %s243
      %s247 = sphi 0, %s246
      %s263 = sphi 0, %s247
      %s269 = sphi 0, %s271
      %s272 = sphi 0, %s269
      %s273 = sphi 0, %s272
      %s289 = sphi 0, %s273
      %s295 = sphi 0, %s297
      %s298 = sphi 0, %s295
      %s299 = sphi 0, %s298
      %s315 = sphi 0, %s299
      %s321 = sphi 0, %s323
      %s324 = sphi 0, %s321
      %s325 = sphi 0, %s324
      %s341 = sphi 0, %s325
      %s347 = sphi 0, %s349
      %s350 = sphi 0, %s347
      %s351 = sphi 0, %s350
      %s367 = sphi 0, %s351
      %s373 = sphi 0, %s375
      %s376 = sphi 0, %s373
      %s377 = sphi 0, %s376
      %s393 = sphi 0, %s377
      %s399 = sphi 0, %s401
      %s402 = sphi 0, %s399
      %s403 = sphi 0, %s402
      %s419 = sphi 0, %s403
      %s425 = sphi 0, %s427
      %s428 = sphi 0, %s425
      %s429 = sphi 0, %s428
      %s445 = sphi 0, %s429
      %s449 = sphi 0, %s449
      %s451 = sphi 0, %s449
      %s452 = sphi 0, %s451
      %s466 = sphi 0, %s452
    $region4: #{tpu_custom_call.1} parent=1 // loop_header_branch
      %27 = sbr.rel (%p25) target = $region8
    $region5: #{tpu_custom_call.1} parent=1 // loop_body
      %s29 = ssub.s32 %s24, 1
      %s30 = ssub.s32 %s24, 2
      %s31 = sadd.s32 %s24, 1
      %s33 = sadd.s32 %s32, 1
      %p36 = scmp.eq.s32.totalorder %s24, 1
      %p37 = scmp.ne.s32.totalorder %s32, %s34
      %p38 = scmp.eq.s32.totalorder %s24, 0
      %p39 = por %p37, %p38
      %p40 = scmp.ne.s32.totalorder %s32, %s34
      %p41 = scmp.eq.s32.totalorder %s29, 1
      %p42 = por %p40, %p41
      %p43 = scmp.ne.s32.totalorder %s34, %s35
      %p44 = scmp.eq.s32.totalorder %s29, 0
      %p45 = por %p43, %p44
      %p46 = scmp.ne.s32.totalorder %s34, %s35
      %p47 = scmp.eq.s32.totalorder %s30, 1
      %p48 = por %p46, %p47
      %p50 = scmp.ne.s32.totalorder %s35, %s49
      %p51 = scmp.eq.s32.totalorder %s30, 0
      %p52 = por %p50, %p51
      %s54 = sadd.s32 %s53, 1
      %p57 = scmp.eq.s32.totalorder %s24, 1
      %p58 = scmp.ne.s32.totalorder %s53, %s55
      %p59 = scmp.eq.s32.totalorder %s24, 0
      %p60 = por %p58, %p59
      %p61 = scmp.ne.s32.totalorder %s53, %s55
      %p62 = scmp.eq.s32.totalorder %s29, 1
      %p63 = por %p61, %p62
      %p64 = scmp.ne.s32.totalorder %s55, %s56
      %p65 = scmp.eq.s32.totalorder %s29, 0
      %p66 = por %p64, %p65
      %p67 = scmp.ne.s32.totalorder %s55, %s56
      %p68 = scmp.eq.s32.totalorder %s30, 1
      %p69 = por %p67, %p68
      %p71 = scmp.ne.s32.totalorder %s56, %s70
      %p72 = scmp.eq.s32.totalorder %s30, 0
      %p73 = por %p71, %p72
      %s75 = sadd.s32 %s74, 1
      %p78 = scmp.eq.s32.totalorder %s24, 1
      %p79 = scmp.ne.s32.totalorder %s74, %s76
      %p80 = scmp.eq.s32.totalorder %s24, 0
      %p81 = por %p79, %p80
      %p82 = scmp.ne.s32.totalorder %s74, %s76
      %p83 = scmp.eq.s32.totalorder %s29, 1
      %p84 = por %p82, %p83
      %p85 = scmp.ne.s32.totalorder %s76, %s77
      %p86 = scmp.eq.s32.totalorder %s29, 0
      %p87 = por %p85, %p86
      %p88 = scmp.ne.s32.totalorder %s76, %s77
      %p89 = scmp.eq.s32.totalorder %s30, 1
      %p90 = por %p88, %p89
      %p92 = scmp.ne.s32.totalorder %s77, %s91
      %p93 = scmp.eq.s32.totalorder %s30, 0
      %p94 = por %p92, %p93
      %s96 = sadd.s32 %s95, 1
      %p99 = scmp.eq.s32.totalorder %s24, 1
      %p100 = scmp.ne.s32.totalorder %s95, %s97
      %p101 = scmp.eq.s32.totalorder %s24, 0
      %p102 = por %p100, %p101
      %p103 = scmp.ne.s32.totalorder %s95, %s97
      %p104 = scmp.eq.s32.totalorder %s29, 1
      %p105 = por %p103, %p104
      %p106 = scmp.ne.s32.totalorder %s97, %s98
      %p107 = scmp.eq.s32.totalorder %s29, 0
      %p108 = por %p106, %p107
      %p109 = scmp.ne.s32.totalorder %s97, %s98
      %p110 = scmp.eq.s32.totalorder %s30, 1
      %p111 = por %p109, %p110
      %p113 = scmp.ne.s32.totalorder %s98, %s112
      %p114 = scmp.eq.s32.totalorder %s30, 0
      %p115 = por %p113, %p114
      %s117 = sadd.s32 %s116, 1
      %p120 = scmp.eq.s32.totalorder %s24, 1
      %p121 = scmp.ne.s32.totalorder %s116, %s118
      %p122 = scmp.eq.s32.totalorder %s24, 0
      %p123 = por %p121, %p122
      %p124 = scmp.ne.s32.totalorder %s116, %s118
      %p125 = scmp.eq.s32.totalorder %s29, 1
      %p126 = por %p124, %p125
      %p127 = scmp.ne.s32.totalorder %s118, %s119
      %p128 = scmp.eq.s32.totalorder %s29, 0
      %p129 = por %p127, %p128
      %p130 = scmp.ne.s32.totalorder %s118, %s119
      %p131 = scmp.eq.s32.totalorder %s30, 1
      %p132 = por %p130, %p131
      %p134 = scmp.ne.s32.totalorder %s119, %s133
      %p135 = scmp.eq.s32.totalorder %s30, 0
      %p136 = por %p134, %p135
      %s137 = ssub.s32 %s24, %s31
      %p138 = scmp.eq.s32.totalorder %s137, 0
      %s140 = sadd.s32 %s139, 1
      %s141 = scalar_select %p138, %s139, %s140
      %p144 = pneg %p138
      %p145 = scmp.eq.s32.totalorder %s24, 1
      %p146 = por %p144, %p145
      %p147 = scmp.ne.s32.totalorder %s139, %s142
      %p148 = scmp.eq.s32.totalorder %s24, 0
      %p149 = por %p147, %p148
      %p150 = scmp.ne.s32.totalorder %s139, %s142
      %p151 = scmp.eq.s32.totalorder %s29, 1
      %p152 = por %p150, %p151
      %p153 = scmp.ne.s32.totalorder %s142, %s143
      %p154 = scmp.eq.s32.totalorder %s29, 0
      %p155 = por %p153, %p154
      %p156 = scmp.ne.s32.totalorder %s142, %s143
      %p157 = scmp.eq.s32.totalorder %s30, 1
      %p158 = por %p156, %p157
      %p160 = scmp.ne.s32.totalorder %s143, %s159
      %p161 = scmp.eq.s32.totalorder %s30, 0
      %p162 = por %p160, %p161
      %s163 = ssub.s32 %s24, %s31
      %p164 = scmp.eq.s32.totalorder %s163, 0
      %s166 = sadd.s32 %s165, 1
      %s167 = scalar_select %p164, %s165, %s166
      %p170 = pneg %p164
      %p171 = scmp.eq.s32.totalorder %s24, 1
      %p172 = por %p170, %p171
      %p173 = scmp.ne.s32.totalorder %s165, %s168
      %p174 = scmp.eq.s32.totalorder %s24, 0
      %p175 = por %p173, %p174
      %p176 = scmp.ne.s32.totalorder %s165, %s168
      %p177 = scmp.eq.s32.totalorder %s29, 1
      %p178 = por %p176, %p177
      %p179 = scmp.ne.s32.totalorder %s168, %s169
      %p180 = scmp.eq.s32.totalorder %s29, 0
      %p181 = por %p179, %p180
      %p182 = scmp.ne.s32.totalorder %s168, %s169
      %p183 = scmp.eq.s32.totalorder %s30, 1
      %p184 = por %p182, %p183
      %p186 = scmp.ne.s32.totalorder %s169, %s185
      %p187 = scmp.eq.s32.totalorder %s30, 0
      %p188 = por %p186, %p187
      %s189 = ssub.s32 %s24, %s31
      %p190 = scmp.eq.s32.totalorder %s189, 0
      %s192 = sadd.s32 %s191, 1
      %s193 = scalar_select %p190, %s191, %s192
      %p196 = pneg %p190
      %p197 = scmp.eq.s32.totalorder %s24, 1
      %p198 = por %p196, %p197
      %p199 = scmp.ne.s32.totalorder %s191, %s194
      %p200 = scmp.eq.s32.totalorder %s24, 0
      %p201 = por %p199, %p200
      %p202 = scmp.ne.s32.totalorder %s191, %s194
      %p203 = scmp.eq.s32.totalorder %s29, 1
      %p204 = por %p202, %p203
      %p205 = scmp.ne.s32.totalorder %s194, %s195
      %p206 = scmp.eq.s32.totalorder %s29, 0
      %p207 = por %p205, %p206
      %p208 = scmp.ne.s32.totalorder %s194, %s195
      %p209 = scmp.eq.s32.totalorder %s30, 1
      %p210 = por %p208, %p209
      %p212 = scmp.ne.s32.totalorder %s195, %s211
      %p213 = scmp.eq.s32.totalorder %s30, 0
      %p214 = por %p212, %p213
      %s215 = ssub.s32 %s24, %s31
      %p216 = scmp.eq.s32.totalorder %s215, 0
      %s218 = sadd.s32 %s217, 1
      %s219 = scalar_select %p216, %s217, %s218
      %p222 = pneg %p216
      %p223 = scmp.eq.s32.totalorder %s24, 1
      %p224 = por %p222, %p223
      %p225 = scmp.ne.s32.totalorder %s217, %s220
      %p226 = scmp.eq.s32.totalorder %s24, 0
      %p227 = por %p225, %p226
      %p228 = scmp.ne.s32.totalorder %s217, %s220
      %p229 = scmp.eq.s32.totalorder %s29, 1
      %p230 = por %p228, %p229
      %p231 = scmp.ne.s32.totalorder %s220, %s221
      %p232 = scmp.eq.s32.totalorder %s29, 0
      %p233 = por %p231, %p232
      %p234 = scmp.ne.s32.totalorder %s220, %s221
      %p235 = scmp.eq.s32.totalorder %s30, 1
      %p236 = por %p234, %p235
      %p238 = scmp.ne.s32.totalorder %s221, %s237
      %p239 = scmp.eq.s32.totalorder %s30, 0
      %p240 = por %p238, %p239
      %s241 = ssub.s32 %s24, %s31
      %p242 = scmp.eq.s32.totalorder %s241, 0
      %s244 = sadd.s32 %s243, 1
      %s245 = scalar_select %p242, %s243, %s244
      %p248 = pneg %p242
      %p249 = scmp.eq.s32.totalorder %s24, 1
      %p250 = por %p248, %p249
      %p251 = scmp.ne.s32.totalorder %s243, %s246
      %p252 = scmp.eq.s32.totalorder %s24, 0
      %p253 = por %p251, %p252
      %p254 = scmp.ne.s32.totalorder %s243, %s246
      %p255 = scmp.eq.s32.totalorder %s29, 1
      %p256 = por %p254, %p255
      %p257 = scmp.ne.s32.totalorder %s246, %s247
      %p258 = scmp.eq.s32.totalorder %s29, 0
      %p259 = por %p257, %p258
      %p260 = scmp.ne.s32.totalorder %s246, %s247
      %p261 = scmp.eq.s32.totalorder %s30, 1
      %p262 = por %p260, %p261
      %p264 = scmp.ne.s32.totalorder %s247, %s263
      %p265 = scmp.eq.s32.totalorder %s30, 0
      %p266 = por %p264, %p265
      %s267 = ssub.s32 %s24, %s31
      %p268 = scmp.eq.s32.totalorder %s267, 0
      %s270 = sadd.s32 %s269, 1
      %s271 = scalar_select %p268, %s269, %s270
      %p274 = pneg %p268
      %p275 = scmp.eq.s32.totalorder %s24, 1
      %p276 = por %p274, %p275
      %p277 = scmp.ne.s32.totalorder %s269, %s272
      %p278 = scmp.eq.s32.totalorder %s24, 0
      %p279 = por %p277, %p278
      %p280 = scmp.ne.s32.totalorder %s269, %s272
      %p281 = scmp.eq.s32.totalorder %s29, 1
      %p282 = por %p280, %p281
      %p283 = scmp.ne.s32.totalorder %s272, %s273
      %p284 = scmp.eq.s32.totalorder %s29, 0
      %p285 = por %p283, %p284
      %p286 = scmp.ne.s32.totalorder %s272, %s273
      %p287 = scmp.eq.s32.totalorder %s30, 1
      %p288 = por %p286, %p287
      %p290 = scmp.ne.s32.totalorder %s273, %s289
      %p291 = scmp.eq.s32.totalorder %s30, 0
      %p292 = por %p290, %p291
      %s293 = ssub.s32 %s24, %s31
      %p294 = scmp.eq.s32.totalorder %s293, 0
      %s296 = sadd.s32 %s295, 1
      %s297 = scalar_select %p294, %s295, %s296
      %p300 = pneg %p294
      %p301 = scmp.eq.s32.totalorder %s24, 1
      %p302 = por %p300, %p301
      %p303 = scmp.ne.s32.totalorder %s295, %s298
      %p304 = scmp.eq.s32.totalorder %s24, 0
      %p305 = por %p303, %p304
      %p306 = scmp.ne.s32.totalorder %s295, %s298
      %p307 = scmp.eq.s32.totalorder %s29, 1
      %p308 = por %p306, %p307
      %p309 = scmp.ne.s32.totalorder %s298, %s299
      %p310 = scmp.eq.s32.totalorder %s29, 0
      %p311 = por %p309, %p310
      %p312 = scmp.ne.s32.totalorder %s298, %s299
      %p313 = scmp.eq.s32.totalorder %s30, 1
      %p314 = por %p312, %p313
      %p316 = scmp.ne.s32.totalorder %s299, %s315
      %p317 = scmp.eq.s32.totalorder %s30, 0
      %p318 = por %p316, %p317
      %s319 = ssub.s32 %s24, %s31
      %p320 = scmp.eq.s32.totalorder %s319, 0
      %s322 = sadd.s32 %s321, 1
      %s323 = scalar_select %p320, %s321, %s322
      %p326 = pneg %p320
      %p327 = scmp.eq.s32.totalorder %s24, 1
      %p328 = por %p326, %p327
      %p329 = scmp.ne.s32.totalorder %s321, %s324
      %p330 = scmp.eq.s32.totalorder %s24, 0
      %p331 = por %p329, %p330
      %p332 = scmp.ne.s32.totalorder %s321, %s324
      %p333 = scmp.eq.s32.totalorder %s29, 1
      %p334 = por %p332, %p333
      %p335 = scmp.ne.s32.totalorder %s324, %s325
      %p336 = scmp.eq.s32.totalorder %s29, 0
      %p337 = por %p335, %p336
      %p338 = scmp.ne.s32.totalorder %s324, %s325
      %p339 = scmp.eq.s32.totalorder %s30, 1
      %p340 = por %p338, %p339
      %p342 = scmp.ne.s32.totalorder %s325, %s341
      %p343 = scmp.eq.s32.totalorder %s30, 0
      %p344 = por %p342, %p343
      %s345 = ssub.s32 %s24, %s31
      %p346 = scmp.eq.s32.totalorder %s345, 0
      %s348 = sadd.s32 %s347, 1
      %s349 = scalar_select %p346, %s347, %s348
      %p352 = pneg %p346
      %p353 = scmp.eq.s32.totalorder %s24, 1
      %p354 = por %p352, %p353
      %p355 = scmp.ne.s32.totalorder %s347, %s350
      %p356 = scmp.eq.s32.totalorder %s24, 0
      %p357 = por %p355, %p356
      %p358 = scmp.ne.s32.totalorder %s347, %s350
      %p359 = scmp.eq.s32.totalorder %s29, 1
      %p360 = por %p358, %p359
      %p361 = scmp.ne.s32.totalorder %s350, %s351
      %p362 = scmp.eq.s32.totalorder %s29, 0
      %p363 = por %p361, %p362
      %p364 = scmp.ne.s32.totalorder %s350, %s351
      %p365 = scmp.eq.s32.totalorder %s30, 1
      %p366 = por %p364, %p365
      %p368 = scmp.ne.s32.totalorder %s351, %s367
      %p369 = scmp.eq.s32.totalorder %s30, 0
      %p370 = por %p368, %p369
      %s371 = ssub.s32 %s24, %s31
      %p372 = scmp.eq.s32.totalorder %s371, 0
      %s374 = sadd.s32 %s373, 1
      %s375 = scalar_select %p372, %s373, %s374
      %p378 = pneg %p372
      %p379 = scmp.eq.s32.totalorder %s24, 1
      %p380 = por %p378, %p379
      %p381 = scmp.ne.s32.totalorder %s373, %s376
      %p382 = scmp.eq.s32.totalorder %s24, 0
      %p383 = por %p381, %p382
      %p384 = scmp.ne.s32.totalorder %s373, %s376
      %p385 = scmp.eq.s32.totalorder %s29, 1
      %p386 = por %p384, %p385
      %p387 = scmp.ne.s32.totalorder %s376, %s377
      %p388 = scmp.eq.s32.totalorder %s29, 0
      %p389 = por %p387, %p388
      %p390 = scmp.ne.s32.totalorder %s376, %s377
      %p391 = scmp.eq.s32.totalorder %s30, 1
      %p392 = por %p390, %p391
      %p394 = scmp.ne.s32.totalorder %s377, %s393
      %p395 = scmp.eq.s32.totalorder %s30, 0
      %p396 = por %p394, %p395
      %s397 = ssub.s32 %s24, %s31
      %p398 = scmp.eq.s32.totalorder %s397, 0
      %s400 = sadd.s32 %s399, 1
      %s401 = scalar_select %p398, %s399, %s400
      %p404 = pneg %p398
      %p405 = scmp.eq.s32.totalorder %s24, 1
      %p406 = por %p404, %p405
      %p407 = scmp.ne.s32.totalorder %s399, %s402
      %p408 = scmp.eq.s32.totalorder %s24, 0
      %p409 = por %p407, %p408
      %p410 = scmp.ne.s32.totalorder %s399, %s402
      %p411 = scmp.eq.s32.totalorder %s29, 1
      %p412 = por %p410, %p411
      %p413 = scmp.ne.s32.totalorder %s402, %s403
      %p414 = scmp.eq.s32.totalorder %s29, 0
      %p415 = por %p413, %p414
      %p416 = scmp.ne.s32.totalorder %s402, %s403
      %p417 = scmp.eq.s32.totalorder %s30, 1
      %p418 = por %p416, %p417
      %p420 = scmp.ne.s32.totalorder %s403, %s419
      %p421 = scmp.eq.s32.totalorder %s30, 0
      %p422 = por %p420, %p421
      %s423 = ssub.s32 %s24, %s31
      %p424 = scmp.eq.s32.totalorder %s423, 0
      %s426 = sadd.s32 %s425, 1
      %s427 = scalar_select %p424, %s425, %s426
      %p430 = pneg %p424
      %p431 = scmp.eq.s32.totalorder %s24, 1
      %p432 = por %p430, %p431
      %p433 = scmp.ne.s32.totalorder %s425, %s428
      %p434 = scmp.eq.s32.totalorder %s24, 0
      %p435 = por %p433, %p434
      %p436 = scmp.ne.s32.totalorder %s425, %s428
      %p437 = scmp.eq.s32.totalorder %s29, 1
      %p438 = por %p436, %p437
      %p439 = scmp.ne.s32.totalorder %s428, %s429
      %p440 = scmp.eq.s32.totalorder %s29, 0
      %p441 = por %p439, %p440
      %p442 = scmp.ne.s32.totalorder %s428, %s429
      %p443 = scmp.eq.s32.totalorder %s30, 1
      %p444 = por %p442, %p443
      %p446 = scmp.ne.s32.totalorder %s429, %s445
      %p447 = scmp.eq.s32.totalorder %s30, 0
      %p448 = por %p446, %p447
      %s450 = sadd.s32 %s449, 1
      %p453 = scmp.eq.s32.totalorder %s24, 1
      %p454 = scmp.ne.s32.totalorder %s449, %s451
      %p455 = scmp.eq.s32.totalorder %s24, 0
      %p456 = por %p454, %p455
      %p457 = scmp.ne.s32.totalorder %s449, %s451
      %p458 = scmp.eq.s32.totalorder %s29, 1
      %p459 = por %p457, %p458
      %p460 = scmp.ne.s32.totalorder %s451, %s452
      %p461 = scmp.eq.s32.totalorder %s29, 0
      %p462 = por %p460, %p461
      %p463 = scmp.ne.s32.totalorder %s451, %s452
      %p464 = scmp.eq.s32.totalorder %s30, 1
      %p465 = por %p463, %p464
      %p467 = scmp.ne.s32.totalorder %s452, %s466
      %p468 = scmp.eq.s32.totalorder %s30, 0
      %p469 = por %p467, %p468
      %p470 = scmp.le.s32.totalorder 1, %s24
      %p471 = scmp.lt.s32.totalorder %s24, 3
      %p472 = pnand %p470, %p471
      %p473 = pneg %p472
      // Predicated region
      $region9: #{tpu_custom_call.1} parent=5 // pred_check
        _
      $region10: #{tpu_custom_call.1} parent=5 // pred_check_branch
        %475 = sbr.rel (%p472) target = $region12
      $region11: #{tpu_custom_call.1} parent=5 // pred_region
        %s476 = ssub.s32 %s24, 1
        // Predicated region
        $region13: #{tpu_custom_call.1} parent=11 // pred_check
          %p477 = pneg %p45
        $region14: #{tpu_custom_call.1} parent=11 // pred_check_branch
          %479 = sbr.rel (%p477) target = $region16
        $region15: #{tpu_custom_call.1} parent=11 // pred_region
          _
        $region16: #{tpu_custom_call.1} parent=11 // pred_fallthru
          _
        // Predicated region
        $region17: #{tpu_custom_call.1} parent=11 // pred_check
          %p480 = pneg %p66
        $region18: #{tpu_custom_call.1} parent=11 // pred_check_branch
          %482 = sbr.rel (%p480) target = $region20
        $region19: #{tpu_custom_call.1} parent=11 // pred_region
          _
        $region20: #{tpu_custom_call.1} parent=11 // pred_fallthru
          _
        // Predicated region
        $region21: #{tpu_custom_call.1} parent=11 // pred_check
          %p483 = pneg %p87
        $region22: #{tpu_custom_call.1} parent=11 // pred_check_branch
          %485 = sbr.rel (%p483) target = $region24
        $region23: #{tpu_custom_call.1} parent=11 // pred_region
          _
        $region24: #{tpu_custom_call.1} parent=11 // pred_fallthru
          _
        // Predicated region
        $region25: #{tpu_custom_call.1} parent=11 // pred_check
          %p486 = pneg %p108
        $region26: #{tpu_custom_call.1} parent=11 // pred_check_branch
          %488 = sbr.rel (%p486) target = $region28
        $region27: #{tpu_custom_call.1} parent=11 // pred_region
          _
        $region28: #{tpu_custom_call.1} parent=11 // pred_fallthru
          _
        // Predicated region
        $region29: #{tpu_custom_call.1} parent=11 // pred_check
          %p489 = pneg %p129
        $region30: #{tpu_custom_call.1} parent=11 // pred_check_branch
          %491 = sbr.rel (%p489) target = $region32
        $region31: #{tpu_custom_call.1} parent=11 // pred_region
          _
        $region32: #{tpu_custom_call.1} parent=11 // pred_fallthru
          _
      $region12: #{tpu_custom_call.1} parent=5 // pred_fallthru
        _
      %p492 = scmp.lt.s32.totalorder %s24, 2
      // Predicated region
      $region33: #{tpu_custom_call.1} parent=5 // pred_check
        %p493 = pneg %p492
      $region34: #{tpu_custom_call.1} parent=5 // pred_check_branch
        %495 = sbr.rel (%p493) target = $region36
      $region35: #{tpu_custom_call.1} parent=5 // pred_region
        // Predicated region
        $region37: #{tpu_custom_call.1} parent=35 // pred_check
          %p496 = pneg %p149
        $region38: #{tpu_custom_call.1} parent=35 // pred_check_branch
          %498 = sbr.rel (%p496) target = $region40
        $region39: #{tpu_custom_call.1} parent=35 // pred_region
          %p499 = scmp.lt.s32.totalorder %s24, 1
          %s500 = scalar_select %p499, %s24, 1
          %s501 = smul.addr %s500, 64
          %s502 = smul.addr %s501, 4
          %s503 = scalar_lea.vmem %s5, %s502
        $region40: #{tpu_custom_call.1} parent=35 // pred_fallthru
          _
        // Predicated region
        $region41: #{tpu_custom_call.1} parent=35 // pred_check
          %p504 = pneg %p175
        $region42: #{tpu_custom_call.1} parent=35 // pred_check_branch
          %506 = sbr.rel (%p504) target = $region44
        $region43: #{tpu_custom_call.1} parent=35 // pred_region
          %p507 = scmp.lt.s32.totalorder %s24, 1
          %s508 = scalar_select %p507, %s24, 1
          %s509 = smul.addr %s508, 64
          %s510 = smul.addr %s509, 4
          %s511 = scalar_lea.vmem %s6, %s510
        $region44: #{tpu_custom_call.1} parent=35 // pred_fallthru
          _
        // Predicated region
        $region45: #{tpu_custom_call.1} parent=35 // pred_check
          %p512 = pneg %p201
        $region46: #{tpu_custom_call.1} parent=35 // pred_check_branch
          %514 = sbr.rel (%p512) target = $region48
        $region47: #{tpu_custom_call.1} parent=35 // pred_region
          %p515 = scmp.lt.s32.totalorder %s24, 1
          %s516 = scalar_select %p515, %s24, 1
          %s517 = smul.addr %s516, 64
          %s518 = smul.addr %s517, 4
          %s519 = scalar_lea.vmem %s7, %s518
        $region48: #{tpu_custom_call.1} parent=35 // pred_fallthru
          _
        // Predicated region
        $region49: #{tpu_custom_call.1} parent=35 // pred_check
          %p520 = pneg %p227
        $region50: #{tpu_custom_call.1} parent=35 // pred_check_branch
          %522 = sbr.rel (%p520) target = $region52
        $region51: #{tpu_custom_call.1} parent=35 // pred_region
          %p523 = scmp.lt.s32.totalorder %s24, 1
          %s524 = scalar_select %p523, %s24, 1
          %s525 = smul.addr %s524, 16
          %s526 = smul.addr %s525, 4
          %s527 = scalar_lea.vmem %s8, %s526
        $region52: #{tpu_custom_call.1} parent=35 // pred_fallthru
          _
        // Predicated region
        $region53: #{tpu_custom_call.1} parent=35 // pred_check
          %p528 = pneg %p253
        $region54: #{tpu_custom_call.1} parent=35 // pred_check_branch
          %530 = sbr.rel (%p528) target = $region56
        $region55: #{tpu_custom_call.1} parent=35 // pred_region
          %p531 = scmp.lt.s32.totalorder %s24, 1
          %s532 = scalar_select %p531, %s24, 1
          %s533 = scalar_lea.vmem %s9, %s532
        $region56: #{tpu_custom_call.1} parent=35 // pred_fallthru
          _
        // Predicated region
        $region57: #{tpu_custom_call.1} parent=35 // pred_check
          %p534 = pneg %p279
        $region58: #{tpu_custom_call.1} parent=35 // pred_check_branch
          %536 = sbr.rel (%p534) target = $region60
        $region59: #{tpu_custom_call.1} parent=35 // pred_region
          %p537 = scmp.lt.s32.totalorder %s24, 1
          %s538 = scalar_select %p537, %s24, 1
          %s539 = scalar_lea.vmem %s10, %s538
        $region60: #{tpu_custom_call.1} parent=35 // pred_fallthru
          _
        // Predicated region
        $region61: #{tpu_custom_call.1} parent=35 // pred_check
          %p540 = pneg %p305
        $region62: #{tpu_custom_call.1} parent=35 // pred_check_branch
          %542 = sbr.rel (%p540) target = $region64
        $region63: #{tpu_custom_call.1} parent=35 // pred_region
          %p543 = scmp.lt.s32.totalorder %s24, 1
          %s544 = scalar_select %p543, %s24, 1
          %s545 = smul.addr %s544, 32
          %s546 = smul.addr %s545, 4
          %s547 = scalar_lea.vmem %s11, %s546
        $region64: #{tpu_custom_call.1} parent=35 // pred_fallthru
          _
        // Predicated region
        $region65: #{tpu_custom_call.1} parent=35 // pred_check
          %p548 = pneg %p331
        $region66: #{tpu_custom_call.1} parent=35 // pred_check_branch
          %550 = sbr.rel (%p548) target = $region68
        $region67: #{tpu_custom_call.1} parent=35 // pred_region
          %p551 = scmp.lt.s32.totalorder %s24, 1
          %s552 = scalar_select %p551, %s24, 1
          %s553 = smul.addr %s552, 2
          %s554 = scalar_lea.vmem %s12, %s553
        $region68: #{tpu_custom_call.1} parent=35 // pred_fallthru
          _
        // Predicated region
        $region69: #{tpu_custom_call.1} parent=35 // pred_check
          %p555 = pneg %p357
        $region70: #{tpu_custom_call.1} parent=35 // pred_check_branch
          %557 = sbr.rel (%p555) target = $region72
        $region71: #{tpu_custom_call.1} parent=35 // pred_region
          %p558 = scmp.lt.s32.totalorder %s24, 1
          %s559 = scalar_select %p558, %s24, 1
          %s560 = smul.addr %s559, 32
          %s561 = smul.addr %s560, 4
          %s562 = scalar_lea.vmem %s13, %s561
        $region72: #{tpu_custom_call.1} parent=35 // pred_fallthru
          _
        // Predicated region
        $region73: #{tpu_custom_call.1} parent=35 // pred_check
          %p563 = pneg %p383
        $region74: #{tpu_custom_call.1} parent=35 // pred_check_branch
          %565 = sbr.rel (%p563) target = $region76
        $region75: #{tpu_custom_call.1} parent=35 // pred_region
          %p566 = scmp.lt.s32.totalorder %s24, 1
          %s567 = scalar_select %p566, %s24, 1
          %s568 = scalar_lea.vmem %s14, %s567
        $region76: #{tpu_custom_call.1} parent=35 // pred_fallthru
          _
        // Predicated region
        $region77: #{tpu_custom_call.1} parent=35 // pred_check
          %p569 = pneg %p409
        $region78: #{tpu_custom_call.1} parent=35 // pred_check_branch
          %571 = sbr.rel (%p569) target = $region80
        $region79: #{tpu_custom_call.1} parent=35 // pred_region
          %p572 = scmp.lt.s32.totalorder %s24, 1
          %s573 = scalar_select %p572, %s24, 1
          %s574 = scalar_lea.vmem %s15, %s573
        $region80: #{tpu_custom_call.1} parent=35 // pred_fallthru
          _
        // Predicated region
        $region81: #{tpu_custom_call.1} parent=35 // pred_check
          %p575 = pneg %p435
        $region82: #{tpu_custom_call.1} parent=35 // pred_check_branch
          %577 = sbr.rel (%p575) target = $region84
        $region83: #{tpu_custom_call.1} parent=35 // pred_region
          %p578 = scmp.lt.s32.totalorder %s24, 1
          %s579 = scalar_select %p578, %s24, 1
          %s580 = scalar_lea.vmem %s16, %s579
        $region84: #{tpu_custom_call.1} parent=35 // pred_fallthru
          _
      $region36: #{tpu_custom_call.1} parent=5 // pred_fallthru
        _
      %p581 = scmp.le.s32.totalorder 1, %s24
      %p582 = scmp.lt.s32.totalorder %s24, 3
      %p583 = pnand %p581, %p582
      %p584 = pneg %p583
      // Predicated region
      $region85: #{tpu_custom_call.1} parent=5 // pred_check
        _
      $region86: #{tpu_custom_call.1} parent=5 // pred_check_branch
        %586 = sbr.rel (%p583) target = $region88
      $region87: #{tpu_custom_call.1} parent=5 // pred_region
        %s587 = ssub.s32 %s24, 1
        %p588 = pneg %p45
        %p589 = pneg %p42
        %p590 = pneg %p66
        %p591 = pneg %p63
        %p592 = pneg %p87
        %p593 = pneg %p84
        %p594 = pneg %p108
        %p595 = pneg %p105
        %p596 = pneg %p129
        %p597 = pneg %p126
        %p598 = scmp.lt.s32.totalorder %s29, 1
        %s599 = scalar_select %p598, %s29, 1
        %s600 = smul.addr %s599, 64
        %s601 = smul.addr %s600, 4
        %s602 = scalar_lea.vmem %s5, %s601
        %p603 = pneg %p155
        %p604 = pneg %p152
        %p605 = scmp.lt.s32.totalorder %s29, 1
        %s606 = scalar_select %p605, %s29, 1
        %s607 = smul.addr %s606, 64
        %s608 = smul.addr %s607, 4
        %s609 = scalar_lea.vmem %s6, %s608
        %p610 = pneg %p181
        %p611 = pneg %p178
        %p612 = scmp.lt.s32.totalorder %s29, 1
        %s613 = scalar_select %p612, %s29, 1
        %s614 = smul.addr %s613, 64
        %s615 = smul.addr %s614, 4
        %s616 = scalar_lea.vmem %s7, %s615
        %p617 = pneg %p207
        %p618 = pneg %p204
        %p619 = scmp.lt.s32.totalorder %s29, 1
        %s620 = scalar_select %p619, %s29, 1
        %s621 = smul.addr %s620, 16
        %s622 = smul.addr %s621, 4
        %s623 = scalar_lea.vmem %s8, %s622
        %p624 = pneg %p233
        %p625 = pneg %p230
        %p626 = scmp.lt.s32.totalorder %s29, 1
        %s627 = scalar_select %p626, %s29, 1
        %s628 = scalar_lea.vmem %s9, %s627
        %p629 = pneg %p259
        %p630 = pneg %p256
        %p631 = scmp.lt.s32.totalorder %s29, 1
        %s632 = scalar_select %p631, %s29, 1
        %s633 = scalar_lea.vmem %s10, %s632
        %p634 = pneg %p285
        %p635 = pneg %p282
        %p636 = scmp.lt.s32.totalorder %s29, 1
        %s637 = scalar_select %p636, %s29, 1
        %s638 = smul.addr %s637, 32
        %s639 = smul.addr %s638, 4
        %s640 = scalar_lea.vmem %s11, %s639
        %p641 = pneg %p311
        %p642 = pneg %p308
        %p643 = scmp.lt.s32.totalorder %s29, 1
        %s644 = scalar_select %p643, %s29, 1
        %s645 = smul.addr %s644, 2
        %s646 = scalar_lea.vmem %s12, %s645
        %p647 = pneg %p337
        %p648 = pneg %p334
        %p649 = scmp.lt.s32.totalorder %s29, 1
        %s650 = scalar_select %p649, %s29, 1
        %s651 = smul.addr %s650, 32
        %s652 = smul.addr %s651, 4
        %s653 = scalar_lea.vmem %s13, %s652
        %p654 = pneg %p363
        %p655 = pneg %p360
        %p656 = scmp.lt.s32.totalorder %s29, 1
        %s657 = scalar_select %p656, %s29, 1
        %s658 = scalar_lea.vmem %s14, %s657
        %p659 = pneg %p389
        %p660 = pneg %p386
        %p661 = scmp.lt.s32.totalorder %s29, 1
        %s662 = scalar_select %p661, %s29, 1
        %s663 = scalar_lea.vmem %s15, %s662
        %p664 = pneg %p415
        %p665 = pneg %p412
        %p666 = scmp.lt.s32.totalorder %s29, 1
        %s667 = scalar_select %p666, %s29, 1
        %s668 = scalar_lea.vmem %s16, %s667
        %p669 = pneg %p441
        %p670 = pneg %p438
        %p671 = pneg %p462
        %p672 = pneg %p459
        %p673 = scmp.lt.s32.totalorder %s29, 1
        %s674 = scalar_select %p673, %s29, 1
        %s675 = smul.addr %s674, 64
        %s676 = smul.addr %s675, 4
        %s677 = scalar_lea.vmem %s5, %s676
        %p678 = scmp.lt.s32.totalorder %s29, 1
        %s679 = scalar_select %p678, %s29, 1
        %s680 = smul.addr %s679, 64
        %s681 = smul.addr %s680, 4
        %s682 = scalar_lea.vmem %s6, %s681
        %p683 = scmp.lt.s32.totalorder %s29, 1
        %s684 = scalar_select %p683, %s29, 1
        %s685 = smul.addr %s684, 64
        %s686 = smul.addr %s685, 4
        %s687 = scalar_lea.vmem %s7, %s686
        %p688 = scmp.lt.s32.totalorder %s29, 1
        %s689 = scalar_select %p688, %s29, 1
        %s690 = smul.addr %s689, 16
        %s691 = smul.addr %s690, 4
        %s692 = scalar_lea.vmem %s8, %s691
        %p693 = scmp.lt.s32.totalorder %s29, 1
        %s694 = scalar_select %p693, %s29, 1
        %s695 = scalar_lea.vmem %s9, %s694
        %p696 = scmp.lt.s32.totalorder %s29, 1
        %s697 = scalar_select %p696, %s29, 1
        %s698 = scalar_lea.vmem %s10, %s697
        %p699 = scmp.lt.s32.totalorder %s29, 1
        %s700 = scalar_select %p699, %s29, 1
        %s701 = smul.addr %s700, 32
        %s702 = smul.addr %s701, 4
        %s703 = scalar_lea.vmem %s11, %s702
        %p704 = scmp.lt.s32.totalorder %s29, 1
        %s705 = scalar_select %p704, %s29, 1
        %s706 = smul.addr %s705, 2
        %s707 = scalar_lea.vmem %s12, %s706
        %p708 = scmp.lt.s32.totalorder %s29, 1
        %s709 = scalar_select %p708, %s29, 1
        %s710 = smul.addr %s709, 32
        %s711 = smul.addr %s710, 4
        %s712 = scalar_lea.vmem %s13, %s711
        %p713 = scmp.lt.s32.totalorder %s29, 1
        %s714 = scalar_select %p713, %s29, 1
        %s715 = scalar_lea.vmem %s14, %s714
        %p716 = scmp.lt.s32.totalorder %s29, 1
        %s717 = scalar_select %p716, %s29, 1
        %s718 = scalar_lea.vmem %s15, %s717
        %p719 = scmp.lt.s32.totalorder %s29, 1
        %s720 = scalar_select %p719, %s29, 1
        %s721 = scalar_lea.vmem %s16, %s720
        %p723 = scmp.eq.s32.totalorder %s29, 0
        // Predicated region
        $region89: #{tpu_custom_call.1} parent=87 // pred_check
          %p724 = pneg %p723
        $region90: #{tpu_custom_call.1} parent=87 // pred_check_branch
          %726 = sbr.rel (%p724) target = $region92
        $region91: #{tpu_custom_call.1} parent=87 // pred_region
          %v727 = vld [vmem:[%s0] sm:$0xff]
          %v728 = vld [vmem:[%s0 + $0x8] sm:$0xff]
          %v729 = vpack.c.bf16 %v728, %v727
          %v730 = vld [vmem:[%s2] sm:$0xf]
          %v731 = vld [vmem:[%s2 + $0x4] sm:$0xf]
          %v732 = vld [vmem:[%s3] sm:$0x1]
          %v734 = vlaneseq
          %v735 = vshrl.u32 %v734, 7
          %v736 = vsub.s32 0, %v735
          %v737 = vrot.slane %v732, %v736
          %v741 = vunpack.c.l.b16 %v730
          %v742 = vunpack.c.l.b16 %v731
          %v743 = vpack.c.b16 %v742, %v741
          %vm745 = vcmask 130048
          %v747 = vsel %vm745, %v729, 0
          %749 = vmatprep.subr.bf16.mxu0 0
          %750 = vmatpush1.bf16.msra.mxu0 %v743
          %751 = vmatprep.subr.bf16.mxu0 0
          %752 = vmatpush1.bf16.msra.mxu0 0
          %753 = vmatprep.subr.bf16.mxu0 0
          %754 = vmatpush1.bf16.msra.mxu0 0
          %755 = vmatprep.subr.bf16.mxu0 0
          %756 = vmatpush1.bf16.msra.mxu0 0
          %757 = vmatprep.subr.bf16.mxu0 0
          %758 = vmatpush1.bf16.msra.mxu0 0
          %759 = vmatprep.subr.bf16.mxu0 0
          %760 = vmatpush1.bf16.msra.mxu0 0
          %761 = vmatprep.subr.bf16.mxu0 0
          %762 = vmatpush1.bf16.msra.mxu0 0
          %763 = vmatprep.subr.bf16.mxu0 0
          %764 = vmatpush1.bf16.msra.mxu0 0
          %765 = vmatprep.subr.bf16.mxu0 0
          %766 = vmatpush1.bf16.msra.mxu0 0
          %767 = vmatprep.subr.bf16.mxu0 0
          %768 = vmatpush1.bf16.msra.mxu0 0
          %769 = vmatprep.subr.bf16.mxu0 0
          %770 = vmatpush1.bf16.msra.mxu0 0
          %771 = vmatprep.subr.bf16.mxu0 0
          %772 = vmatpush1.bf16.msra.mxu0 0
          %773 = vmatprep.subr.bf16.mxu0 0
          %774 = vmatpush1.bf16.msra.mxu0 0
          %775 = vmatprep.subr.bf16.mxu0 0
          %776 = vmatpush1.bf16.msra.mxu0 0
          %777 = vmatprep.subr.bf16.mxu0 0
          %778 = vmatpush1.bf16.msra.mxu0 0
          %779 = vmatprep.subr.bf16.mxu0 0
          %780 = vmatpush1.bf16.msra.mxu0 0
          %781 = vmatprep.mubr.bf16.mxu0 0
          %782 = vmatmul.mubr.bf16.gmra.mrb[0].mxu0 %v747
          %v783 = vpop.f32.mrb[0].mxu0
          %v784 = vadd.f32 %v737, %v783
          %v785 = vpop.f32.mrb[0].mxu0
          %v786 = vpop.f32.mrb[0].mxu0
          %v787 = vadd.f32 %v737, %v786
          %v788 = vpop.f32.mrb[0].mxu0
          %789 = vdwg.mxu0
          %v790 = vmul.f32 %v784, 11.313708
          %v791 = vmul.f32 %v787, 11.313708
          %v792 = vld [vmem:[%s1] sm:$0xff]
          %v793 = vld [vmem:[%s1 + $0x8] sm:$0xff]
          %v794 = vadd.f32 %v790, %v792
          %v795 = vadd.f32 %v791, %v793
          %796 = vst [vmem:[#allocation2] sm:$0xff] %v794
          %797 = vst [vmem:[#allocation2 + $0x8] sm:$0xff] %v795
        $region92: #{tpu_custom_call.1} parent=87 // pred_fallthru
          _
        %v798 = vld [vmem:[#allocation2] sm:$0xff]
        %v799 = vld [vmem:[#allocation2 + $0x8] sm:$0xff]
        %v800 = vpack.c.bf16 %v798, %v798
        %v801 = vpack.c.bf16 %v799, %v799
        %v802 = vld [vmem:[%s677] sm:$0xf]
        %v803 = vld [vmem:[%s677 + $0x4] sm:$0xf]
        %v804 = vld [vmem:[%s677 + $0x8] sm:$0xf]
        %v805 = vld [vmem:[%s677 + $0xc] sm:$0xf]
        %v806 = vld [vmem:[%s677 + $0x10] sm:$0xf]
        %v807 = vld [vmem:[%s677 + $0x14] sm:$0xf]
        %v808 = vld [vmem:[%s677 + $0x18] sm:$0xf]
        %v809 = vld [vmem:[%s677 + $0x1c] sm:$0xf]
        %v810 = vld [vmem:[%s677 + $0x20] sm:$0xf]
        %v811 = vld [vmem:[%s677 + $0x24] sm:$0xf]
        %v812 = vld [vmem:[%s677 + $0x28] sm:$0xf]
        %v813 = vld [vmem:[%s677 + $0x2c] sm:$0xf]
        %v814 = vld [vmem:[%s677 + $0x30] sm:$0xf]
        %v815 = vld [vmem:[%s677 + $0x34] sm:$0xf]
        %v816 = vld [vmem:[%s677 + $0x38] sm:$0xf]
        %v817 = vld [vmem:[%s677 + $0x3c] sm:$0xf]
        %v818 = vld [vmem:[%s677 + $0x40] sm:$0xf]
        %v819 = vld [vmem:[%s677 + $0x44] sm:$0xf]
        %v820 = vld [vmem:[%s677 + $0x48] sm:$0xf]
        %v821 = vld [vmem:[%s677 + $0x4c] sm:$0xf]
        %v822 = vld [vmem:[%s677 + $0x50] sm:$0xf]
        %v823 = vld [vmem:[%s677 + $0x54] sm:$0xf]
        %v824 = vld [vmem:[%s677 + $0x58] sm:$0xf]
        %v825 = vld [vmem:[%s677 + $0x5c] sm:$0xf]
        %v826 = vld [vmem:[%s677 + $0x60] sm:$0xf]
        %v827 = vld [vmem:[%s677 + $0x64] sm:$0xf]
        %v828 = vld [vmem:[%s677 + $0x68] sm:$0xf]
        %v829 = vld [vmem:[%s677 + $0x6c] sm:$0xf]
        %v830 = vld [vmem:[%s677 + $0x70] sm:$0xf]
        %v831 = vld [vmem:[%s677 + $0x74] sm:$0xf]
        %v832 = vld [vmem:[%s677 + $0x78] sm:$0xf]
        %v833 = vld [vmem:[%s677 + $0x7c] sm:$0xf]
        %v834 = vld [vmem:[%s677 + $0x80] sm:$0xf]
        %v835 = vld [vmem:[%s677 + $0x84] sm:$0xf]
        %v836 = vld [vmem:[%s677 + $0x88] sm:$0xf]
        %v837 = vld [vmem:[%s677 + $0x8c] sm:$0xf]
        %v838 = vld [vmem:[%s677 + $0x90] sm:$0xf]
        %v839 = vld [vmem:[%s677 + $0x94] sm:$0xf]
        %v840 = vld [vmem:[%s677 + $0x98] sm:$0xf]
        %v841 = vld [vmem:[%s677 + $0x9c] sm:$0xf]
        %v842 = vld [vmem:[%s677 + $0xa0] sm:$0xf]
        %v843 = vld [vmem:[%s677 + $0xa4] sm:$0xf]
        %v844 = vld [vmem:[%s677 + $0xa8] sm:$0xf]
        %v845 = vld [vmem:[%s677 + $0xac] sm:$0xf]
        %v846 = vld [vmem:[%s677 + $0xb0] sm:$0xf]
        %v847 = vld [vmem:[%s677 + $0xb4] sm:$0xf]
        %v848 = vld [vmem:[%s677 + $0xb8] sm:$0xf]
        %v849 = vld [vmem:[%s677 + $0xbc] sm:$0xf]
        %v850 = vld [vmem:[%s677 + $0xc0] sm:$0xf]
        %v851 = vld [vmem:[%s677 + $0xc4] sm:$0xf]
        %v852 = vld [vmem:[%s677 + $0xc8] sm:$0xf]
        %v853 = vld [vmem:[%s677 + $0xcc] sm:$0xf]
        %v854 = vld [vmem:[%s677 + $0xd0] sm:$0xf]
        %v855 = vld [vmem:[%s677 + $0xd4] sm:$0xf]
        %v856 = vld [vmem:[%s677 + $0xd8] sm:$0xf]
        %v857 = vld [vmem:[%s677 + $0xdc] sm:$0xf]
        %v858 = vld [vmem:[%s677 + $0xe0] sm:$0xf]
        %v859 = vld [vmem:[%s677 + $0xe4] sm:$0xf]
        %v860 = vld [vmem:[%s677 + $0xe8] sm:$0xf]
        %v861 = vld [vmem:[%s677 + $0xec] sm:$0xf]
        %v862 = vld [vmem:[%s677 + $0xf0] sm:$0xf]
        %v863 = vld [vmem:[%s677 + $0xf4] sm:$0xf]
        %v864 = vld [vmem:[%s677 + $0xf8] sm:$0xf]
        %v865 = vld [vmem:[%s677 + $0xfc] sm:$0xf]
        %v882 = vunpack.c.l.b16 %v802
        %v883 = vunpack.c.l.b16 %v803
        %v884 = vunpack.c.l.b16 %v804
        %v885 = vunpack.c.l.b16 %v805
        %v886 = vunpack.c.l.b16 %v806
        %v887 = vunpack.c.l.b16 %v807
        %v888 = vunpack.c.l.b16 %v808
        %v889 = vunpack.c.l.b16 %v809
        %v890 = vunpack.c.l.b16 %v810
        %v891 = vunpack.c.l.b16 %v811
        %v892 = vunpack.c.l.b16 %v812
        %v893 = vunpack.c.l.b16 %v813
        %v894 = vunpack.c.l.b16 %v814
        %v895 = vunpack.c.l.b16 %v815
        %v896 = vunpack.c.l.b16 %v816
        %v897 = vunpack.c.l.b16 %v817
        %v898 = vpack.c.b16 %v883, %v882
        %v899 = vpack.c.b16 %v885, %v884
        %v900 = vpack.c.b16 %v887, %v886
        %v901 = vpack.c.b16 %v889, %v888
        %v902 = vpack.c.b16 %v891, %v890
        %v903 = vpack.c.b16 %v893, %v892
        %v904 = vpack.c.b16 %v895, %v894
        %v905 = vpack.c.b16 %v897, %v896
        %914 = vmatprep.subr.bf16.mxu0 0
        %915 = vmatpush1.bf16.msra.mxu0 %v898
        %916 = vmatprep.subr.bf16.mxu0 0
        %917 = vmatpush1.bf16.msra.mxu0 %v899
        %918 = vmatprep.subr.bf16.mxu0 0
        %919 = vmatpush1.bf16.msra.mxu0 %v900
        %920 = vmatprep.subr.bf16.mxu0 0
        %921 = vmatpush1.bf16.msra.mxu0 %v901
        %922 = vmatprep.subr.bf16.mxu0 0
        %923 = vmatpush1.bf16.msra.mxu0 %v902
        %924 = vmatprep.subr.bf16.mxu0 0
        %925 = vmatpush1.bf16.msra.mxu0 %v903
        %926 = vmatprep.subr.bf16.mxu0 0
        %927 = vmatpush1.bf16.msra.mxu0 %v904
        %928 = vmatprep.subr.bf16.mxu0 0
        %929 = vmatpush1.bf16.msra.mxu0 %v905
        %930 = vmatprep.subr.bf16.mxu0 0
        %931 = vmatpush1.bf16.msra.mxu0 0
        %932 = vmatprep.subr.bf16.mxu0 0
        %933 = vmatpush1.bf16.msra.mxu0 0
        %934 = vmatprep.subr.bf16.mxu0 0
        %935 = vmatpush1.bf16.msra.mxu0 0
        %936 = vmatprep.subr.bf16.mxu0 0
        %937 = vmatpush1.bf16.msra.mxu0 0
        %938 = vmatprep.subr.bf16.mxu0 0
        %939 = vmatpush1.bf16.msra.mxu0 0
        %940 = vmatprep.subr.bf16.mxu0 0
        %941 = vmatpush1.bf16.msra.mxu0 0
        %942 = vmatprep.subr.bf16.mxu0 0
        %943 = vmatpush1.bf16.msra.mxu0 0
        %944 = vmatprep.subr.bf16.mxu0 0
        %945 = vmatpush1.bf16.msra.mxu0 0
        %946 = vmatprep.mubr.bf16.mxu0 0
        %947 = vmatmul.mubr.bf16.gmra.mrb[0].mxu0 %v800
        %v948 = vpop.f32.mrb[0].mxu0
        %v949 = vadd.f32 0.0, %v948
        %v950 = vpop.f32.mrb[0].mxu0
        %v951 = vpop.f32.mrb[0].mxu0
        %v952 = vpop.f32.mrb[0].mxu0
        %953 = vdwg.mxu0
        %v970 = vunpack.c.l.b16 %v818
        %v971 = vunpack.c.l.b16 %v819
        %v972 = vunpack.c.l.b16 %v820
        %v973 = vunpack.c.l.b16 %v821
        %v974 = vunpack.c.l.b16 %v822
        %v975 = vunpack.c.l.b16 %v823
        %v976 = vunpack.c.l.b16 %v824
        %v977 = vunpack.c.l.b16 %v825
        %v978 = vunpack.c.l.b16 %v826
        %v979 = vunpack.c.l.b16 %v827
        %v980 = vunpack.c.l.b16 %v828
        %v981 = vunpack.c.l.b16 %v829
        %v982 = vunpack.c.l.b16 %v830
        %v983 = vunpack.c.l.b16 %v831
        %v984 = vunpack.c.l.b16 %v832
        %v985 = vunpack.c.l.b16 %v833
        %v986 = vpack.c.b16 %v971, %v970
        %v987 = vpack.c.b16 %v973, %v972
        %v988 = vpack.c.b16 %v975, %v974
        %v989 = vpack.c.b16 %v977, %v976
        %v990 = vpack.c.b16 %v979, %v978
        %v991 = vpack.c.b16 %v981, %v980
        %v992 = vpack.c.b16 %v983, %v982
        %v993 = vpack.c.b16 %v985, %v984
        %1002 = vmatprep.subr.bf16.mxu0 0
        %1003 = vmatpush1.bf16.msra.mxu0 %v986
        %1004 = vmatprep.subr.bf16.mxu0 0
        %1005 = vmatpush1.bf16.msra.mxu0 %v987
        %1006 = vmatprep.subr.bf16.mxu0 0
        %1007 = vmatpush1.bf16.msra.mxu0 %v988
        %1008 = vmatprep.subr.bf16.mxu0 0
        %1009 = vmatpush1.bf16.msra.mxu0 %v989
        %1010 = vmatprep.subr.bf16.mxu0 0
        %1011 = vmatpush1.bf16.msra.mxu0 %v990
        %1012 = vmatprep.subr.bf16.mxu0 0
        %1013 = vmatpush1.bf16.msra.mxu0 %v991
        %1014 = vmatprep.subr.bf16.mxu0 0
        %1015 = vmatpush1.bf16.msra.mxu0 %v992
        %1016 = vmatprep.subr.bf16.mxu0 0
        %1017 = vmatpush1.bf16.msra.mxu0 %v993
        %1018 = vmatprep.subr.bf16.mxu0 0
        %1019 = vmatpush1.bf16.msra.mxu0 0
        %1020 = vmatprep.subr.bf16.mxu0 0
        %1021 = vmatpush1.bf16.msra.mxu0 0
        %1022 = vmatprep.subr.bf16.mxu0 0
        %1023 = vmatpush1.bf16.msra.mxu0 0
        %1024 = vmatprep.subr.bf16.mxu0 0
        %1025 = vmatpush1.bf16.msra.mxu0 0
        %1026 = vmatprep.subr.bf16.mxu0 0
        %1027 = vmatpush1.bf16.msra.mxu0 0
        %1028 = vmatprep.subr.bf16.mxu0 0
        %1029 = vmatpush1.bf16.msra.mxu0 0
        %1030 = vmatprep.subr.bf16.mxu0 0
        %1031 = vmatpush1.bf16.msra.mxu0 0
        %1032 = vmatprep.subr.bf16.mxu0 0
        %1033 = vmatpush1.bf16.msra.mxu0 0
        %1034 = vmatprep.mubr.bf16.mxu0 0
        %1035 = vmatmul.mubr.bf16.gmra.mrb[0].mxu0 %v800
        %v1036 = vpop.f32.mrb[0].mxu0
        %v1037 = vadd.f32 0.0, %v1036
        %v1038 = vpop.f32.mrb[0].mxu0
        %v1039 = vpop.f32.mrb[0].mxu0
        %v1040 = vpop.f32.mrb[0].mxu0
        %1041 = vdwg.mxu0
        %v1058 = vunpack.c.l.b16 %v834
        %v1059 = vunpack.c.l.b16 %v835
        %v1060 = vunpack.c.l.b16 %v836
        %v1061 = vunpack.c.l.b16 %v837
        %v1062 = vunpack.c.l.b16 %v838
        %v1063 = vunpack.c.l.b16 %v839
        %v1064 = vunpack.c.l.b16 %v840
        %v1065 = vunpack.c.l.b16 %v841
        %v1066 = vunpack.c.l.b16 %v842
        %v1067 = vunpack.c.l.b16 %v843
        %v1068 = vunpack.c.l.b16 %v844
        %v1069 = vunpack.c.l.b16 %v845
        %v1070 = vunpack.c.l.b16 %v846
        %v1071 = vunpack.c.l.b16 %v847
        %v1072 = vunpack.c.l.b16 %v848
        %v1073 = vunpack.c.l.b16 %v849
        %v1074 = vpack.c.b16 %v1059, %v1058
        %v1075 = vpack.c.b16 %v1061, %v1060
        %v1076 = vpack.c.b16 %v1063, %v1062
        %v1077 = vpack.c.b16 %v1065, %v1064
        %v1078 = vpack.c.b16 %v1067, %v1066
        %v1079 = vpack.c.b16 %v1069, %v1068
        %v1080 = vpack.c.b16 %v1071, %v1070
        %v1081 = vpack.c.b16 %v1073, %v1072
        %1090 = vmatprep.subr.bf16.mxu0 0
        %1091 = vmatpush1.bf16.msra.mxu0 %v1074
        %1092 = vmatprep.subr.bf16.mxu0 0
        %1093 = vmatpush1.bf16.msra.mxu0 %v1075
        %1094 = vmatprep.subr.bf16.mxu0 0
        %1095 = vmatpush1.bf16.msra.mxu0 %v1076
        %1096 = vmatprep.subr.bf16.mxu0 0
        %1097 = vmatpush1.bf16.msra.mxu0 %v1077
        %1098 = vmatprep.subr.bf16.mxu0 0
        %1099 = vmatpush1.bf16.msra.mxu0 %v1078
        %1100 = vmatprep.subr.bf16.mxu0 0
        %1101 = vmatpush1.bf16.msra.mxu0 %v1079
        %1102 = vmatprep.subr.bf16.mxu0 0
        %1103 = vmatpush1.bf16.msra.mxu0 %v1080
        %1104 = vmatprep.subr.bf16.mxu0 0
        %1105 = vmatpush1.bf16.msra.mxu0 %v1081
        %1106 = vmatprep.subr.bf16.mxu0 0
        %1107 = vmatpush1.bf16.msra.mxu0 0
        %1108 = vmatprep.subr.bf16.mxu0 0
        %1109 = vmatpush1.bf16.msra.mxu0 0
        %1110 = vmatprep.subr.bf16.mxu0 0
        %1111 = vmatpush1.bf16.msra.mxu0 0
        %1112 = vmatprep.subr.bf16.mxu0 0
        %1113 = vmatpush1.bf16.msra.mxu0 0
        %1114 = vmatprep.subr.bf16.mxu0 0
        %1115 = vmatpush1.bf16.msra.mxu0 0
        %1116 = vmatprep.subr.bf16.mxu0 0
        %1117 = vmatpush1.bf16.msra.mxu0 0
        %1118 = vmatprep.subr.bf16.mxu0 0
        %1119 = vmatpush1.bf16.msra.mxu0 0
        %1120 = vmatprep.subr.bf16.mxu0 0
        %1121 = vmatpush1.bf16.msra.mxu0 0
        %1122 = vmatprep.mubr.bf16.mxu0 0
        %1123 = vmatmul.mubr.bf16.gmra.mrb[0].mxu0 %v800
        %v1124 = vpop.f32.mrb[0].mxu0
        %v1125 = vadd.f32 0.0, %v1124
        %v1126 = vpop.f32.mrb[0].mxu0
        %v1127 = vpop.f32.mrb[0].mxu0
        %v1128 = vpop.f32.mrb[0].mxu0
        %1129 = vdwg.mxu0
        %v1146 = vunpack.c.l.b16 %v850
        %v1147 = vunpack.c.l.b16 %v851
        %v1148 = vunpack.c.l.b16 %v852
        %v1149 = vunpack.c.l.b16 %v853
        %v1150 = vunpack.c.l.b16 %v854
        %v1151 = vunpack.c.l.b16 %v855
        %v1152 = vunpack.c.l.b16 %v856
        %v1153 = vunpack.c.l.b16 %v857
        %v1154 = vunpack.c.l.b16 %v858
        %v1155 = vunpack.c.l.b16 %v859
        %v1156 = vunpack.c.l.b16 %v860
        %v1157 = vunpack.c.l.b16 %v861
        %v1158 = vunpack.c.l.b16 %v862
        %v1159 = vunpack.c.l.b16 %v863
        %v1160 = vunpack.c.l.b16 %v864
        %v1161 = vunpack.c.l.b16 %v865
        %v1162 = vpack.c.b16 %v1147, %v1146
        %v1163 = vpack.c.b16 %v1149, %v1148
        %v1164 = vpack.c.b16 %v1151, %v1150
        %v1165 = vpack.c.b16 %v1153, %v1152
        %v1166 = vpack.c.b16 %v1155, %v1154
        %v1167 = vpack.c.b16 %v1157, %v1156
        %v1168 = vpack.c.b16 %v1159, %v1158
        %v1169 = vpack.c.b16 %v1161, %v1160
        %1178 = vmatprep.subr.bf16.mxu0 0
        %1179 = vmatpush1.bf16.msra.mxu0 %v1162
        %1180 = vmatprep.subr.bf16.mxu0 0
        %1181 = vmatpush1.bf16.msra.mxu0 %v1163
        %1182 = vmatprep.subr.bf16.mxu0 0
        %1183 = vmatpush1.bf16.msra.mxu0 %v1164
        %1184 = vmatprep.subr.bf16.mxu0 0
        %1185 = vmatpush1.bf16.msra.mxu0 %v1165
        %1186 = vmatprep.subr.bf16.mxu0 0
        %1187 = vmatpush1.bf16.msra.mxu0 %v1166
        %1188 = vmatprep.subr.bf16.mxu0 0
        %1189 = vmatpush1.bf16.msra.mxu0 %v1167
        %1190 = vmatprep.subr.bf16.mxu0 0
        %1191 = vmatpush1.bf16.msra.mxu0 %v1168
        %1192 = vmatprep.subr.bf16.mxu0 0
        %1193 = vmatpush1.bf16.msra.mxu0 %v1169
        %1194 = vmatprep.subr.bf16.mxu0 0
        %1195 = vmatpush1.bf16.msra.mxu0 0
        %1196 = vmatprep.subr.bf16.mxu0 0
        %1197 = vmatpush1.bf16.msra.mxu0 0
        %1198 = vmatprep.subr.bf16.mxu0 0
        %1199 = vmatpush1.bf16.msra.mxu0 0
        %1200 = vmatprep.subr.bf16.mxu0 0
        %1201 = vmatpush1.bf16.msra.mxu0 0
        %1202 = vmatprep.subr.bf16.mxu0 0
        %1203 = vmatpush1.bf16.msra.mxu0 0
        %1204 = vmatprep.subr.bf16.mxu0 0
        %1205 = vmatpush1.bf16.msra.mxu0 0
        %1206 = vmatprep.subr.bf16.mxu0 0
        %1207 = vmatpush1.bf16.msra.mxu0 0
        %1208 = vmatprep.subr.bf16.mxu0 0
        %1209 = vmatpush1.bf16.msra.mxu0 0
        %1210 = vmatprep.mubr.bf16.mxu0 0
        %1211 = vmatmul.mubr.bf16.gmra.mrb[0].mxu0 %v800
        %v1212 = vpop.f32.mrb[0].mxu0
        %v1213 = vadd.f32 0.0, %v1212
        %v1214 = vpop.f32.mrb[0].mxu0
        %v1215 = vpop.f32.mrb[0].mxu0
        %v1216 = vpop.f32.mrb[0].mxu0
        %1217 = vdwg.mxu0
        %1218 = vmatprep.subr.bf16.mxu0 0
        %1219 = vmatpush1.bf16.msra.mxu0 %v898
        %1220 = vmatprep.subr.bf16.mxu0 0
        %1221 = vmatpush1.bf16.msra.mxu0 %v899
        %1222 = vmatprep.subr.bf16.mxu0 0
        %1223 = vmatpush1.bf16.msra.mxu0 %v900
        %1224 = vmatprep.subr.bf16.mxu0 0
        %1225 = vmatpush1.bf16.msra.mxu0 %v901
        %1226 = vmatprep.subr.bf16.mxu0 0
        %1227 = vmatpush1.bf16.msra.mxu0 %v902
        %1228 = vmatprep.subr.bf16.mxu0 0
        %1229 = vmatpush1.bf16.msra.mxu0 %v903
        %1230 = vmatprep.subr.bf16.mxu0 0
        %1231 = vmatpush1.bf16.msra.mxu0 %v904
        %1232 = vmatprep.subr.bf16.mxu0 0
        %1233 = vmatpush1.bf16.msra.mxu0 %v905
        %1234 = vmatprep.subr.bf16.mxu0 0
        %1235 = vmatpush1.bf16.msra.mxu0 0
        %1236 = vmatprep.subr.bf16.mxu0 0
        %1237 = vmatpush1.bf16.msra.mxu0 0
        %1238 = vmatprep.subr.bf16.mxu0 0
        %1239 = vmatpush1.bf16.msra.mxu0 0
        %1240 = vmatprep.subr.bf16.mxu0 0
        %1241 = vmatpush1.bf16.msra.mxu0 0
        %1242 = vmatprep.subr.bf16.mxu0 0
        %1243 = vmatpush1.bf16.msra.mxu0 0
        %1244 = vmatprep.subr.bf16.mxu0 0
        %1245 = vmatpush1.bf16.msra.mxu0 0
        %1246 = vmatprep.subr.bf16.mxu0 0
        %1247 = vmatpush1.bf16.msra.mxu0 0
        %1248 = vmatprep.subr.bf16.mxu0 0
        %1249 = vmatpush1.bf16.msra.mxu0 0
        %1250 = vmatprep.mubr.bf16.mxu0 0
        %1251 = vmatmul.mubr.bf16.gmra.mrb[0].mxu0 %v801
        %v1252 = vpop.f32.mrb[0].mxu0
        %v1253 = vadd.f32 0.0, %v1252
        %v1254 = vpop.f32.mrb[0].mxu0
        %v1255 = vpop.f32.mrb[0].mxu0
        %v1256 = vpop.f32.mrb[0].mxu0
        %1257 = vdwg.mxu0
        %1258 = vmatprep.subr.bf16.mxu0 0
        %1259 = vmatpush1.bf16.msra.mxu0 %v986
        %1260 = vmatprep.subr.bf16.mxu0 0
        %1261 = vmatpush1.bf16.msra.mxu0 %v987
        %1262 = vmatprep.subr.bf16.mxu0 0
        %1263 = vmatpush1.bf16.msra.mxu0 %v988
        %1264 = vmatprep.subr.bf16.mxu0 0
        %1265 = vmatpush1.bf16.msra.mxu0 %v989
        %1266 = vmatprep.subr.bf16.mxu0 0
        %1267 = vmatpush1.bf16.msra.mxu0 %v990
        %1268 = vmatprep.subr.bf16.mxu0 0
        %1269 = vmatpush1.bf16.msra.mxu0 %v991
        %1270 = vmatprep.subr.bf16.mxu0 0
        %1271 = vmatpush1.bf16.msra.mxu0 %v992
        %1272 = vmatprep.subr.bf16.mxu0 0
        %1273 = vmatpush1.bf16.msra.mxu0 %v993
        %1274 = vmatprep.subr.bf16.mxu0 0
        %1275 = vmatpush1.bf16.msra.mxu0 0
        %1276 = vmatprep.subr.bf16.mxu0 0
        %1277 = vmatpush1.bf16.msra.mxu0 0
        %1278 = vmatprep.subr.bf16.mxu0 0
        %1279 = vmatpush1.bf16.msra.mxu0 0
        %1280 = vmatprep.subr.bf16.mxu0 0
        %1281 = vmatpush1.bf16.msra.mxu0 0
        %1282 = vmatprep.subr.bf16.mxu0 0
        %1283 = vmatpush1.bf16.msra.mxu0 0
        %1284 = vmatprep.subr.bf16.mxu0 0
        %1285 = vmatpush1.bf16.msra.mxu0 0
        %1286 = vmatprep.subr.bf16.mxu0 0
        %1287 = vmatpush1.bf16.msra.mxu0 0
        %1288 = vmatprep.subr.bf16.mxu0 0
        %1289 = vmatpush1.bf16.msra.mxu0 0
        %1290 = vmatprep.mubr.bf16.mxu0 0
        %1291 = vmatmul.mubr.bf16.gmra.mrb[0].mxu0 %v801
        %v1292 = vpop.f32.mrb[0].mxu0
        %v1293 = vadd.f32 0.0, %v1292
        %v1294 = vpop.f32.mrb[0].mxu0
        %v1295 = vpop.f32.mrb[0].mxu0
        %v1296 = vpop.f32.mrb[0].mxu0
        %1297 = vdwg.mxu0
        %1298 = vmatprep.subr.bf16.mxu0 0
        %1299 = vmatpush1.bf16.msra.mxu0 %v1074
        %1300 = vmatprep.subr.bf16.mxu0 0
        %1301 = vmatpush1.bf16.msra.mxu0 %v1075
        %1302 = vmatprep.subr.bf16.mxu0 0
        %1303 = vmatpush1.bf16.msra.mxu0 %v1076
        %1304 = vmatprep.subr.bf16.mxu0 0
        %1305 = vmatpush1.bf16.msra.mxu0 %v1077
        %1306 = vmatprep.subr.bf16.mxu0 0
        %1307 = vmatpush1.bf16.msra.mxu0 %v1078
        %1308 = vmatprep.subr.bf16.mxu0 0
        %1309 = vmatpush1.bf16.msra.mxu0 %v1079
        %1310 = vmatprep.subr.bf16.mxu0 0
        %1311 = vmatpush1.bf16.msra.mxu0 %v1080
        %1312 = vmatprep.subr.bf16.mxu0 0
        %1313 = vmatpush1.bf16.msra.mxu0 %v1081
        %1314 = vmatprep.subr.bf16.mxu0 0
        %1315 = vmatpush1.bf16.msra.mxu0 0
        %1316 = vmatprep.subr.bf16.mxu0 0
        %1317 = vmatpush1.bf16.msra.mxu0 0
        %1318 = vmatprep.subr.bf16.mxu0 0
        %1319 = vmatpush1.bf16.msra.mxu0 0
        %1320 = vmatprep.subr.bf16.mxu0 0
        %1321 = vmatpush1.bf16.msra.mxu0 0
        %1322 = vmatprep.subr.bf16.mxu0 0
        %1323 = vmatpush1.bf16.msra.mxu0 0
        %1324 = vmatprep.subr.bf16.mxu0 0
        %1325 = vmatpush1.bf16.msra.mxu0 0
        %1326 = vmatprep.subr.bf16.mxu0 0
        %1327 = vmatpush1.bf16.msra.mxu0 0
        %1328 = vmatprep.subr.bf16.mxu0 0
        %1329 = vmatpush1.bf16.msra.mxu0 0
        %1330 = vmatprep.mubr.bf16.mxu0 0
        %1331 = vmatmul.mubr.bf16.gmra.mrb[0].mxu0 %v801
        %v1332 = vpop.f32.mrb[0].mxu0
        %v1333 = vadd.f32 0.0, %v1332
        %v1334 = vpop.f32.mrb[0].mxu0
        %v1335 = vpop.f32.mrb[0].mxu0
        %v1336 = vpop.f32.mrb[0].mxu0
        %1337 = vdwg.mxu0
        %1338 = vmatprep.subr.bf16.mxu0 0
        %1339 = vmatpush1.bf16.msra.mxu0 %v1162
        %1340 = vmatprep.subr.bf16.mxu0 0
        %1341 = vmatpush1.bf16.msra.mxu0 %v1163
        %1342 = vmatprep.subr.bf16.mxu0 0
        %1343 = vmatpush1.bf16.msra.mxu0 %v1164
        %1344 = vmatprep.subr.bf16.mxu0 0
        %1345 = vmatpush1.bf16.msra.mxu0 %v1165
        %1346 = vmatprep.subr.bf16.mxu0 0
        %1347 = vmatpush1.bf16.msra.mxu0 %v1166
        %1348 = vmatprep.subr.bf16.mxu0 0
        %1349 = vmatpush1.bf16.msra.mxu0 %v1167
        %1350 = vmatprep.subr.bf16.mxu0 0
        %1351 = vmatpush1.bf16.msra.mxu0 %v1168
        %1352 = vmatprep.subr.bf16.mxu0 0
        %1353 = vmatpush1.bf16.msra.mxu0 %v1169
        %1354 = vmatprep.subr.bf16.mxu0 0
        %1355 = vmatpush1.bf16.msra.mxu0 0
        %1356 = vmatprep.subr.bf16.mxu0 0
        %1357 = vmatpush1.bf16.msra.mxu0 0
        %1358 = vmatprep.subr.bf16.mxu0 0
        %1359 = vmatpush1.bf16.msra.mxu0 0
        %1360 = vmatprep.subr.bf16.mxu0 0
        %1361 = vmatpush1.bf16.msra.mxu0 0
        %1362 = vmatprep.subr.bf16.mxu0 0
        %1363 = vmatpush1.bf16.msra.mxu0 0
        %1364 = vmatprep.subr.bf16.mxu0 0
        %1365 = vmatpush1.bf16.msra.mxu0 0
        %1366 = vmatprep.subr.bf16.mxu0 0
        %1367 = vmatpush1.bf16.msra.mxu0 0
        %1368 = vmatprep.subr.bf16.mxu0 0
        %1369 = vmatpush1.bf16.msra.mxu0 0
        %1370 = vmatprep.mubr.bf16.mxu0 0
        %1371 = vmatmul.mubr.bf16.gmra.mrb[0].mxu0 %v801
        %v1372 = vpop.f32.mrb[0].mxu0
        %v1373 = vadd.f32 0.0, %v1372
        %v1374 = vpop.f32.mrb[0].mxu0
        %v1375 = vpop.f32.mrb[0].mxu0
        %v1376 = vpop.f32.mrb[0].mxu0
        %1377 = vdwg.mxu0
        %v1378 = vld [vmem:[%s682] sm:$0xf]
        %v1379 = vld [vmem:[%s682 + $0x4] sm:$0xf]
        %v1380 = vld [vmem:[%s682 + $0x8] sm:$0xf]
        %v1381 = vld [vmem:[%s682 + $0xc] sm:$0xf]
        %v1382 = vld [vmem:[%s682 + $0x10] sm:$0xf]
        %v1383 = vld [vmem:[%s682 + $0x14] sm:$0xf]
        %v1384 = vld [vmem:[%s682 + $0x18] sm:$0xf]
        %v1385 = vld [vmem:[%s682 + $0x1c] sm:$0xf]
        %v1386 = vld [vmem:[%s682 + $0x20] sm:$0xf]
        %v1387 = vld [vmem:[%s682 + $0x24] sm:$0xf]
        %v1388 = vld [vmem:[%s682 + $0x28] sm:$0xf]
        %v1389 = vld [vmem:[%s682 + $0x2c] sm:$0xf]
        %v1390 = vld [vmem:[%s682 + $0x30] sm:$0xf]
        %v1391 = vld [vmem:[%s682 + $0x34] sm:$0xf]
        %v1392 = vld [vmem:[%s682 + $0x38] sm:$0xf]
        %v1393 = vld [vmem:[%s682 + $0x3c] sm:$0xf]
        %v1394 = vld [vmem:[%s682 + $0x40] sm:$0xf]
        %v1395 = vld [vmem:[%s682 + $0x44] sm:$0xf]
        %v1396 = vld [vmem:[%s682 + $0x48] sm:$0xf]
        %v1397 = vld [vmem:[%s682 + $0x4c] sm:$0xf]
        %v1398 = vld [vmem:[%s682 + $0x50] sm:$0xf]
        %v1399 = vld [vmem:[%s682 + $0x54] sm:$0xf]
        %v1400 = vld [vmem:[%s682 + $0x58] sm:$0xf]
        %v1401 = vld [vmem:[%s682 + $0x5c] sm:$0xf]
        %v1402 = vld [vmem:[%s682 + $0x60] sm:$0xf]
        %v1403 = vld [vmem:[%s682 + $0x64] sm:$0xf]
        %v1404 = vld [vmem:[%s682 + $0x68] sm:$0xf]
        %v1405 = vld [vmem:[%s682 + $0x6c] sm:$0xf]
        %v1406 = vld [vmem:[%s682 + $0x70] sm:$0xf]
        %v1407 = vld [vmem:[%s682 + $0x74] sm:$0xf]
        %v1408 = vld [vmem:[%s682 + $0x78] sm:$0xf]
        %v1409 = vld [vmem:[%s682 + $0x7c] sm:$0xf]
        %v1410 = vld [vmem:[%s682 + $0x80] sm:$0xf]
        %v1411 = vld [vmem:[%s682 + $0x84] sm:$0xf]
        %v1412 = vld [vmem:[%s682 + $0x88] sm:$0xf]
        %v1413 = vld [vmem:[%s682 + $0x8c] sm:$0xf]
        %v1414 = vld [vmem:[%s682 + $0x90] sm:$0xf]
        %v1415 = vld [vmem:[%s682 + $0x94] sm:$0xf]
        %v1416 = vld [vmem:[%s682 + $0x98] sm:$0xf]
        %v1417 = vld [vmem:[%s682 + $0x9c] sm:$0xf]
        %v1418 = vld [vmem:[%s682 + $0xa0] sm:$0xf]
        %v1419 = vld [vmem:[%s682 + $0xa4] sm:$0xf]
        %v1420 = vld [vmem:[%s682 + $0xa8] sm:$0xf]
        %v1421 = vld [vmem:[%s682 + $0xac] sm:$0xf]
        %v1422 = vld [vmem:[%s682 + $0xb0] sm:$0xf]
        %v1423 = vld [vmem:[%s682 + $0xb4] sm:$0xf]
        %v1424 = vld [vmem:[%s682 + $0xb8] sm:$0xf]
        %v1425 = vld [vmem:[%s682 + $0xbc] sm:$0xf]
        %v1426 = vld [vmem:[%s682 + $0xc0] sm:$0xf]
        %v1427 = vld [vmem:[%s682 + $0xc4] sm:$0xf]
        %v1428 = vld [vmem:[%s682 + $0xc8] sm:$0xf]
        %v1429 = vld [vmem:[%s682 + $0xcc] sm:$0xf]
        %v1430 = vld [vmem:[%s682 + $0xd0] sm:$0xf]
        %v1431 = vld [vmem:[%s682 + $0xd4] sm:$0xf]
        %v1432 = vld [vmem:[%s682 + $0xd8] sm:$0xf]
        %v1433 = vld [vmem:[%s682 + $0xdc] sm:$0xf]
        %v1434 = vld [vmem:[%s682 + $0xe0] sm:$0xf]
        %v1435 = vld [vmem:[%s682 + $0xe4] sm:$0xf]
        %v1436 = vld [vmem:[%s682 + $0xe8] sm:$0xf]
        %v1437 = vld [vmem:[%s682 + $0xec] sm:$0xf]
        %v1438 = vld [vmem:[%s682 + $0xf0] sm:$0xf]
        %v1439 = vld [vmem:[%s682 + $0xf4] sm:$0xf]
        %v1440 = vld [vmem:[%s682 + $0xf8] sm:$0xf]
        %v1441 = vld [vmem:[%s682 + $0xfc] sm:$0xf]
        %v1458 = vunpack.c.l.b16 %v1378
        %v1459 = vunpack.c.l.b16 %v1379
        %v1460 = vunpack.c.l.b16 %v1380
        %v1461 = vunpack.c.l.b16 %v1381
        %v1462 = vunpack.c.l.b16 %v1382
        %v1463 = vunpack.c.l.b16 %v1383
        %v1464 = vunpack.c.l.b16 %v1384
        %v1465 = vunpack.c.l.b16 %v1385
        %v1466 = vunpack.c.l.b16 %v1386
        %v1467 = vunpack.c.l.b16 %v1387
        %v1468 = vunpack.c.l.b16 %v1388
        %v1469 = vunpack.c.l.b16 %v1389
        %v1470 = vunpack.c.l.b16 %v1390
        %v1471 = vunpack.c.l.b16 %v1391
        %v1472 = vunpack.c.l.b16 %v1392
        %v1473 = vunpack.c.l.b16 %v1393
        %v1474 = vpack.c.b16 %v1459, %v1458
        %v1475 = vpack.c.b16 %v1461, %v1460
        %v1476 = vpack.c.b16 %v1463, %v1462
        %v1477 = vpack.c.b16 %v1465, %v1464
        %v1478 = vpack.c.b16 %v1467, %v1466
        %v1479 = vpack.c.b16 %v1469, %v1468
        %v1480 = vpack.c.b16 %v1471, %v1470
        %v1481 = vpack.c.b16 %v1473, %v1472
        %1490 = vmatprep.subr.bf16.mxu0 0
        %1491 = vmatpush1.bf16.msra.mxu0 %v1474
        %1492 = vmatprep.subr.bf16.mxu0 0
        %1493 = vmatpush1.bf16.msra.mxu0 %v1475
        %1494 = vmatprep.subr.bf16.mxu0 0
        %1495 = vmatpush1.bf16.msra.mxu0 %v1476
        %1496 = vmatprep.subr.bf16.mxu0 0
        %1497 = vmatpush1.bf16.msra.mxu0 %v1477
        %1498 = vmatprep.subr.bf16.mxu0 0
        %1499 = vmatpush1.bf16.msra.mxu0 %v1478
        %1500 = vmatprep.subr.bf16.mxu0 0
        %1501 = vmatpush1.bf16.msra.mxu0 %v1479
        %1502 = vmatprep.subr.bf16.mxu0 0
        %1503 = vmatpush1.bf16.msra.mxu0 %v1480
        %1504 = vmatprep.subr.bf16.mxu0 0
        %1505 = vmatpush1.bf16.msra.mxu0 %v1481
        %1506 = vmatprep.subr.bf16.mxu0 0
        %1507 = vmatpush1.bf16.msra.mxu0 0
        %1508 = vmatprep.subr.bf16.mxu0 0
        %1509 = vmatpush1.bf16.msra.mxu0 0
        %1510 = vmatprep.subr.bf16.mxu0 0
        %1511 = vmatpush1.bf16.msra.mxu0 0
        %1512 = vmatprep.subr.bf16.mxu0 0
        %1513 = vmatpush1.bf16.msra.mxu0 0
        %1514 = vmatprep.subr.bf16.mxu0 0
        %1515 = vmatpush1.bf16.msra.mxu0 0
        %1516 = vmatprep.subr.bf16.mxu0 0
        %1517 = vmatpush1.bf16.msra.mxu0 0
        %1518 = vmatprep.subr.bf16.mxu0 0
        %1519 = vmatpush1.bf16.msra.mxu0 0
        %1520 = vmatprep.subr.bf16.mxu0 0
        %1521 = vmatpush1.bf16.msra.mxu0 0
        %1522 = vmatprep.mubr.bf16.mxu0 0
        %1523 = vmatmul.mubr.bf16.gmra.mrb[0].mxu0 %v800
        %v1524 = vpop.f32.mrb[0].mxu0
        %v1525 = vadd.f32 0.0, %v1524
        %v1526 = vpop.f32.mrb[0].mxu0
        %v1527 = vpop.f32.mrb[0].mxu0
        %v1528 = vpop.f32.mrb[0].mxu0
        %1529 = vdwg.mxu0
        %v1546 = vunpack.c.l.b16 %v1394
        %v1547 = vunpack.c.l.b16 %v1395
        %v1548 = vunpack.c.l.b16 %v1396
        %v1549 = vunpack.c.l.b16 %v1397
        %v1550 = vunpack.c.l.b16 %v1398
        %v1551 = vunpack.c.l.b16 %v1399
        %v1552 = vunpack.c.l.b16 %v1400
        %v1553 = vunpack.c.l.b16 %v1401
        %v1554 = vunpack.c.l.b16 %v1402
        %v1555 = vunpack.c.l.b16 %v1403
        %v1556 = vunpack.c.l.b16 %v1404
        %v1557 = vunpack.c.l.b16 %v1405
        %v1558 = vunpack.c.l.b16 %v1406
        %v1559 = vunpack.c.l.b16 %v1407
        %v1560 = vunpack.c.l.b16 %v1408
        %v1561 = vunpack.c.l.b16 %v1409
        %v1562 = vpack.c.b16 %v1547, %v1546
        %v1563 = vpack.c.b16 %v1549, %v1548
        %v1564 = vpack.c.b16 %v1551, %v1550
        %v1565 = vpack.c.b16 %v1553, %v1552
        %v1566 = vpack.c.b16 %v1555, %v1554
        %v1567 = vpack.c.b16 %v1557, %v1556
        %v1568 = vpack.c.b16 %v1559, %v1558
        %v1569 = vpack.c.b16 %v1561, %v1560
        %1578 = vmatprep.subr.bf16.mxu0 0
        %1579 = vmatpush1.bf16.msra.mxu0 %v1562
        %1580 = vmatprep.subr.bf16.mxu0 0
        %1581 = vmatpush1.bf16.msra.mxu0 %v1563
        %1582 = vmatprep.subr.bf16.mxu0 0
        %1583 = vmatpush1.bf16.msra.mxu0 %v1564
        %1584 = vmatprep.subr.bf16.mxu0 0
        %1585 = vmatpush1.bf16.msra.mxu0 %v1565
        %1586 = vmatprep.subr.bf16.mxu0 0
        %1587 = vmatpush1.bf16.msra.mxu0 %v1566
        %1588 = vmatprep.subr.bf16.mxu0 0
        %1589 = vmatpush1.bf16.msra.mxu0 %v1567
        %1590 = vmatprep.subr.bf16.mxu0 0
        %1591 = vmatpush1.bf16.msra.mxu0 %v1568
        %1592 = vmatprep.subr.bf16.mxu0 0
        %1593 = vmatpush1.bf16.msra.mxu0 %v1569
        %1594 = vmatprep.subr.bf16.mxu0 0
        %1595 = vmatpush1.bf16.msra.mxu0 0
        %1596 = vmatprep.subr.bf16.mxu0 0
        %1597 = vmatpush1.bf16.msra.mxu0 0
        %1598 = vmatprep.subr.bf16.mxu0 0
        %1599 = vmatpush1.bf16.msra.mxu0 0
        %1600 = vmatprep.subr.bf16.mxu0 0
        %1601 = vmatpush1.bf16.msra.mxu0 0
        %1602 = vmatprep.subr.bf16.mxu0 0
        %1603 = vmatpush1.bf16.msra.mxu0 0
        %1604 = vmatprep.subr.bf16.mxu0 0
        %1605 = vmatpush1.bf16.msra.mxu0 0
        %1606 = vmatprep.subr.bf16.mxu0 0
        %1607 = vmatpush1.bf16.msra.mxu0 0
        %1608 = vmatprep.subr.bf16.mxu0 0
        %1609 = vmatpush1.bf16.msra.mxu0 0
        %1610 = vmatprep.mubr.bf16.mxu0 0
        %1611 = vmatmul.mubr.bf16.gmra.mrb[0].mxu0 %v800
        %v1612 = vpop.f32.mrb[0].mxu0
        %v1613 = vadd.f32 0.0, %v1612
        %v1614 = vpop.f32.mrb[0].mxu0
        %v1615 = vpop.f32.mrb[0].mxu0
        %v1616 = vpop.f32.mrb[0].mxu0
        %1617 = vdwg.mxu0
        %v1634 = vunpack.c.l.b16 %v1410
        %v1635 = vunpack.c.l.b16 %v1411
        %v1636 = vunpack.c.l.b16 %v1412
        %v1637 = vunpack.c.l.b16 %v1413
        %v1638 = vunpack.c.l.b16 %v1414
        %v1639 = vunpack.c.l.b16 %v1415
        %v1640 = vunpack.c.l.b16 %v1416
        %v1641 = vunpack.c.l.b16 %v1417
        %v1642 = vunpack.c.l.b16 %v1418
        %v1643 = vunpack.c.l.b16 %v1419
        %v1644 = vunpack.c.l.b16 %v1420
        %v1645 = vunpack.c.l.b16 %v1421
        %v1646 = vunpack.c.l.b16 %v1422
        %v1647 = vunpack.c.l.b16 %v1423
        %v1648 = vunpack.c.l.b16 %v1424
        %v1649 = vunpack.c.l.b16 %v1425
        %v1650 = vpack.c.b16 %v1635, %v1634
        %v1651 = vpack.c.b16 %v1637, %v1636
        %v1652 = vpack.c.b16 %v1639, %v1638
        %v1653 = vpack.c.b16 %v1641, %v1640
        %v1654 = vpack.c.b16 %v1643, %v1642
        %v1655 = vpack.c.b16 %v1645, %v1644
        %v1656 = vpack.c.b16 %v1647, %v1646
        %v1657 = vpack.c.b16 %v1649, %v1648
        %1666 = vmatprep.subr.bf16.mxu0 0
        %1667 = vmatpush1.bf16.msra.mxu0 %v1650
        %1668 = vmatprep.subr.bf16.mxu0 0
        %1669 = vmatpush1.bf16.msra.mxu0 %v1651
        %1670 = vmatprep.subr.bf16.mxu0 0
        %1671 = vmatpush1.bf16.msra.mxu0 %v1652
        %1672 = vmatprep.subr.bf16.mxu0 0
        %1673 = vmatpush1.bf16.msra.mxu0 %v1653
        %1674 = vmatprep.subr.bf16.mxu0 0
        %1675 = vmatpush1.bf16.msra.mxu0 %v1654
        %1676 = vmatprep.subr.bf16.mxu0 0
        %1677 = vmatpush1.bf16.msra.mxu0 %v1655
        %1678 = vmatprep.subr.bf16.mxu0 0
        %1679 = vmatpush1.bf16.msra.mxu0 %v1656
        %1680 = vmatprep.subr.bf16.mxu0 0
        %1681 = vmatpush1.bf16.msra.mxu0 %v1657
        %1682 = vmatprep.subr.bf16.mxu0 0
        %1683 = vmatpush1.bf16.msra.mxu0 0
        %1684 = vmatprep.subr.bf16.mxu0 0
        %1685 = vmatpush1.bf16.msra.mxu0 0
        %1686 = vmatprep.subr.bf16.mxu0 0
        %1687 = vmatpush1.bf16.msra.mxu0 0
        %1688 = vmatprep.subr.bf16.mxu0 0
        %1689 = vmatpush1.bf16.msra.mxu0 0
        %1690 = vmatprep.subr.bf16.mxu0 0
        %1691 = vmatpush1.bf16.msra.mxu0 0
        %1692 = vmatprep.subr.bf16.mxu0 0
        %1693 = vmatpush1.bf16.msra.mxu0 0
        %1694 = vmatprep.subr.bf16.mxu0 0
        %1695 = vmatpush1.bf16.msra.mxu0 0
        %1696 = vmatprep.subr.bf16.mxu0 0
        %1697 = vmatpush1.bf16.msra.mxu0 0
        %1698 = vmatprep.mubr.bf16.mxu0 0
        %1699 = vmatmul.mubr.bf16.gmra.mrb[0].mxu0 %v800
        %v1700 = vpop.f32.mrb[0].mxu0
        %v1701 = vadd.f32 0.0, %v1700
        %v1702 = vpop.f32.mrb[0].mxu0
        %v1703 = vpop.f32.mrb[0].mxu0
        %v1704 = vpop.f32.mrb[0].mxu0
        %1705 = vdwg.mxu0
        %v1722 = vunpack.c.l.b16 %v1426
        %v1723 = vunpack.c.l.b16 %v1427
        %v1724 = vunpack.c.l.b16 %v1428
        %v1725 = vunpack.c.l.b16 %v1429
        %v1726 = vunpack.c.l.b16 %v1430
        %v1727 = vunpack.c.l.b16 %v1431
        %v1728 = vunpack.c.l.b16 %v1432
        %v1729 = vunpack.c.l.b16 %v1433
        %v1730 = vunpack.c.l.b16 %v1434
        %v1731 = vunpack.c.l.b16 %v1435
        %v1732 = vunpack.c.l.b16 %v1436
        %v1733 = vunpack.c.l.b16 %v1437
        %v1734 = vunpack.c.l.b16 %v1438
        %v1735 = vunpack.c.l.b16 %v1439
        %v1736 = vunpack.c.l.b16 %v1440
        %v1737 = vunpack.c.l.b16 %v1441
        %v1738 = vpack.c.b16 %v1723, %v1722
        %v1739 = vpack.c.b16 %v1725, %v1724
        %v1740 = vpack.c.b16 %v1727, %v1726
        %v1741 = vpack.c.b16 %v1729, %v1728
        %v1742 = vpack.c.b16 %v1731, %v1730
        %v1743 = vpack.c.b16 %v1733, %v1732
        %v1744 = vpack.c.b16 %v1735, %v1734
        %v1745 = vpack.c.b16 %v1737, %v1736
        %1754 = vmatprep.subr.bf16.mxu0 0
        %1755 = vmatpush1.bf16.msra.mxu0 %v1738
        %1756 = vmatprep.subr.bf16.mxu0 0
        %1757 = vmatpush1.bf16.msra.mxu0 %v1739
        %1758 = vmatprep.subr.bf16.mxu0 0
        %1759 = vmatpush1.bf16.msra.mxu0 %v1740
        %1760 = vmatprep.subr.bf16.mxu0 0
        %1761 = vmatpush1.bf16.msra.mxu0 %v1741
        %1762 = vmatprep.subr.bf16.mxu0 0
        %1763 = vmatpush1.bf16.msra.mxu0 %v1742
        %1764 = vmatprep.subr.bf16.mxu0 0
        %1765 = vmatpush1.bf16.msra.mxu0 %v1743
        %1766 = vmatprep.subr.bf16.mxu0 0
        %1767 = vmatpush1.bf16.msra.mxu0 %v1744
        %1768 = vmatprep.subr.bf16.mxu0 0
        %1769 = vmatpush1.bf16.msra.mxu0 %v1745
        %1770 = vmatprep.subr.bf16.mxu0 0
        %1771 = vmatpush1.bf16.msra.mxu0 0
        %1772 = vmatprep.subr.bf16.mxu0 0
        %1773 = vmatpush1.bf16.msra.mxu0 0
        %1774 = vmatprep.subr.bf16.mxu0 0
        %1775 = vmatpush1.bf16.msra.mxu0 0
        %1776 = vmatprep.subr.bf16.mxu0 0
        %1777 = vmatpush1.bf16.msra.mxu0 0
        %1778 = vmatprep.subr.bf16.mxu0 0
        %1779 = vmatpush1.bf16.msra.mxu0 0
        %1780 = vmatprep.subr.bf16.mxu0 0
        %1781 = vmatpush1.bf16.msra.mxu0 0
        %1782 = vmatprep.subr.bf16.mxu0 0
        %1783 = vmatpush1.bf16.msra.mxu0 0
        %1784 = vmatprep.subr.bf16.mxu0 0
        %1785 = vmatpush1.bf16.msra.mxu0 0
        %1786 = vmatprep.mubr.bf16.mxu0 0
        %1787 = vmatmul.mubr.bf16.gmra.mrb[0].mxu0 %v800
        %v1788 = vpop.f32.mrb[0].mxu0
        %v1789 = vadd.f32 0.0, %v1788
        %v1790 = vpop.f32.mrb[0].mxu0
        %v1791 = vpop.f32.mrb[0].mxu0
        %v1792 = vpop.f32.mrb[0].mxu0
        %1793 = vdwg.mxu0
        %1794 = vmatprep.subr.bf16.mxu0 0
        %1795 = vmatpush1.bf16.msra.mxu0 %v1474
        %1796 = vmatprep.subr.bf16.mxu0 0
        %1797 = vmatpush1.bf16.msra.mxu0 %v1475
        %1798 = vmatprep.subr.bf16.mxu0 0
        %1799 = vmatpush1.bf16.msra.mxu0 %v1476
        %1800 = vmatprep.subr.bf16.mxu0 0
        %1801 = vmatpush1.bf16.msra.mxu0 %v1477
        %1802 = vmatprep.subr.bf16.mxu0 0
        %1803 = vmatpush1.bf16.msra.mxu0 %v1478
        %1804 = vmatprep.subr.bf16.mxu0 0
        %1805 = vmatpush1.bf16.msra.mxu0 %v1479
        %1806 = vmatprep.subr.bf16.mxu0 0
        %1807 = vmatpush1.bf16.msra.mxu0 %v1480
        %1808 = vmatprep.subr.bf16.mxu0 0
        %1809 = vmatpush1.bf16.msra.mxu0 %v1481
        %1810 = vmatprep.subr.bf16.mxu0 0
        %1811 = vmatpush1.bf16.msra.mxu0 0
        %1812 = vmatprep.subr.bf16.mxu0 0
        %1813 = vmatpush1.bf16.msra.mxu0 0
        %1814 = vmatprep.subr.bf16.mxu0 0
        %1815 = vmatpush1.bf16.msra.mxu0 0
        %1816 = vmatprep.subr.bf16.mxu0 0
        %1817 = vmatpush1.bf16.msra.mxu0 0
        %1818 = vmatprep.subr.bf16.mxu0 0
        %1819 = vmatpush1.bf16.msra.mxu0 0
        %1820 = vmatprep.subr.bf16.mxu0 0
        %1821 = vmatpush1.bf16.msra.mxu0 0
        %1822 = vmatprep.subr.bf16.mxu0 0
        %1823 = vmatpush1.bf16.msra.mxu0 0
        %1824 = vmatprep.subr.bf16.mxu0 0
        %1825 = vmatpush1.bf16.msra.mxu0 0
        %1826 = vmatprep.mubr.bf16.mxu0 0
        %1827 = vmatmul.mubr.bf16.gmra.mrb[0].mxu0 %v801
        %v1828 = vpop.f32.mrb[0].mxu0
        %v1829 = vadd.f32 0.0, %v1828
        %v1830 = vpop.f32.mrb[0].mxu0
        %v1831 = vpop.f32.mrb[0].mxu0
        %v1832 = vpop.f32.mrb[0].mxu0
        %1833 = vdwg.mxu0
        %1834 = vmatprep.subr.bf16.mxu0 0
        %1835 = vmatpush1.bf16.msra.mxu0 %v1562
        %1836 = vmatprep.subr.bf16.mxu0 0
        %1837 = vmatpush1.bf16.msra.mxu0 %v1563
        %1838 = vmatprep.subr.bf16.mxu0 0
        %1839 = vmatpush1.bf16.msra.mxu0 %v1564
        %1840 = vmatprep.subr.bf16.mxu0 0
        %1841 = vmatpush1.bf16.msra.mxu0 %v1565
        %1842 = vmatprep.subr.bf16.mxu0 0
        %1843 = vmatpush1.bf16.msra.mxu0 %v1566
        %1844 = vmatprep.subr.bf16.mxu0 0
        %1845 = vmatpush1.bf16.msra.mxu0 %v1567
        %1846 = vmatprep.subr.bf16.mxu0 0
        %1847 = vmatpush1.bf16.msra.mxu0 %v1568
        %1848 = vmatprep.subr.bf16.mxu0 0
        %1849 = vmatpush1.bf16.msra.mxu0 %v1569
        %1850 = vmatprep.subr.bf16.mxu0 0
        %1851 = vmatpush1.bf16.msra.mxu0 0
        %1852 = vmatprep.subr.bf16.mxu0 0
        %1853 = vmatpush1.bf16.msra.mxu0 0
        %1854 = vmatprep.subr.bf16.mxu0 0
        %1855 = vmatpush1.bf16.msra.mxu0 0
        %1856 = vmatprep.subr.bf16.mxu0 0
        %1857 = vmatpush1.bf16.msra.mxu0 0
        %1858 = vmatprep.subr.bf16.mxu0 0
        %1859 = vmatpush1.bf16.msra.mxu0 0
        %1860 = vmatprep.subr.bf16.mxu0 0
        %1861 = vmatpush1.bf16.msra.mxu0 0
        %1862 = vmatprep.subr.bf16.mxu0 0
        %1863 = vmatpush1.bf16.msra.mxu0 0
        %1864 = vmatprep.subr.bf16.mxu0 0
        %1865 = vmatpush1.bf16.msra.mxu0 0
        %1866 = vmatprep.mubr.bf16.mxu0 0
        %1867 = vmatmul.mubr.bf16.gmra.mrb[0].mxu0 %v801
        %v1868 = vpop.f32.mrb[0].mxu0
        %v1869 = vadd.f32 0.0, %v1868
        %v1870 = vpop.f32.mrb[0].mxu0
        %v1871 = vpop.f32.mrb[0].mxu0
        %v1872 = vpop.f32.mrb[0].mxu0
        %1873 = vdwg.mxu0
        %1874 = vmatprep.subr.bf16.mxu0 0
        %1875 = vmatpush1.bf16.msra.mxu0 %v1650
        %1876 = vmatprep.subr.bf16.mxu0 0
        %1877 = vmatpush1.bf16.msra.mxu0 %v1651
        %1878 = vmatprep.subr.bf16.mxu0 0
        %1879 = vmatpush1.bf16.msra.mxu0 %v1652
        %1880 = vmatprep.subr.bf16.mxu0 0
        %1881 = vmatpush1.bf16.msra.mxu0 %v1653
        %1882 = vmatprep.subr.bf16.mxu0 0
        %1883 = vmatpush1.bf16.msra.mxu0 %v1654
        %1884 = vmatprep.subr.bf16.mxu0 0
        %1885 = vmatpush1.bf16.msra.mxu0 %v1655
        %1886 = vmatprep.subr.bf16.mxu0 0
        %1887 = vmatpush1.bf16.msra.mxu0 %v1656
        %1888 = vmatprep.subr.bf16.mxu0 0
        %1889 = vmatpush1.bf16.msra.mxu0 %v1657
        %1890 = vmatprep.subr.bf16.mxu0 0
        %1891 = vmatpush1.bf16.msra.mxu0 0
        %1892 = vmatprep.subr.bf16.mxu0 0
        %1893 = vmatpush1.bf16.msra.mxu0 0
        %1894 = vmatprep.subr.bf16.mxu0 0
        %1895 = vmatpush1.bf16.msra.mxu0 0
        %1896 = vmatprep.subr.bf16.mxu0 0
        %1897 = vmatpush1.bf16.msra.mxu0 0
        %1898 = vmatprep.subr.bf16.mxu0 0
        %1899 = vmatpush1.bf16.msra.mxu0 0
        %1900 = vmatprep.subr.bf16.mxu0 0
        %1901 = vmatpush1.bf16.msra.mxu0 0
        %1902 = vmatprep.subr.bf16.mxu0 0
        %1903 = vmatpush1.bf16.msra.mxu0 0
        %1904 = vmatprep.subr.bf16.mxu0 0
        %1905 = vmatpush1.bf16.msra.mxu0 0
        %1906 = vmatprep.mubr.bf16.mxu0 0
        %1907 = vmatmul.mubr.bf16.gmra.mrb[0].mxu0 %v801
        %v1908 = vpop.f32.mrb[0].mxu0
        %v1909 = vadd.f32 0.0, %v1908
        %v1910 = vpop.f32.mrb[0].mxu0
        %v1911 = vpop.f32.mrb[0].mxu0
        %v1912 = vpop.f32.mrb[0].mxu0
        %1913 = vdwg.mxu0
        %1914 = vmatprep.subr.bf16.mxu0 0
        %1915 = vmatpush1.bf16.msra.mxu0 %v1738
        %1916 = vmatprep.subr.bf16.mxu0 0
        %1917 = vmatpush1.bf16.msra.mxu0 %v1739
        %1918 = vmatprep.subr.bf16.mxu0 0
        %1919 = vmatpush1.bf16.msra.mxu0 %v1740
        %1920 = vmatprep.subr.bf16.mxu0 0
        %1921 = vmatpush1.bf16.msra.mxu0 %v1741
        %1922 = vmatprep.subr.bf16.mxu0 0
        %1923 = vmatpush1.bf16.msra.mxu0 %v1742
        %1924 = vmatprep.subr.bf16.mxu0 0
        %1925 = vmatpush1.bf16.msra.mxu0 %v1743
        %1926 = vmatprep.subr.bf16.mxu0 0
        %1927 = vmatpush1.bf16.msra.mxu0 %v1744
        %1928 = vmatprep.subr.bf16.mxu0 0
        %1929 = vmatpush1.bf16.msra.mxu0 %v1745
        %1930 = vmatprep.subr.bf16.mxu0 0
        %1931 = vmatpush1.bf16.msra.mxu0 0
        %1932 = vmatprep.subr.bf16.mxu0 0
        %1933 = vmatpush1.bf16.msra.mxu0 0
        %1934 = vmatprep.subr.bf16.mxu0 0
        %1935 = vmatpush1.bf16.msra.mxu0 0
        %1936 = vmatprep.subr.bf16.mxu0 0
        %1937 = vmatpush1.bf16.msra.mxu0 0
        %1938 = vmatprep.subr.bf16.mxu0 0
        %1939 = vmatpush1.bf16.msra.mxu0 0
        %1940 = vmatprep.subr.bf16.mxu0 0
        %1941 = vmatpush1.bf16.msra.mxu0 0
        %1942 = vmatprep.subr.bf16.mxu0 0
        %1943 = vmatpush1.bf16.msra.mxu0 0
        %1944 = vmatprep.subr.bf16.mxu0 0
        %1945 = vmatpush1.bf16.msra.mxu0 0
        %1946 = vmatprep.mubr.bf16.mxu0 0
        %1947 = vmatmul.mubr.bf16.gmra.mrb[0].mxu0 %v801
        %v1948 = vpop.f32.mrb[0].mxu0
        %v1949 = vadd.f32 0.0, %v1948
        %v1950 = vpop.f32.mrb[0].mxu0
        %v1951 = vpop.f32.mrb[0].mxu0
        %v1952 = vpop.f32.mrb[0].mxu0
        %1953 = vdwg.mxu0
        %v1954 = vld [vmem:[%s687] sm:$0xf]
        %v1955 = vld [vmem:[%s687 + $0x4] sm:$0xf]
        %v1956 = vld [vmem:[%s687 + $0x8] sm:$0xf]
        %v1957 = vld [vmem:[%s687 + $0xc] sm:$0xf]
        %v1958 = vld [vmem:[%s687 + $0x10] sm:$0xf]
        %v1959 = vld [vmem:[%s687 + $0x14] sm:$0xf]
        %v1960 = vld [vmem:[%s687 + $0x18] sm:$0xf]
        %v1961 = vld [vmem:[%s687 + $0x1c] sm:$0xf]
        %v1962 = vld [vmem:[%s687 + $0x20] sm:$0xf]
        %v1963 = vld [vmem:[%s687 + $0x24] sm:$0xf]
        %v1964 = vld [vmem:[%s687 + $0x28] sm:$0xf]
        %v1965 = vld [vmem:[%s687 + $0x2c] sm:$0xf]
        %v1966 = vld [vmem:[%s687 + $0x30] sm:$0xf]
        %v1967 = vld [vmem:[%s687 + $0x34] sm:$0xf]
        %v1968 = vld [vmem:[%s687 + $0x38] sm:$0xf]
        %v1969 = vld [vmem:[%s687 + $0x3c] sm:$0xf]
        %v1970 = vld [vmem:[%s687 + $0x40] sm:$0xf]
        %v1971 = vld [vmem:[%s687 + $0x44] sm:$0xf]
        %v1972 = vld [vmem:[%s687 + $0x48] sm:$0xf]
        %v1973 = vld [vmem:[%s687 + $0x4c] sm:$0xf]
        %v1974 = vld [vmem:[%s687 + $0x50] sm:$0xf]
        %v1975 = vld [vmem:[%s687 + $0x54] sm:$0xf]
        %v1976 = vld [vmem:[%s687 + $0x58] sm:$0xf]
        %v1977 = vld [vmem:[%s687 + $0x5c] sm:$0xf]
        %v1978 = vld [vmem:[%s687 + $0x60] sm:$0xf]
        %v1979 = vld [vmem:[%s687 + $0x64] sm:$0xf]
        %v1980 = vld [vmem:[%s687 + $0x68] sm:$0xf]
        %v1981 = vld [vmem:[%s687 + $0x6c] sm:$0xf]
        %v1982 = vld [vmem:[%s687 + $0x70] sm:$0xf]
        %v1983 = vld [vmem:[%s687 + $0x74] sm:$0xf]
        %v1984 = vld [vmem:[%s687 + $0x78] sm:$0xf]
        %v1985 = vld [vmem:[%s687 + $0x7c] sm:$0xf]
        %v1986 = vld [vmem:[%s687 + $0x80] sm:$0xf]
        %v1987 = vld [vmem:[%s687 + $0x84] sm:$0xf]
        %v1988 = vld [vmem:[%s687 + $0x88] sm:$0xf]
        %v1989 = vld [vmem:[%s687 + $0x8c] sm:$0xf]
        %v1990 = vld [vmem:[%s687 + $0x90] sm:$0xf]
        %v1991 = vld [vmem:[%s687 + $0x94] sm:$0xf]
        %v1992 = vld [vmem:[%s687 + $0x98] sm:$0xf]
        %v1993 = vld [vmem:[%s687 + $0x9c] sm:$0xf]
        %v1994 = vld [vmem:[%s687 + $0xa0] sm:$0xf]
        %v1995 = vld [vmem:[%s687 + $0xa4] sm:$0xf]
        %v1996 = vld [vmem:[%s687 + $0xa8] sm:$0xf]
        %v1997 = vld [vmem:[%s687 + $0xac] sm:$0xf]
        %v1998 = vld [vmem:[%s687 + $0xb0] sm:$0xf]
        %v1999 = vld [vmem:[%s687 + $0xb4] sm:$0xf]
        %v2000 = vld [vmem:[%s687 + $0xb8] sm:$0xf]
        %v2001 = vld [vmem:[%s687 + $0xbc] sm:$0xf]
        %v2002 = vld [vmem:[%s687 + $0xc0] sm:$0xf]
        %v2003 = vld [vmem:[%s687 + $0xc4] sm:$0xf]
        %v2004 = vld [vmem:[%s687 + $0xc8] sm:$0xf]
        %v2005 = vld [vmem:[%s687 + $0xcc] sm:$0xf]
        %v2006 = vld [vmem:[%s687 + $0xd0] sm:$0xf]
        %v2007 = vld [vmem:[%s687 + $0xd4] sm:$0xf]
        %v2008 = vld [vmem:[%s687 + $0xd8] sm:$0xf]
        %v2009 = vld [vmem:[%s687 + $0xdc] sm:$0xf]
        %v2010 = vld [vmem:[%s687 + $0xe0] sm:$0xf]
        %v2011 = vld [vmem:[%s687 + $0xe4] sm:$0xf]
        %v2012 = vld [vmem:[%s687 + $0xe8] sm:$0xf]
        %v2013 = vld [vmem:[%s687 + $0xec] sm:$0xf]
        %v2014 = vld [vmem:[%s687 + $0xf0] sm:$0xf]
        %v2015 = vld [vmem:[%s687 + $0xf4] sm:$0xf]
        %v2016 = vld [vmem:[%s687 + $0xf8] sm:$0xf]
        %v2017 = vld [vmem:[%s687 + $0xfc] sm:$0xf]
        %v2034 = vunpack.c.l.b16 %v1954
        %v2035 = vunpack.c.l.b16 %v1955
        %v2036 = vunpack.c.l.b16 %v1956
        %v2037 = vunpack.c.l.b16 %v1957
        %v2038 = vunpack.c.l.b16 %v1958
        %v2039 = vunpack.c.l.b16 %v1959
        %v2040 = vunpack.c.l.b16 %v1960
        %v2041 = vunpack.c.l.b16 %v1961
        %v2042 = vunpack.c.l.b16 %v1962
        %v2043 = vunpack.c.l.b16 %v1963
        %v2044 = vunpack.c.l.b16 %v1964
        %v2045 = vunpack.c.l.b16 %v1965
        %v2046 = vunpack.c.l.b16 %v1966
        %v2047 = vunpack.c.l.b16 %v1967
        %v2048 = vunpack.c.l.b16 %v1968
        %v2049 = vunpack.c.l.b16 %v1969
        %v2050 = vpack.c.b16 %v2035, %v2034
        %v2051 = vpack.c.b16 %v2037, %v2036
        %v2052 = vpack.c.b16 %v2039, %v2038
        %v2053 = vpack.c.b16 %v2041, %v2040
        %v2054 = vpack.c.b16 %v2043, %v2042
        %v2055 = vpack.c.b16 %v2045, %v2044
        %v2056 = vpack.c.b16 %v2047, %v2046
        %v2057 = vpack.c.b16 %v2049, %v2048
        %2066 = vmatprep.subr.bf16.mxu0 0
        %2067 = vmatpush1.bf16.msra.mxu0 %v2050
        %2068 = vmatprep.subr.bf16.mxu0 0
        %2069 = vmatpush1.bf16.msra.mxu0 %v2051
        %2070 = vmatprep.subr.bf16.mxu0 0
        %2071 = vmatpush1.bf16.msra.mxu0 %v2052
        %2072 = vmatprep.subr.bf16.mxu0 0
        %2073 = vmatpush1.bf16.msra.mxu0 %v2053
        %2074 = vmatprep.subr.bf16.mxu0 0
        %2075 = vmatpush1.bf16.msra.mxu0 %v2054
        %2076 = vmatprep.subr.bf16.mxu0 0
        %2077 = vmatpush1.bf16.msra.mxu0 %v2055
        %2078 = vmatprep.subr.bf16.mxu0 0
        %2079 = vmatpush1.bf16.msra.mxu0 %v2056
        %2080 = vmatprep.subr.bf16.mxu0 0
        %2081 = vmatpush1.bf16.msra.mxu0 %v2057
        %2082 = vmatprep.subr.bf16.mxu0 0
        %2083 = vmatpush1.bf16.msra.mxu0 0
        %2084 = vmatprep.subr.bf16.mxu0 0
        %2085 = vmatpush1.bf16.msra.mxu0 0
        %2086 = vmatprep.subr.bf16.mxu0 0
        %2087 = vmatpush1.bf16.msra.mxu0 0
        %2088 = vmatprep.subr.bf16.mxu0 0
        %2089 = vmatpush1.bf16.msra.mxu0 0
        %2090 = vmatprep.subr.bf16.mxu0 0
        %2091 = vmatpush1.bf16.msra.mxu0 0
        %2092 = vmatprep.subr.bf16.mxu0 0
        %2093 = vmatpush1.bf16.msra.mxu0 0
        %2094 = vmatprep.subr.bf16.mxu0 0
        %2095 = vmatpush1.bf16.msra.mxu0 0
        %2096 = vmatprep.subr.bf16.mxu0 0
        %2097 = vmatpush1.bf16.msra.mxu0 0
        %2098 = vmatprep.mubr.bf16.mxu0 0
        %2099 = vmatmul.mubr.bf16.gmra.mrb[0].mxu0 %v800
        %v2100 = vpop.f32.mrb[0].mxu0
        %v2101 = vadd.f32 0.0, %v2100
        %v2102 = vpop.f32.mrb[0].mxu0
        %v2103 = vpop.f32.mrb[0].mxu0
        %v2104 = vpop.f32.mrb[0].mxu0
        %2105 = vdwg.mxu0
        %v2122 = vunpack.c.l.b16 %v1970
        %v2123 = vunpack.c.l.b16 %v1971
        %v2124 = vunpack.c.l.b16 %v1972
        %v2125 = vunpack.c.l.b16 %v1973
        %v2126 = vunpack.c.l.b16 %v1974
        %v2127 = vunpack.c.l.b16 %v1975
        %v2128 = vunpack.c.l.b16 %v1976
        %v2129 = vunpack.c.l.b16 %v1977
        %v2130 = vunpack.c.l.b16 %v1978
        %v2131 = vunpack.c.l.b16 %v1979
        %v2132 = vunpack.c.l.b16 %v1980
        %v2133 = vunpack.c.l.b16 %v1981
        %v2134 = vunpack.c.l.b16 %v1982
        %v2135 = vunpack.c.l.b16 %v1983
        %v2136 = vunpack.c.l.b16 %v1984
        %v2137 = vunpack.c.l.b16 %v1985
        %v2138 = vpack.c.b16 %v2123, %v2122
        %v2139 = vpack.c.b16 %v2125, %v2124
        %v2140 = vpack.c.b16 %v2127, %v2126
        %v2141 = vpack.c.b16 %v2129, %v2128
        %v2142 = vpack.c.b16 %v2131, %v2130
        %v2143 = vpack.c.b16 %v2133, %v2132
        %v2144 = vpack.c.b16 %v2135, %v2134
        %v2145 = vpack.c.b16 %v2137, %v2136
        %2154 = vmatprep.subr.bf16.mxu0 0
        %2155 = vmatpush1.bf16.msra.mxu0 %v2138
        %2156 = vmatprep.subr.bf16.mxu0 0
        %2157 = vmatpush1.bf16.msra.mxu0 %v2139
        %2158 = vmatprep.subr.bf16.mxu0 0
        %2159 = vmatpush1.bf16.msra.mxu0 %v2140
        %2160 = vmatprep.subr.bf16.mxu0 0
        %2161 = vmatpush1.bf16.msra.mxu0 %v2141
        %2162 = vmatprep.subr.bf16.mxu0 0
        %2163 = vmatpush1.bf16.msra.mxu0 %v2142
        %2164 = vmatprep.subr.bf16.mxu0 0
        %2165 = vmatpush1.bf16.msra.mxu0 %v2143
        %2166 = vmatprep.subr.bf16.mxu0 0
        %2167 = vmatpush1.bf16.msra.mxu0 %v2144
        %2168 = vmatprep.subr.bf16.mxu0 0
        %2169 = vmatpush1.bf16.msra.mxu0 %v2145
        %2170 = vmatprep.subr.bf16.mxu0 0
        %2171 = vmatpush1.bf16.msra.mxu0 0
        %2172 = vmatprep.subr.bf16.mxu0 0
        %2173 = vmatpush1.bf16.msra.mxu0 0
        %2174 = vmatprep.subr.bf16.mxu0 0
        %2175 = vmatpush1.bf16.msra.mxu0 0
        %2176 = vmatprep.subr.bf16.mxu0 0
        %2177 = vmatpush1.bf16.msra.mxu0 0
        %2178 = vmatprep.subr.bf16.mxu0 0
        %2179 = vmatpush1.bf16.msra.mxu0 0
        %2180 = vmatprep.subr.bf16.mxu0 0
        %2181 = vmatpush1.bf16.msra.mxu0 0
        %2182 = vmatprep.subr.bf16.mxu0 0
        %2183 = vmatpush1.bf16.msra.mxu0 0
        %2184 = vmatprep.subr.bf16.mxu0 0
        %2185 = vmatpush1.bf16.msra.mxu0 0
        %2186 = vmatprep.mubr.bf16.mxu0 0
        %2187 = vmatmul.mubr.bf16.gmra.mrb[0].mxu0 %v800
        %v2188 = vpop.f32.mrb[0].mxu0
        %v2189 = vadd.f32 0.0, %v2188
        %v2190 = vpop.f32.mrb[0].mxu0
        %v2191 = vpop.f32.mrb[0].mxu0
        %v2192 = vpop.f32.mrb[0].mxu0
        %2193 = vdwg.mxu0
        %v2210 = vunpack.c.l.b16 %v1986
        %v2211 = vunpack.c.l.b16 %v1987
        %v2212 = vunpack.c.l.b16 %v1988
        %v2213 = vunpack.c.l.b16 %v1989
        %v2214 = vunpack.c.l.b16 %v1990
        %v2215 = vunpack.c.l.b16 %v1991
        %v2216 = vunpack.c.l.b16 %v1992
        %v2217 = vunpack.c.l.b16 %v1993
        %v2218 = vunpack.c.l.b16 %v1994
        %v2219 = vunpack.c.l.b16 %v1995
        %v2220 = vunpack.c.l.b16 %v1996
        %v2221 = vunpack.c.l.b16 %v1997
        %v2222 = vunpack.c.l.b16 %v1998
        %v2223 = vunpack.c.l.b16 %v1999
        %v2224 = vunpack.c.l.b16 %v2000
        %v2225 = vunpack.c.l.b16 %v2001
        %v2226 = vpack.c.b16 %v2211, %v2210
        %v2227 = vpack.c.b16 %v2213, %v2212
        %v2228 = vpack.c.b16 %v2215, %v2214
        %v2229 = vpack.c.b16 %v2217, %v2216
        %v2230 = vpack.c.b16 %v2219, %v2218
        %v2231 = vpack.c.b16 %v2221, %v2220
        %v2232 = vpack.c.b16 %v2223, %v2222
        %v2233 = vpack.c.b16 %v2225, %v2224
        %2242 = vmatprep.subr.bf16.mxu0 0
        %2243 = vmatpush1.bf16.msra.mxu0 %v2226
        %2244 = vmatprep.subr.bf16.mxu0 0
        %2245 = vmatpush1.bf16.msra.mxu0 %v2227
        %2246 = vmatprep.subr.bf16.mxu0 0
        %2247 = vmatpush1.bf16.msra.mxu0 %v2228
        %2248 = vmatprep.subr.bf16.mxu0 0
        %2249 = vmatpush1.bf16.msra.mxu0 %v2229
        %2250 = vmatprep.subr.bf16.mxu0 0
        %2251 = vmatpush1.bf16.msra.mxu0 %v2230
        %2252 = vmatprep.subr.bf16.mxu0 0
        %2253 = vmatpush1.bf16.msra.mxu0 %v2231
        %2254 = vmatprep.subr.bf16.mxu0 0
        %2255 = vmatpush1.bf16.msra.mxu0 %v2232
        %2256 = vmatprep.subr.bf16.mxu0 0
        %2257 = vmatpush1.bf16.msra.mxu0 %v2233
        %2258 = vmatprep.subr.bf16.mxu0 0
        %2259 = vmatpush1.bf16.msra.mxu0 0
        %2260 = vmatprep.subr.bf16.mxu0 0
        %2261 = vmatpush1.bf16.msra.mxu0 0
        %2262 = vmatprep.subr.bf16.mxu0 0
        %2263 = vmatpush1.bf16.msra.mxu0 0
        %2264 = vmatprep.subr.bf16.mxu0 0
        %2265 = vmatpush1.bf16.msra.mxu0 0
        %2266 = vmatprep.subr.bf16.mxu0 0
        %2267 = vmatpush1.bf16.msra.mxu0 0
        %2268 = vmatprep.subr.bf16.mxu0 0
        %2269 = vmatpush1.bf16.msra.mxu0 0
        %2270 = vmatprep.subr.bf16.mxu0 0
        %2271 = vmatpush1.bf16.msra.mxu0 0
        %2272 = vmatprep.subr.bf16.mxu0 0
        %2273 = vmatpush1.bf16.msra.mxu0 0
        %2274 = vmatprep.mubr.bf16.mxu0 0
        %2275 = vmatmul.mubr.bf16.gmra.mrb[0].mxu0 %v800
        %v2276 = vpop.f32.mrb[0].mxu0
        %v2277 = vadd.f32 0.0, %v2276
        %v2278 = vpop.f32.mrb[0].mxu0
        %v2279 = vpop.f32.mrb[0].mxu0
        %v2280 = vpop.f32.mrb[0].mxu0
        %2281 = vdwg.mxu0
        %v2298 = vunpack.c.l.b16 %v2002
        %v2299 = vunpack.c.l.b16 %v2003
        %v2300 = vunpack.c.l.b16 %v2004
        %v2301 = vunpack.c.l.b16 %v2005
        %v2302 = vunpack.c.l.b16 %v2006
        %v2303 = vunpack.c.l.b16 %v2007
        %v2304 = vunpack.c.l.b16 %v2008
        %v2305 = vunpack.c.l.b16 %v2009
        %v2306 = vunpack.c.l.b16 %v2010
        %v2307 = vunpack.c.l.b16 %v2011
        %v2308 = vunpack.c.l.b16 %v2012
        %v2309 = vunpack.c.l.b16 %v2013
        %v2310 = vunpack.c.l.b16 %v2014
        %v2311 = vunpack.c.l.b16 %v2015
        %v2312 = vunpack.c.l.b16 %v2016
        %v2313 = vunpack.c.l.b16 %v2017
        %v2314 = vpack.c.b16 %v2299, %v2298
        %v2315 = vpack.c.b16 %v2301, %v2300
        %v2316 = vpack.c.b16 %v2303, %v2302
        %v2317 = vpack.c.b16 %v2305, %v2304
        %v2318 = vpack.c.b16 %v2307, %v2306
        %v2319 = vpack.c.b16 %v2309, %v2308
        %v2320 = vpack.c.b16 %v2311, %v2310
        %v2321 = vpack.c.b16 %v2313, %v2312
        %2330 = vmatprep.subr.bf16.mxu0 0
        %2331 = vmatpush1.bf16.msra.mxu0 %v2314
        %2332 = vmatprep.subr.bf16.mxu0 0
        %2333 = vmatpush1.bf16.msra.mxu0 %v2315
        %2334 = vmatprep.subr.bf16.mxu0 0
        %2335 = vmatpush1.bf16.msra.mxu0 %v2316
        %2336 = vmatprep.subr.bf16.mxu0 0
        %2337 = vmatpush1.bf16.msra.mxu0 %v2317
        %2338 = vmatprep.subr.bf16.mxu0 0
        %2339 = vmatpush1.bf16.msra.mxu0 %v2318
        %2340 = vmatprep.subr.bf16.mxu0 0
        %2341 = vmatpush1.bf16.msra.mxu0 %v2319
        %2342 = vmatprep.subr.bf16.mxu0 0
        %2343 = vmatpush1.bf16.msra.mxu0 %v2320
        %2344 = vmatprep.subr.bf16.mxu0 0
        %2345 = vmatpush1.bf16.msra.mxu0 %v2321
        %2346 = vmatprep.subr.bf16.mxu0 0
        %2347 = vmatpush1.bf16.msra.mxu0 0
        %2348 = vmatprep.subr.bf16.mxu0 0
        %2349 = vmatpush1.bf16.msra.mxu0 0
        %2350 = vmatprep.subr.bf16.mxu0 0
        %2351 = vmatpush1.bf16.msra.mxu0 0
        %2352 = vmatprep.subr.bf16.mxu0 0
        %2353 = vmatpush1.bf16.msra.mxu0 0
        %2354 = vmatprep.subr.bf16.mxu0 0
        %2355 = vmatpush1.bf16.msra.mxu0 0
        %2356 = vmatprep.subr.bf16.mxu0 0
        %2357 = vmatpush1.bf16.msra.mxu0 0
        %2358 = vmatprep.subr.bf16.mxu0 0
        %2359 = vmatpush1.bf16.msra.mxu0 0
        %2360 = vmatprep.subr.bf16.mxu0 0
        %2361 = vmatpush1.bf16.msra.mxu0 0
        %2362 = vmatprep.mubr.bf16.mxu0 0
        %2363 = vmatmul.mubr.bf16.gmra.mrb[0].mxu0 %v800
        %v2364 = vpop.f32.mrb[0].mxu0
        %v2365 = vadd.f32 0.0, %v2364
        %v2366 = vpop.f32.mrb[0].mxu0
        %v2367 = vpop.f32.mrb[0].mxu0
        %v2368 = vpop.f32.mrb[0].mxu0
        %2369 = vdwg.mxu0
        %2370 = vmatprep.subr.bf16.mxu0 0
        %2371 = vmatpush1.bf16.msra.mxu0 %v2050
        %2372 = vmatprep.subr.bf16.mxu0 0
        %2373 = vmatpush1.bf16.msra.mxu0 %v2051
        %2374 = vmatprep.subr.bf16.mxu0 0
        %2375 = vmatpush1.bf16.msra.mxu0 %v2052
        %2376 = vmatprep.subr.bf16.mxu0 0
        %2377 = vmatpush1.bf16.msra.mxu0 %v2053
        %2378 = vmatprep.subr.bf16.mxu0 0
        %2379 = vmatpush1.bf16.msra.mxu0 %v2054
        %2380 = vmatprep.subr.bf16.mxu0 0
        %2381 = vmatpush1.bf16.msra.mxu0 %v2055
        %2382 = vmatprep.subr.bf16.mxu0 0
        %2383 = vmatpush1.bf16.msra.mxu0 %v2056
        %2384 = vmatprep.subr.bf16.mxu0 0
        %2385 = vmatpush1.bf16.msra.mxu0 %v2057
        %2386 = vmatprep.subr.bf16.mxu0 0
        %2387 = vmatpush1.bf16.msra.mxu0 0
        %2388 = vmatprep.subr.bf16.mxu0 0
        %2389 = vmatpush1.bf16.msra.mxu0 0
        %2390 = vmatprep.subr.bf16.mxu0 0
        %2391 = vmatpush1.bf16.msra.mxu0 0
        %2392 = vmatprep.subr.bf16.mxu0 0
        %2393 = vmatpush1.bf16.msra.mxu0 0
        %2394 = vmatprep.subr.bf16.mxu0 0
        %2395 = vmatpush1.bf16.msra.mxu0 0
        %2396 = vmatprep.subr.bf16.mxu0 0
        %2397 = vmatpush1.bf16.msra.mxu0 0
        %2398 = vmatprep.subr.bf16.mxu0 0
        %2399 = vmatpush1.bf16.msra.mxu0 0
        %2400 = vmatprep.subr.bf16.mxu0 0
        %2401 = vmatpush1.bf16.msra.mxu0 0
        %2402 = vmatprep.mubr.bf16.mxu0 0
        %2403 = vmatmul.mubr.bf16.gmra.mrb[0].mxu0 %v801
        %v2404 = vpop.f32.mrb[0].mxu0
        %v2405 = vadd.f32 0.0, %v2404
        %v2406 = vpop.f32.mrb[0].mxu0
        %v2407 = vpop.f32.mrb[0].mxu0
        %v2408 = vpop.f32.mrb[0].mxu0
        %2409 = vdwg.mxu0
        %2410 = vmatprep.subr.bf16.mxu0 0
        %2411 = vmatpush1.bf16.msra.mxu0 %v2138
        %2412 = vmatprep.subr.bf16.mxu0 0
        %2413 = vmatpush1.bf16.msra.mxu0 %v2139
        %2414 = vmatprep.subr.bf16.mxu0 0
        %2415 = vmatpush1.bf16.msra.mxu0 %v2140
        %2416 = vmatprep.subr.bf16.mxu0 0
        %2417 = vmatpush1.bf16.msra.mxu0 %v2141
        %2418 = vmatprep.subr.bf16.mxu0 0
        %2419 = vmatpush1.bf16.msra.mxu0 %v2142
        %2420 = vmatprep.subr.bf16.mxu0 0
        %2421 = vmatpush1.bf16.msra.mxu0 %v2143
        %2422 = vmatprep.subr.bf16.mxu0 0
        %2423 = vmatpush1.bf16.msra.mxu0 %v2144
        %2424 = vmatprep.subr.bf16.mxu0 0
        %2425 = vmatpush1.bf16.msra.mxu0 %v2145
        %2426 = vmatprep.subr.bf16.mxu0 0
        %2427 = vmatpush1.bf16.msra.mxu0 0
        %2428 = vmatprep.subr.bf16.mxu0 0
        %2429 = vmatpush1.bf16.msra.mxu0 0
        %2430 = vmatprep.subr.bf16.mxu0 0
        %2431 = vmatpush1.bf16.msra.mxu0 0
        %2432 = vmatprep.subr.bf16.mxu0 0
        %2433 = vmatpush1.bf16.msra.mxu0 0
        %2434 = vmatprep.subr.bf16.mxu0 0
        %2435 = vmatpush1.bf16.msra.mxu0 0
        %2436 = vmatprep.subr.bf16.mxu0 0
        %2437 = vmatpush1.bf16.msra.mxu0 0
        %2438 = vmatprep.subr.bf16.mxu0 0
        %2439 = vmatpush1.bf16.msra.mxu0 0
        %2440 = vmatprep.subr.bf16.mxu0 0
        %2441 = vmatpush1.bf16.msra.mxu0 0
        %2442 = vmatprep.mubr.bf16.mxu0 0
        %2443 = vmatmul.mubr.bf16.gmra.mrb[0].mxu0 %v801
        %v2444 = vpop.f32.mrb[0].mxu0
        %v2445 = vadd.f32 0.0, %v2444
        %v2446 = vpop.f32.mrb[0].mxu0
        %v2447 = vpop.f32.mrb[0].mxu0
        %v2448 = vpop.f32.mrb[0].mxu0
        %2449 = vdwg.mxu0
        %2450 = vmatprep.subr.bf16.mxu0 0
        %2451 = vmatpush1.bf16.msra.mxu0 %v2226
        %2452 = vmatprep.subr.bf16.mxu0 0
        %2453 = vmatpush1.bf16.msra.mxu0 %v2227
        %2454 = vmatprep.subr.bf16.mxu0 0
        %2455 = vmatpush1.bf16.msra.mxu0 %v2228
        %2456 = vmatprep.subr.bf16.mxu0 0
        %2457 = vmatpush1.bf16.msra.mxu0 %v2229
        %2458 = vmatprep.subr.bf16.mxu0 0
        %2459 = vmatpush1.bf16.msra.mxu0 %v2230
        %2460 = vmatprep.subr.bf16.mxu0 0
        %2461 = vmatpush1.bf16.msra.mxu0 %v2231
        %2462 = vmatprep.subr.bf16.mxu0 0
        %2463 = vmatpush1.bf16.msra.mxu0 %v2232
        %2464 = vmatprep.subr.bf16.mxu0 0
        %2465 = vmatpush1.bf16.msra.mxu0 %v2233
        %2466 = vmatprep.subr.bf16.mxu0 0
        %2467 = vmatpush1.bf16.msra.mxu0 0
        %2468 = vmatprep.subr.bf16.mxu0 0
        %2469 = vmatpush1.bf16.msra.mxu0 0
        %2470 = vmatprep.subr.bf16.mxu0 0
        %2471 = vmatpush1.bf16.msra.mxu0 0
        %2472 = vmatprep.subr.bf16.mxu0 0
        %2473 = vmatpush1.bf16.msra.mxu0 0
        %2474 = vmatprep.subr.bf16.mxu0 0
        %2475 = vmatpush1.bf16.msra.mxu0 0
        %2476 = vmatprep.subr.bf16.mxu0 0
        %2477 = vmatpush1.bf16.msra.mxu0 0
        %2478 = vmatprep.subr.bf16.mxu0 0
        %2479 = vmatpush1.bf16.msra.mxu0 0
        %2480 = vmatprep.subr.bf16.mxu0 0
        %2481 = vmatpush1.bf16.msra.mxu0 0
        %2482 = vmatprep.mubr.bf16.mxu0 0
        %2483 = vmatmul.mubr.bf16.gmra.mrb[0].mxu0 %v801
        %v2484 = vpop.f32.mrb[0].mxu0
        %v2485 = vadd.f32 0.0, %v2484
        %v2486 = vpop.f32.mrb[0].mxu0
        %v2487 = vpop.f32.mrb[0].mxu0
        %v2488 = vpop.f32.mrb[0].mxu0
        %2489 = vdwg.mxu0
        %2490 = vmatprep.subr.bf16.mxu0 0
        %2491 = vmatpush1.bf16.msra.mxu0 %v2314
        %2492 = vmatprep.subr.bf16.mxu0 0
        %2493 = vmatpush1.bf16.msra.mxu0 %v2315
        %2494 = vmatprep.subr.bf16.mxu0 0
        %2495 = vmatpush1.bf16.msra.mxu0 %v2316
        %2496 = vmatprep.subr.bf16.mxu0 0
        %2497 = vmatpush1.bf16.msra.mxu0 %v2317
        %2498 = vmatprep.subr.bf16.mxu0 0
        %2499 = vmatpush1.bf16.msra.mxu0 %v2318
        %2500 = vmatprep.subr.bf16.mxu0 0
        %2501 = vmatpush1.bf16.msra.mxu0 %v2319
        %2502 = vmatprep.subr.bf16.mxu0 0
        %2503 = vmatpush1.bf16.msra.mxu0 %v2320
        %2504 = vmatprep.subr.bf16.mxu0 0
        %2505 = vmatpush1.bf16.msra.mxu0 %v2321
        %2506 = vmatprep.subr.bf16.mxu0 0
        %2507 = vmatpush1.bf16.msra.mxu0 0
        %2508 = vmatprep.subr.bf16.mxu0 0
        %2509 = vmatpush1.bf16.msra.mxu0 0
        %2510 = vmatprep.subr.bf16.mxu0 0
        %2511 = vmatpush1.bf16.msra.mxu0 0
        %2512 = vmatprep.subr.bf16.mxu0 0
        %2513 = vmatpush1.bf16.msra.mxu0 0
        %2514 = vmatprep.subr.bf16.mxu0 0
        %2515 = vmatpush1.bf16.msra.mxu0 0
        %2516 = vmatprep.subr.bf16.mxu0 0
        %2517 = vmatpush1.bf16.msra.mxu0 0
        %2518 = vmatprep.subr.bf16.mxu0 0
        %2519 = vmatpush1.bf16.msra.mxu0 0
        %2520 = vmatprep.subr.bf16.mxu0 0
        %2521 = vmatpush1.bf16.msra.mxu0 0
        %2522 = vmatprep.mubr.bf16.mxu0 0
        %2523 = vmatmul.mubr.bf16.gmra.mrb[0].mxu0 %v801
        %v2524 = vpop.f32.mrb[0].mxu0
        %v2525 = vadd.f32 0.0, %v2524
        %v2526 = vpop.f32.mrb[0].mxu0
        %v2527 = vpop.f32.mrb[0].mxu0
        %v2528 = vpop.f32.mrb[0].mxu0
        %2529 = vdwg.mxu0
        %v2530 = vpack.c.bf16 %v949, %v949
        %v2531 = vpack.c.bf16 %v1037, %v1037
        %v2532 = vpack.c.bf16 %v1125, %v1125
        %v2533 = vpack.c.bf16 %v1213, %v1213
        %v2534 = vpack.c.bf16 %v1253, %v1253
        %v2535 = vpack.c.bf16 %v1293, %v1293
        %v2536 = vpack.c.bf16 %v1333, %v1333
        %v2537 = vpack.c.bf16 %v1373, %v1373
        %v2538 = vpack.c.bf16 %v1525, %v1525
        %v2539 = vpack.c.bf16 %v1613, %v1613
        %v2540 = vpack.c.bf16 %v1701, %v1701
        %v2541 = vpack.c.bf16 %v1789, %v1789
        %v2542 = vpack.c.bf16 %v1829, %v1829
        %v2543 = vpack.c.bf16 %v1869, %v1869
        %v2544 = vpack.c.bf16 %v1909, %v1909
        %v2545 = vpack.c.bf16 %v1949, %v1949
        %vm2546 = vcmask 261120
        %v2548 = vsel %vm2546, %v2530, 0
        %v2551 = vsel %vm2546, %v2538, 0
        %2553 = vmatprep.subr.bf16.mxu0 0
        %2554 = vmatpush1.bf16.xpose.msra.mxu0 %v2551
        %2555 = vmatprep.subr.bf16.mxu0 0
        %2556 = vmatpush1.bf16.xpose.msra.mxu0 0
        %2557 = vmatprep.subr.bf16.mxu0 0
        %2558 = vmatpush1.bf16.xpose.msra.mxu0 0
        %2559 = vmatprep.subr.bf16.mxu0 0
        %2560 = vmatpush1.bf16.xpose.msra.mxu0 0
        %2561 = vmatprep.subr.bf16.mxu0 0
        %2562 = vmatpush1.bf16.xpose.msra.mxu0 0
        %2563 = vmatprep.subr.bf16.mxu0 0
        %2564 = vmatpush1.bf16.xpose.msra.mxu0 0
        %2565 = vmatprep.subr.bf16.mxu0 0
        %2566 = vmatpush1.bf16.xpose.msra.mxu0 0
        %2567 = vmatprep.subr.bf16.mxu0 0
        %2568 = vmatpush1.bf16.xpose.msra.mxu0 0
        %2569 = vmatprep.subr.bf16.mxu0 0
        %2570 = vmatpush1.bf16.xpose.msra.mxu0 0
        %2571 = vmatprep.subr.bf16.mxu0 0
        %2572 = vmatpush1.bf16.xpose.msra.mxu0 0
        %2573 = vmatprep.subr.bf16.mxu0 0
        %2574 = vmatpush1.bf16.xpose.msra.mxu0 0
        %2575 = vmatprep.subr.bf16.mxu0 0
        %2576 = vmatpush1.bf16.xpose.msra.mxu0 0
        %2577 = vmatprep.subr.bf16.mxu0 0
        %2578 = vmatpush1.bf16.xpose.msra.mxu0 0
        %2579 = vmatprep.subr.bf16.mxu0 0
        %2580 = vmatpush1.bf16.xpose.msra.mxu0 0
        %2581 = vmatprep.subr.bf16.mxu0 0
        %2582 = vmatpush1.bf16.xpose.msra.mxu0 0
        %2583 = vmatprep.subr.bf16.mxu0 0
        %2584 = vmatpush1.bf16.xpose.msra.mxu0 0
        %2585 = vmatprep.mubr.bf16.mxu0 0
        %2586 = vmatmul.mubr.bf16.gmra.mrb[0].mxu0 %v2548
        %v2587 = vpop.f32.mrb[0].mxu0
        %v2588 = vadd.f32 0.0, %v2587
        %v2589 = vpop.f32.mrb[0].mxu0
        %v2590 = vpop.f32.mrb[0].mxu0
        %v2591 = vpop.f32.mrb[0].mxu0
        %2592 = vdwg.mxu0
        %v2594 = vsel %vm2546, %v2531, 0
        %v2597 = vsel %vm2546, %v2539, 0
        %2599 = vmatprep.subr.bf16.mxu0 0
        %2600 = vmatpush1.bf16.xpose.msra.mxu0 %v2597
        %2601 = vmatprep.subr.bf16.mxu0 0
        %2602 = vmatpush1.bf16.xpose.msra.mxu0 0
        %2603 = vmatprep.subr.bf16.mxu0 0
        %2604 = vmatpush1.bf16.xpose.msra.mxu0 0
        %2605 = vmatprep.subr.bf16.mxu0 0
        %2606 = vmatpush1.bf16.xpose.msra.mxu0 0
        %2607 = vmatprep.subr.bf16.mxu0 0
        %2608 = vmatpush1.bf16.xpose.msra.mxu0 0
        %2609 = vmatprep.subr.bf16.mxu0 0
        %2610 = vmatpush1.bf16.xpose.msra.mxu0 0
        %2611 = vmatprep.subr.bf16.mxu0 0
        %2612 = vmatpush1.bf16.xpose.msra.mxu0 0
        %2613 = vmatprep.subr.bf16.mxu0 0
        %2614 = vmatpush1.bf16.xpose.msra.mxu0 0
        %2615 = vmatprep.subr.bf16.mxu0 0
        %2616 = vmatpush1.bf16.xpose.msra.mxu0 0
        %2617 = vmatprep.subr.bf16.mxu0 0
        %2618 = vmatpush1.bf16.xpose.msra.mxu0 0
        %2619 = vmatprep.subr.bf16.mxu0 0
        %2620 = vmatpush1.bf16.xpose.msra.mxu0 0
        %2621 = vmatprep.subr.bf16.mxu0 0
        %2622 = vmatpush1.bf16.xpose.msra.mxu0 0
        %2623 = vmatprep.subr.bf16.mxu0 0
        %2624 = vmatpush1.bf16.xpose.msra.mxu0 0
        %2625 = vmatprep.subr.bf16.mxu0 0
        %2626 = vmatpush1.bf16.xpose.msra.mxu0 0
        %2627 = vmatprep.subr.bf16.mxu0 0
        %2628 = vmatpush1.bf16.xpose.msra.mxu0 0
        %2629 = vmatprep.subr.bf16.mxu0 0
        %2630 = vmatpush1.bf16.xpose.msra.mxu0 0
        %2631 = vmatprep.mubr.bf16.mxu0 0
        %2632 = vmatmul.mubr.bf16.gmra.mrb[0].mxu0 %v2594
        %v2633 = vpop.f32.mrb[0].mxu0
        %v2634 = vadd.f32 0.0, %v2633
        %v2635 = vpop.f32.mrb[0].mxu0
        %v2636 = vpop.f32.mrb[0].mxu0
        %v2637 = vpop.f32.mrb[0].mxu0
        %2638 = vdwg.mxu0
        %v2640 = vsel %vm2546, %v2532, 0
        %v2643 = vsel %vm2546, %v2540, 0
        %2645 = vmatprep.subr.bf16.mxu0 0
        %2646 = vmatpush1.bf16.xpose.msra.mxu0 %v2643
        %2647 = vmatprep.subr.bf16.mxu0 0
        %2648 = vmatpush1.bf16.xpose.msra.mxu0 0
        %2649 = vmatprep.subr.bf16.mxu0 0
        %2650 = vmatpush1.bf16.xpose.msra.mxu0 0
        %2651 = vmatprep.subr.bf16.mxu0 0
        %2652 = vmatpush1.bf16.xpose.msra.mxu0 0
        %2653 = vmatprep.subr.bf16.mxu0 0
        %2654 = vmatpush1.bf16.xpose.msra.mxu0 0
        %2655 = vmatprep.subr.bf16.mxu0 0
        %2656 = vmatpush1.bf16.xpose.msra.mxu0 0
        %2657 = vmatprep.subr.bf16.mxu0 0
        %2658 = vmatpush1.bf16.xpose.msra.mxu0 0
        %2659 = vmatprep.subr.bf16.mxu0 0
        %2660 = vmatpush1.bf16.xpose.msra.mxu0 0
        %2661 = vmatprep.subr.bf16.mxu0 0
        %2662 = vmatpush1.bf16.xpose.msra.mxu0 0
        %2663 = vmatprep.subr.bf16.mxu0 0
        %2664 = vmatpush1.bf16.xpose.msra.mxu0 0
        %2665 = vmatprep.subr.bf16.mxu0 0
        %2666 = vmatpush1.bf16.xpose.msra.mxu0 0
        %2667 = vmatprep.subr.bf16.mxu0 0
        %2668 = vmatpush1.bf16.xpose.msra.mxu0 0
        %2669 = vmatprep.subr.bf16.mxu0 0
        %2670 = vmatpush1.bf16.xpose.msra.mxu0 0
        %2671 = vmatprep.subr.bf16.mxu0 0
        %2672 = vmatpush1.bf16.xpose.msra.mxu0 0
        %2673 = vmatprep.subr.bf16.mxu0 0
        %2674 = vmatpush1.bf16.xpose.msra.mxu0 0
        %2675 = vmatprep.subr.bf16.mxu0 0
        %2676 = vmatpush1.bf16.xpose.msra.mxu0 0
        %2677 = vmatprep.mubr.bf16.mxu0 0
        %2678 = vmatmul.mubr.bf16.gmra.mrb[0].mxu0 %v2640
        %v2679 = vpop.f32.mrb[0].mxu0
        %v2680 = vadd.f32 0.0, %v2679
        %v2681 = vpop.f32.mrb[0].mxu0
        %v2682 = vpop.f32.mrb[0].mxu0
        %v2683 = vpop.f32.mrb[0].mxu0
        %2684 = vdwg.mxu0
        %v2686 = vsel %vm2546, %v2533, 0
        %v2689 = vsel %vm2546, %v2541, 0
        %2691 = vmatprep.subr.bf16.mxu0 0
        %2692 = vmatpush1.bf16.xpose.msra.mxu0 %v2689
        %2693 = vmatprep.subr.bf16.mxu0 0
        %2694 = vmatpush1.bf16.xpose.msra.mxu0 0
        %2695 = vmatprep.subr.bf16.mxu0 0
        %2696 = vmatpush1.bf16.xpose.msra.mxu0 0
        %2697 = vmatprep.subr.bf16.mxu0 0
        %2698 = vmatpush1.bf16.xpose.msra.mxu0 0
        %2699 = vmatprep.subr.bf16.mxu0 0
        %2700 = vmatpush1.bf16.xpose.msra.mxu0 0
        %2701 = vmatprep.subr.bf16.mxu0 0
        %2702 = vmatpush1.bf16.xpose.msra.mxu0 0
        %2703 = vmatprep.subr.bf16.mxu0 0
        %2704 = vmatpush1.bf16.xpose.msra.mxu0 0
        %2705 = vmatprep.subr.bf16.mxu0 0
        %2706 = vmatpush1.bf16.xpose.msra.mxu0 0
        %2707 = vmatprep.subr.bf16.mxu0 0
        %2708 = vmatpush1.bf16.xpose.msra.mxu0 0
        %2709 = vmatprep.subr.bf16.mxu0 0
        %2710 = vmatpush1.bf16.xpose.msra.mxu0 0
        %2711 = vmatprep.subr.bf16.mxu0 0
        %2712 = vmatpush1.bf16.xpose.msra.mxu0 0
        %2713 = vmatprep.subr.bf16.mxu0 0
        %2714 = vmatpush1.bf16.xpose.msra.mxu0 0
        %2715 = vmatprep.subr.bf16.mxu0 0
        %2716 = vmatpush1.bf16.xpose.msra.mxu0 0
        %2717 = vmatprep.subr.bf16.mxu0 0
        %2718 = vmatpush1.bf16.xpose.msra.mxu0 0
        %2719 = vmatprep.subr.bf16.mxu0 0
        %2720 = vmatpush1.bf16.xpose.msra.mxu0 0
        %2721 = vmatprep.subr.bf16.mxu0 0
        %2722 = vmatpush1.bf16.xpose.msra.mxu0 0
        %2723 = vmatprep.mubr.bf16.mxu0 0
        %2724 = vmatmul.mubr.bf16.gmra.mrb[0].mxu0 %v2686
        %v2725 = vpop.f32.mrb[0].mxu0
        %v2726 = vadd.f32 0.0, %v2725
        %v2727 = vpop.f32.mrb[0].mxu0
        %v2728 = vpop.f32.mrb[0].mxu0
        %v2729 = vpop.f32.mrb[0].mxu0
        %2730 = vdwg.mxu0
        %v2732 = vsel %vm2546, %v2534, 0
        %v2735 = vsel %vm2546, %v2542, 0
        %2737 = vmatprep.subr.bf16.mxu0 0
        %2738 = vmatpush1.bf16.xpose.msra.mxu0 %v2735
        %2739 = vmatprep.subr.bf16.mxu0 0
        %2740 = vmatpush1.bf16.xpose.msra.mxu0 0
        %2741 = vmatprep.subr.bf16.mxu0 0
        %2742 = vmatpush1.bf16.xpose.msra.mxu0 0
        %2743 = vmatprep.subr.bf16.mxu0 0
        %2744 = vmatpush1.bf16.xpose.msra.mxu0 0
        %2745 = vmatprep.subr.bf16.mxu0 0
        %2746 = vmatpush1.bf16.xpose.msra.mxu0 0
        %2747 = vmatprep.subr.bf16.mxu0 0
        %2748 = vmatpush1.bf16.xpose.msra.mxu0 0
        %2749 = vmatprep.subr.bf16.mxu0 0
        %2750 = vmatpush1.bf16.xpose.msra.mxu0 0
        %2751 = vmatprep.subr.bf16.mxu0 0
        %2752 = vmatpush1.bf16.xpose.msra.mxu0 0
        %2753 = vmatprep.subr.bf16.mxu0 0
        %2754 = vmatpush1.bf16.xpose.msra.mxu0 0
        %2755 = vmatprep.subr.bf16.mxu0 0
        %2756 = vmatpush1.bf16.xpose.msra.mxu0 0
        %2757 = vmatprep.subr.bf16.mxu0 0
        %2758 = vmatpush1.bf16.xpose.msra.mxu0 0
        %2759 = vmatprep.subr.bf16.mxu0 0
        %2760 = vmatpush1.bf16.xpose.msra.mxu0 0
        %2761 = vmatprep.subr.bf16.mxu0 0
        %2762 = vmatpush1.bf16.xpose.msra.mxu0 0
        %2763 = vmatprep.subr.bf16.mxu0 0
        %2764 = vmatpush1.bf16.xpose.msra.mxu0 0
        %2765 = vmatprep.subr.bf16.mxu0 0
        %2766 = vmatpush1.bf16.xpose.msra.mxu0 0
        %2767 = vmatprep.subr.bf16.mxu0 0
        %2768 = vmatpush1.bf16.xpose.msra.mxu0 0
        %2769 = vmatprep.mubr.bf16.mxu0 0
        %2770 = vmatmul.mubr.bf16.gmra.mrb[0].mxu0 %v2732
        %v2771 = vpop.f32.mrb[0].mxu0
        %v2772 = vadd.f32 0.0, %v2771
        %v2773 = vpop.f32.mrb[0].mxu0
        %v2774 = vpop.f32.mrb[0].mxu0
        %v2775 = vpop.f32.mrb[0].mxu0
        %2776 = vdwg.mxu0
        %v2778 = vsel %vm2546, %v2535, 0
        %v2781 = vsel %vm2546, %v2543, 0
        %2783 = vmatprep.subr.bf16.mxu0 0
        %2784 = vmatpush1.bf16.xpose.msra.mxu0 %v2781
        %2785 = vmatprep.subr.bf16.mxu0 0
        %2786 = vmatpush1.bf16.xpose.msra.mxu0 0
        %2787 = vmatprep.subr.bf16.mxu0 0
        %2788 = vmatpush1.bf16.xpose.msra.mxu0 0
        %2789 = vmatprep.subr.bf16.mxu0 0
        %2790 = vmatpush1.bf16.xpose.msra.mxu0 0
        %2791 = vmatprep.subr.bf16.mxu0 0
        %2792 = vmatpush1.bf16.xpose.msra.mxu0 0
        %2793 = vmatprep.subr.bf16.mxu0 0
        %2794 = vmatpush1.bf16.xpose.msra.mxu0 0
        %2795 = vmatprep.subr.bf16.mxu0 0
        %2796 = vmatpush1.bf16.xpose.msra.mxu0 0
        %2797 = vmatprep.subr.bf16.mxu0 0
        %2798 = vmatpush1.bf16.xpose.msra.mxu0 0
        %2799 = vmatprep.subr.bf16.mxu0 0
        %2800 = vmatpush1.bf16.xpose.msra.mxu0 0
        %2801 = vmatprep.subr.bf16.mxu0 0
        %2802 = vmatpush1.bf16.xpose.msra.mxu0 0
        %2803 = vmatprep.subr.bf16.mxu0 0
        %2804 = vmatpush1.bf16.xpose.msra.mxu0 0
        %2805 = vmatprep.subr.bf16.mxu0 0
        %2806 = vmatpush1.bf16.xpose.msra.mxu0 0
        %2807 = vmatprep.subr.bf16.mxu0 0
        %2808 = vmatpush1.bf16.xpose.msra.mxu0 0
        %2809 = vmatprep.subr.bf16.mxu0 0
        %2810 = vmatpush1.bf16.xpose.msra.mxu0 0
        %2811 = vmatprep.subr.bf16.mxu0 0
        %2812 = vmatpush1.bf16.xpose.msra.mxu0 0
        %2813 = vmatprep.subr.bf16.mxu0 0
        %2814 = vmatpush1.bf16.xpose.msra.mxu0 0
        %2815 = vmatprep.mubr.bf16.mxu0 0
        %2816 = vmatmul.mubr.bf16.gmra.mrb[0].mxu0 %v2778
        %v2817 = vpop.f32.mrb[0].mxu0
        %v2818 = vadd.f32 0.0, %v2817
        %v2819 = vpop.f32.mrb[0].mxu0
        %v2820 = vpop.f32.mrb[0].mxu0
        %v2821 = vpop.f32.mrb[0].mxu0
        %2822 = vdwg.mxu0
        %v2824 = vsel %vm2546, %v2536, 0
        %v2827 = vsel %vm2546, %v2544, 0
        %2829 = vmatprep.subr.bf16.mxu0 0
        %2830 = vmatpush1.bf16.xpose.msra.mxu0 %v2827
        %2831 = vmatprep.subr.bf16.mxu0 0
        %2832 = vmatpush1.bf16.xpose.msra.mxu0 0
        %2833 = vmatprep.subr.bf16.mxu0 0
        %2834 = vmatpush1.bf16.xpose.msra.mxu0 0
        %2835 = vmatprep.subr.bf16.mxu0 0
        %2836 = vmatpush1.bf16.xpose.msra.mxu0 0
        %2837 = vmatprep.subr.bf16.mxu0 0
        %2838 = vmatpush1.bf16.xpose.msra.mxu0 0
        %2839 = vmatprep.subr.bf16.mxu0 0
        %2840 = vmatpush1.bf16.xpose.msra.mxu0 0
        %2841 = vmatprep.subr.bf16.mxu0 0
        %2842 = vmatpush1.bf16.xpose.msra.mxu0 0
        %2843 = vmatprep.subr.bf16.mxu0 0
        %2844 = vmatpush1.bf16.xpose.msra.mxu0 0
        %2845 = vmatprep.subr.bf16.mxu0 0
        %2846 = vmatpush1.bf16.xpose.msra.mxu0 0
        %2847 = vmatprep.subr.bf16.mxu0 0
        %2848 = vmatpush1.bf16.xpose.msra.mxu0 0
        %2849 = vmatprep.subr.bf16.mxu0 0
        %2850 = vmatpush1.bf16.xpose.msra.mxu0 0
        %2851 = vmatprep.subr.bf16.mxu0 0
        %2852 = vmatpush1.bf16.xpose.msra.mxu0 0
        %2853 = vmatprep.subr.bf16.mxu0 0
        %2854 = vmatpush1.bf16.xpose.msra.mxu0 0
        %2855 = vmatprep.subr.bf16.mxu0 0
        %2856 = vmatpush1.bf16.xpose.msra.mxu0 0
        %2857 = vmatprep.subr.bf16.mxu0 0
        %2858 = vmatpush1.bf16.xpose.msra.mxu0 0
        %2859 = vmatprep.subr.bf16.mxu0 0
        %2860 = vmatpush1.bf16.xpose.msra.mxu0 0
        %2861 = vmatprep.mubr.bf16.mxu0 0
        %2862 = vmatmul.mubr.bf16.gmra.mrb[0].mxu0 %v2824
        %v2863 = vpop.f32.mrb[0].mxu0
        %v2864 = vadd.f32 0.0, %v2863
        %v2865 = vpop.f32.mrb[0].mxu0
        %v2866 = vpop.f32.mrb[0].mxu0
        %v2867 = vpop.f32.mrb[0].mxu0
        %2868 = vdwg.mxu0
        %v2870 = vsel %vm2546, %v2537, 0
        %v2873 = vsel %vm2546, %v2545, 0
        %2875 = vmatprep.subr.bf16.mxu0 0
        %2876 = vmatpush1.bf16.xpose.msra.mxu0 %v2873
        %2877 = vmatprep.subr.bf16.mxu0 0
        %2878 = vmatpush1.bf16.xpose.msra.mxu0 0
        %2879 = vmatprep.subr.bf16.mxu0 0
        %2880 = vmatpush1.bf16.xpose.msra.mxu0 0
        %2881 = vmatprep.subr.bf16.mxu0 0
        %2882 = vmatpush1.bf16.xpose.msra.mxu0 0
        %2883 = vmatprep.subr.bf16.mxu0 0
        %2884 = vmatpush1.bf16.xpose.msra.mxu0 0
        %2885 = vmatprep.subr.bf16.mxu0 0
        %2886 = vmatpush1.bf16.xpose.msra.mxu0 0
        %2887 = vmatprep.subr.bf16.mxu0 0
        %2888 = vmatpush1.bf16.xpose.msra.mxu0 0
        %2889 = vmatprep.subr.bf16.mxu0 0
        %2890 = vmatpush1.bf16.xpose.msra.mxu0 0
        %2891 = vmatprep.subr.bf16.mxu0 0
        %2892 = vmatpush1.bf16.xpose.msra.mxu0 0
        %2893 = vmatprep.subr.bf16.mxu0 0
        %2894 = vmatpush1.bf16.xpose.msra.mxu0 0
        %2895 = vmatprep.subr.bf16.mxu0 0
        %2896 = vmatpush1.bf16.xpose.msra.mxu0 0
        %2897 = vmatprep.subr.bf16.mxu0 0
        %2898 = vmatpush1.bf16.xpose.msra.mxu0 0
        %2899 = vmatprep.subr.bf16.mxu0 0
        %2900 = vmatpush1.bf16.xpose.msra.mxu0 0
        %2901 = vmatprep.subr.bf16.mxu0 0
        %2902 = vmatpush1.bf16.xpose.msra.mxu0 0
        %2903 = vmatprep.subr.bf16.mxu0 0
        %2904 = vmatpush1.bf16.xpose.msra.mxu0 0
        %2905 = vmatprep.subr.bf16.mxu0 0
        %2906 = vmatpush1.bf16.xpose.msra.mxu0 0
        %2907 = vmatprep.mubr.bf16.mxu0 0
        %2908 = vmatmul.mubr.bf16.gmra.mrb[0].mxu0 %v2870
        %v2909 = vpop.f32.mrb[0].mxu0
        %v2910 = vadd.f32 0.0, %v2909
        %v2911 = vpop.f32.mrb[0].mxu0
        %v2912 = vpop.f32.mrb[0].mxu0
        %v2913 = vpop.f32.mrb[0].mxu0
        %2914 = vdwg.mxu0
        %v2915 = vmul.f32 %v2588, 0.17677669
        %v2916 = vmul.f32 %v2634, 0.17677669
        %v2917 = vmul.f32 %v2680, 0.17677669
        %v2918 = vmul.f32 %v2726, 0.17677669
        %v2919 = vmul.f32 %v2772, 0.17677669
        %v2920 = vmul.f32 %v2818, 0.17677669
        %v2921 = vmul.f32 %v2864, 0.17677669
        %v2922 = vmul.f32 %v2910, 0.17677669
        %v2923 = vld [vmem:[%s4] sm:$0x1]
        %v2924 = vld [vmem:[%s4 + $0x1] sm:$0x1]
        %v2925 = vld [vmem:[%s4 + $0x2] sm:$0x1]
        %v2926 = vld [vmem:[%s4 + $0x3] sm:$0x1]
        %v2927 = vld [vmem:[%s4 + $0x4] sm:$0x1]
        %v2928 = vld [vmem:[%s4 + $0x5] sm:$0x1]
        %v2929 = vld [vmem:[%s4 + $0x6] sm:$0x1]
        %v2930 = vld [vmem:[%s4 + $0x7] sm:$0x1]
        %vm2931 = vcmp.gt.f32.partialorder %v2923, 0.5
        %vm2932 = vcmp.gt.f32.partialorder %v2924, 0.5
        %vm2933 = vcmp.gt.f32.partialorder %v2925, 0.5
        %vm2934 = vcmp.gt.f32.partialorder %v2926, 0.5
        %vm2935 = vcmp.gt.f32.partialorder %v2927, 0.5
        %vm2936 = vcmp.gt.f32.partialorder %v2928, 0.5
        %vm2937 = vcmp.gt.f32.partialorder %v2929, 0.5
        %vm2938 = vcmp.gt.f32.partialorder %v2930, 0.5
        %v2939 = vsel %vm2931, 1, 0
        %v2940 = vsel %vm2932, 1, 0
        %v2941 = vsel %vm2933, 1, 0
        %v2942 = vsel %vm2934, 1, 0
        %v2943 = vsel %vm2935, 1, 0
        %v2944 = vsel %vm2936, 1, 0
        %v2945 = vsel %vm2937, 1, 0
        %v2946 = vsel %vm2938, 1, 0
        %v2947 = vlaneseq
        %v2948 = vshrl.u32 %v2947, 7
        %v2949 = vsub.s32 0, %v2948
        %v2950 = vrot.slane %v2939, %v2949
        %v2951 = vlaneseq
        %v2952 = vshrl.u32 %v2951, 7
        %v2953 = vsub.s32 0, %v2952
        %v2954 = vrot.slane %v2940, %v2953
        %v2955 = vlaneseq
        %v2956 = vshrl.u32 %v2955, 7
        %v2957 = vsub.s32 0, %v2956
        %v2958 = vrot.slane %v2941, %v2957
        %v2959 = vlaneseq
        %v2960 = vshrl.u32 %v2959, 7
        %v2961 = vsub.s32 0, %v2960
        %v2962 = vrot.slane %v2942, %v2961
        %v2963 = vlaneseq
        %v2964 = vshrl.u32 %v2963, 7
        %v2965 = vsub.s32 0, %v2964
        %v2966 = vrot.slane %v2943, %v2965
        %v2967 = vlaneseq
        %v2968 = vshrl.u32 %v2967, 7
        %v2969 = vsub.s32 0, %v2968
        %v2970 = vrot.slane %v2944, %v2969
        %v2971 = vlaneseq
        %v2972 = vshrl.u32 %v2971, 7
        %v2973 = vsub.s32 0, %v2972
        %v2974 = vrot.slane %v2945, %v2973
        %v2975 = vlaneseq
        %v2976 = vshrl.u32 %v2975, 7
        %v2977 = vsub.s32 0, %v2976
        %v2978 = vrot.slane %v2946, %v2977
        %vm2979 = vcmp.eq.s32.totalorder %v2950, 1
        %vm2980 = vcmp.eq.s32.totalorder %v2954, 1
        %vm2981 = vcmp.eq.s32.totalorder %v2958, 1
        %vm2982 = vcmp.eq.s32.totalorder %v2962, 1
        %vm2983 = vcmp.eq.s32.totalorder %v2966, 1
        %vm2984 = vcmp.eq.s32.totalorder %v2970, 1
        %vm2985 = vcmp.eq.s32.totalorder %v2974, 1
        %vm2986 = vcmp.eq.s32.totalorder %v2978, 1
        %v2987 = vsel %vm2979, %v2915, -1000000.0
        %v2988 = vsel %vm2980, %v2916, -1000000.0
        %v2989 = vsel %vm2981, %v2917, -1000000.0
        %v2990 = vsel %vm2982, %v2918, -1000000.0
        %v2991 = vsel %vm2983, %v2919, -1000000.0
        %v2992 = vsel %vm2984, %v2920, -1000000.0
        %v2993 = vsel %vm2985, %v2921, -1000000.0
        %v2994 = vsel %vm2986, %v2922, -1000000.0
        %vm2995 = vcmask 64512
        %v2996 = vsel %vm2995, %v2987, -inf
        %2997 = vmax.xlane.f32.xlu0 %v2996
        %v2998 = vpop.xlane.xlu0 %2997
        %v2999 = vsel %vm2995, %v2988, -inf
        %3000 = vmax.xlane.f32.xlu0 %v2999
        %v3001 = vpop.xlane.xlu0 %3000
        %v3002 = vsel %vm2995, %v2989, -inf
        %3003 = vmax.xlane.f32.xlu0 %v3002
        %v3004 = vpop.xlane.xlu0 %3003
        %v3005 = vsel %vm2995, %v2990, -inf
        %3006 = vmax.xlane.f32.xlu0 %v3005
        %v3007 = vpop.xlane.xlu0 %3006
        %v3008 = vsel %vm2995, %v2991, -inf
        %3009 = vmax.xlane.f32.xlu0 %v3008
        %v3010 = vpop.xlane.xlu0 %3009
        %v3011 = vsel %vm2995, %v2992, -inf
        %3012 = vmax.xlane.f32.xlu0 %v3011
        %v3013 = vpop.xlane.xlu0 %3012
        %v3014 = vsel %vm2995, %v2993, -inf
        %3015 = vmax.xlane.f32.xlu0 %v3014
        %v3016 = vpop.xlane.xlu0 %3015
        %v3017 = vsel %vm2995, %v2994, -inf
        %3018 = vmax.xlane.f32.xlu0 %v3017
        %v3019 = vpop.xlane.xlu0 %3018
        %v3020 = vsub.f32 %v2987, %v2998
        %v3021 = vsub.f32 %v2988, %v3001
        %v3022 = vsub.f32 %v2989, %v3004
        %v3023 = vsub.f32 %v2990, %v3007
        %v3024 = vsub.f32 %v2991, %v3010
        %v3025 = vsub.f32 %v2992, %v3013
        %v3026 = vsub.f32 %v2993, %v3016
        %v3027 = vsub.f32 %v2994, %v3019
        %v3028 = vmul.f32 %v3020, 1.442695
        %v3029 = vpow.pop %v3028
        %v3030 = vmul.f32 %v3021, 1.442695
        %v3031 = vpow.pop %v3030
        %v3032 = vmul.f32 %v3022, 1.442695
        %v3033 = vpow.pop %v3032
        %v3034 = vmul.f32 %v3023, 1.442695
        %v3035 = vpow.pop %v3034
        %v3036 = vmul.f32 %v3024, 1.442695
        %v3037 = vpow.pop %v3036
        %v3038 = vmul.f32 %v3025, 1.442695
        %v3039 = vpow.pop %v3038
        %v3040 = vmul.f32 %v3026, 1.442695
        %v3041 = vpow.pop %v3040
        %v3042 = vmul.f32 %v3027, 1.442695
        %v3043 = vpow.pop %v3042
        %v3044 = vsel %vm2995, %v3029, 0.0
        %3045 = vadd.xlane.f32.xlu0 %v3044
        %v3046 = vpop.xlane.xlu0 %3045
        %v3047 = vsel %vm2995, %v3031, 0.0
        %3048 = vadd.xlane.f32.xlu0 %v3047
        %v3049 = vpop.xlane.xlu0 %3048
        %v3050 = vsel %vm2995, %v3033, 0.0
        %3051 = vadd.xlane.f32.xlu0 %v3050
        %v3052 = vpop.xlane.xlu0 %3051
        %v3053 = vsel %vm2995, %v3035, 0.0
        %3054 = vadd.xlane.f32.xlu0 %v3053
        %v3055 = vpop.xlane.xlu0 %3054
        %v3056 = vsel %vm2995, %v3037, 0.0
        %3057 = vadd.xlane.f32.xlu0 %v3056
        %v3058 = vpop.xlane.xlu0 %3057
        %v3059 = vsel %vm2995, %v3039, 0.0
        %3060 = vadd.xlane.f32.xlu0 %v3059
        %v3061 = vpop.xlane.xlu0 %3060
        %v3062 = vsel %vm2995, %v3041, 0.0
        %3063 = vadd.xlane.f32.xlu0 %v3062
        %v3064 = vpop.xlane.xlu0 %3063
        %v3065 = vsel %vm2995, %v3043, 0.0
        %3066 = vadd.xlane.f32.xlu0 %v3065
        %v3067 = vpop.xlane.xlu0 %3066
        %v3068 = vrcp.pop %v3046
        %v3069 = vrcp.pop %v3049
        %v3070 = vrcp.pop %v3052
        %v3071 = vrcp.pop %v3055
        %v3072 = vrcp.pop %v3058
        %v3073 = vrcp.pop %v3061
        %v3074 = vrcp.pop %v3064
        %v3075 = vrcp.pop %v3067
        %v3076 = vmul.f32 %v3029, %v3068
        %v3077 = vmul.f32 %v3031, %v3069
        %v3078 = vmul.f32 %v3033, %v3070
        %v3079 = vmul.f32 %v3035, %v3071
        %v3080 = vmul.f32 %v3037, %v3072
        %v3081 = vmul.f32 %v3039, %v3073
        %v3082 = vmul.f32 %v3041, %v3074
        %v3083 = vmul.f32 %v3043, %v3075
        %v3084 = vpack.c.bf16 %v3076, %v3076
        %v3085 = vpack.c.bf16 %v3077, %v3077
        %v3086 = vpack.c.bf16 %v3078, %v3078
        %v3087 = vpack.c.bf16 %v3079, %v3079
        %v3088 = vpack.c.bf16 %v3080, %v3080
        %v3089 = vpack.c.bf16 %v3081, %v3081
        %v3090 = vpack.c.bf16 %v3082, %v3082
        %v3091 = vpack.c.bf16 %v3083, %v3083
        %v3092 = vpack.c.bf16 %v2101, %v2101
        %v3093 = vpack.c.bf16 %v2189, %v2189
        %v3094 = vpack.c.bf16 %v2277, %v2277
        %v3095 = vpack.c.bf16 %v2365, %v2365
        %v3096 = vpack.c.bf16 %v2405, %v2405
        %v3097 = vpack.c.bf16 %v2445, %v2445
        %v3098 = vpack.c.bf16 %v2485, %v2485
        %v3099 = vpack.c.bf16 %v2525, %v2525
        %v3101 = vsel %vm2995, %v3084, 0
        %vm3103 = vcmask 1043456
        %v3105 = vsel %vm3103, %v3092, 0
        %3107 = vmatprep.subr.bf16.mxu0 0
        %3108 = vmatpush1.bf16.msra.mxu0 %v3105
        %3109 = vmatprep.subr.bf16.mxu0 0
        %3110 = vmatpush1.bf16.msra.mxu0 0
        %3111 = vmatprep.subr.bf16.mxu0 0
        %3112 = vmatpush1.bf16.msra.mxu0 0
        %3113 = vmatprep.subr.bf16.mxu0 0
        %3114 = vmatpush1.bf16.msra.mxu0 0
        %3115 = vmatprep.subr.bf16.mxu0 0
        %3116 = vmatpush1.bf16.msra.mxu0 0
        %3117 = vmatprep.subr.bf16.mxu0 0
        %3118 = vmatpush1.bf16.msra.mxu0 0
        %3119 = vmatprep.subr.bf16.mxu0 0
        %3120 = vmatpush1.bf16.msra.mxu0 0
        %3121 = vmatprep.subr.bf16.mxu0 0
        %3122 = vmatpush1.bf16.msra.mxu0 0
        %3123 = vmatprep.subr.bf16.mxu0 0
        %3124 = vmatpush1.bf16.msra.mxu0 0
        %3125 = vmatprep.subr.bf16.mxu0 0
        %3126 = vmatpush1.bf16.msra.mxu0 0
        %3127 = vmatprep.subr.bf16.mxu0 0
        %3128 = vmatpush1.bf16.msra.mxu0 0
        %3129 = vmatprep.subr.bf16.mxu0 0
        %3130 = vmatpush1.bf16.msra.mxu0 0
        %3131 = vmatprep.subr.bf16.mxu0 0
        %3132 = vmatpush1.bf16.msra.mxu0 0
        %3133 = vmatprep.subr.bf16.mxu0 0
        %3134 = vmatpush1.bf16.msra.mxu0 0
        %3135 = vmatprep.subr.bf16.mxu0 0
        %3136 = vmatpush1.bf16.msra.mxu0 0
        %3137 = vmatprep.subr.bf16.mxu0 0
        %3138 = vmatpush1.bf16.msra.mxu0 0
        %3139 = vmatprep.mubr.bf16.mxu0 0
        %3140 = vmatmul.mubr.bf16.gmra.mrb[0].mxu0 %v3101
        %v3141 = vpop.f32.mrb[0].mxu0
        %v3142 = vadd.f32 0.0, %v3141
        %v3143 = vpop.f32.mrb[0].mxu0
        %v3144 = vpop.f32.mrb[0].mxu0
        %v3145 = vpop.f32.mrb[0].mxu0
        %3146 = vdwg.mxu0
        %v3148 = vsel %vm2995, %v3085, 0
        %v3151 = vsel %vm3103, %v3093, 0
        %3153 = vmatprep.subr.bf16.mxu0 0
        %3154 = vmatpush1.bf16.msra.mxu0 %v3151
        %3155 = vmatprep.subr.bf16.mxu0 0
        %3156 = vmatpush1.bf16.msra.mxu0 0
        %3157 = vmatprep.subr.bf16.mxu0 0
        %3158 = vmatpush1.bf16.msra.mxu0 0
        %3159 = vmatprep.subr.bf16.mxu0 0
        %3160 = vmatpush1.bf16.msra.mxu0 0
        %3161 = vmatprep.subr.bf16.mxu0 0
        %3162 = vmatpush1.bf16.msra.mxu0 0
        %3163 = vmatprep.subr.bf16.mxu0 0
        %3164 = vmatpush1.bf16.msra.mxu0 0
        %3165 = vmatprep.subr.bf16.mxu0 0
        %3166 = vmatpush1.bf16.msra.mxu0 0
        %3167 = vmatprep.subr.bf16.mxu0 0
        %3168 = vmatpush1.bf16.msra.mxu0 0
        %3169 = vmatprep.subr.bf16.mxu0 0
        %3170 = vmatpush1.bf16.msra.mxu0 0
        %3171 = vmatprep.subr.bf16.mxu0 0
        %3172 = vmatpush1.bf16.msra.mxu0 0
        %3173 = vmatprep.subr.bf16.mxu0 0
        %3174 = vmatpush1.bf16.msra.mxu0 0
        %3175 = vmatprep.subr.bf16.mxu0 0
        %3176 = vmatpush1.bf16.msra.mxu0 0
        %3177 = vmatprep.subr.bf16.mxu0 0
        %3178 = vmatpush1.bf16.msra.mxu0 0
        %3179 = vmatprep.subr.bf16.mxu0 0
        %3180 = vmatpush1.bf16.msra.mxu0 0
        %3181 = vmatprep.subr.bf16.mxu0 0
        %3182 = vmatpush1.bf16.msra.mxu0 0
        %3183 = vmatprep.subr.bf16.mxu0 0
        %3184 = vmatpush1.bf16.msra.mxu0 0
        %3185 = vmatprep.mubr.bf16.mxu0 0
        %3186 = vmatmul.mubr.bf16.gmra.mrb[0].mxu0 %v3148
        %v3187 = vpop.f32.mrb[0].mxu0
        %v3188 = vadd.f32 0.0, %v3187
        %v3189 = vpop.f32.mrb[0].mxu0
        %v3190 = vpop.f32.mrb[0].mxu0
        %v3191 = vpop.f32.mrb[0].mxu0
        %3192 = vdwg.mxu0
        %v3194 = vsel %vm2995, %v3086, 0
        %v3197 = vsel %vm3103, %v3094, 0
        %3199 = vmatprep.subr.bf16.mxu0 0
        %3200 = vmatpush1.bf16.msra.mxu0 %v3197
        %3201 = vmatprep.subr.bf16.mxu0 0
        %3202 = vmatpush1.bf16.msra.mxu0 0
        %3203 = vmatprep.subr.bf16.mxu0 0
        %3204 = vmatpush1.bf16.msra.mxu0 0
        %3205 = vmatprep.subr.bf16.mxu0 0
        %3206 = vmatpush1.bf16.msra.mxu0 0
        %3207 = vmatprep.subr.bf16.mxu0 0
        %3208 = vmatpush1.bf16.msra.mxu0 0
        %3209 = vmatprep.subr.bf16.mxu0 0
        %3210 = vmatpush1.bf16.msra.mxu0 0
        %3211 = vmatprep.subr.bf16.mxu0 0
        %3212 = vmatpush1.bf16.msra.mxu0 0
        %3213 = vmatprep.subr.bf16.mxu0 0
        %3214 = vmatpush1.bf16.msra.mxu0 0
        %3215 = vmatprep.subr.bf16.mxu0 0
        %3216 = vmatpush1.bf16.msra.mxu0 0
        %3217 = vmatprep.subr.bf16.mxu0 0
        %3218 = vmatpush1.bf16.msra.mxu0 0
        %3219 = vmatprep.subr.bf16.mxu0 0
        %3220 = vmatpush1.bf16.msra.mxu0 0
        %3221 = vmatprep.subr.bf16.mxu0 0
        %3222 = vmatpush1.bf16.msra.mxu0 0
        %3223 = vmatprep.subr.bf16.mxu0 0
        %3224 = vmatpush1.bf16.msra.mxu0 0
        %3225 = vmatprep.subr.bf16.mxu0 0
        %3226 = vmatpush1.bf16.msra.mxu0 0
        %3227 = vmatprep.subr.bf16.mxu0 0
        %3228 = vmatpush1.bf16.msra.mxu0 0
        %3229 = vmatprep.subr.bf16.mxu0 0
        %3230 = vmatpush1.bf16.msra.mxu0 0
        %3231 = vmatprep.mubr.bf16.mxu0 0
        %3232 = vmatmul.mubr.bf16.gmra.mrb[0].mxu0 %v3194
        %v3233 = vpop.f32.mrb[0].mxu0
        %v3234 = vadd.f32 0.0, %v3233
        %v3235 = vpop.f32.mrb[0].mxu0
        %v3236 = vpop.f32.mrb[0].mxu0
        %v3237 = vpop.f32.mrb[0].mxu0
        %3238 = vdwg.mxu0
        %v3240 = vsel %vm2995, %v3087, 0
        %v3243 = vsel %vm3103, %v3095, 0
        %3245 = vmatprep.subr.bf16.mxu0 0
        %3246 = vmatpush1.bf16.msra.mxu0 %v3243
        %3247 = vmatprep.subr.bf16.mxu0 0
        %3248 = vmatpush1.bf16.msra.mxu0 0
        %3249 = vmatprep.subr.bf16.mxu0 0
        %3250 = vmatpush1.bf16.msra.mxu0 0
        %3251 = vmatprep.subr.bf16.mxu0 0
        %3252 = vmatpush1.bf16.msra.mxu0 0
        %3253 = vmatprep.subr.bf16.mxu0 0
        %3254 = vmatpush1.bf16.msra.mxu0 0
        %3255 = vmatprep.subr.bf16.mxu0 0
        %3256 = vmatpush1.bf16.msra.mxu0 0
        %3257 = vmatprep.subr.bf16.mxu0 0
        %3258 = vmatpush1.bf16.msra.mxu0 0
        %3259 = vmatprep.subr.bf16.mxu0 0
        %3260 = vmatpush1.bf16.msra.mxu0 0
        %3261 = vmatprep.subr.bf16.mxu0 0
        %3262 = vmatpush1.bf16.msra.mxu0 0
        %3263 = vmatprep.subr.bf16.mxu0 0
        %3264 = vmatpush1.bf16.msra.mxu0 0
        %3265 = vmatprep.subr.bf16.mxu0 0
        %3266 = vmatpush1.bf16.msra.mxu0 0
        %3267 = vmatprep.subr.bf16.mxu0 0
        %3268 = vmatpush1.bf16.msra.mxu0 0
        %3269 = vmatprep.subr.bf16.mxu0 0
        %3270 = vmatpush1.bf16.msra.mxu0 0
        %3271 = vmatprep.subr.bf16.mxu0 0
        %3272 = vmatpush1.bf16.msra.mxu0 0
        %3273 = vmatprep.subr.bf16.mxu0 0
        %3274 = vmatpush1.bf16.msra.mxu0 0
        %3275 = vmatprep.subr.bf16.mxu0 0
        %3276 = vmatpush1.bf16.msra.mxu0 0
        %3277 = vmatprep.mubr.bf16.mxu0 0
        %3278 = vmatmul.mubr.bf16.gmra.mrb[0].mxu0 %v3240
        %v3279 = vpop.f32.mrb[0].mxu0
        %v3280 = vadd.f32 0.0, %v3279
        %v3281 = vpop.f32.mrb[0].mxu0
        %v3282 = vpop.f32.mrb[0].mxu0
        %v3283 = vpop.f32.mrb[0].mxu0
        %3284 = vdwg.mxu0
        %v3286 = vsel %vm2995, %v3088, 0
        %v3289 = vsel %vm3103, %v3096, 0
        %3291 = vmatprep.subr.bf16.mxu0 0
        %3292 = vmatpush1.bf16.msra.mxu0 %v3289
        %3293 = vmatprep.subr.bf16.mxu0 0
        %3294 = vmatpush1.bf16.msra.mxu0 0
        %3295 = vmatprep.subr.bf16.mxu0 0
        %3296 = vmatpush1.bf16.msra.mxu0 0
        %3297 = vmatprep.subr.bf16.mxu0 0
        %3298 = vmatpush1.bf16.msra.mxu0 0
        %3299 = vmatprep.subr.bf16.mxu0 0
        %3300 = vmatpush1.bf16.msra.mxu0 0
        %3301 = vmatprep.subr.bf16.mxu0 0
        %3302 = vmatpush1.bf16.msra.mxu0 0
        %3303 = vmatprep.subr.bf16.mxu0 0
        %3304 = vmatpush1.bf16.msra.mxu0 0
        %3305 = vmatprep.subr.bf16.mxu0 0
        %3306 = vmatpush1.bf16.msra.mxu0 0
        %3307 = vmatprep.subr.bf16.mxu0 0
        %3308 = vmatpush1.bf16.msra.mxu0 0
        %3309 = vmatprep.subr.bf16.mxu0 0
        %3310 = vmatpush1.bf16.msra.mxu0 0
        %3311 = vmatprep.subr.bf16.mxu0 0
        %3312 = vmatpush1.bf16.msra.mxu0 0
        %3313 = vmatprep.subr.bf16.mxu0 0
        %3314 = vmatpush1.bf16.msra.mxu0 0
        %3315 = vmatprep.subr.bf16.mxu0 0
        %3316 = vmatpush1.bf16.msra.mxu0 0
        %3317 = vmatprep.subr.bf16.mxu0 0
        %3318 = vmatpush1.bf16.msra.mxu0 0
        %3319 = vmatprep.subr.bf16.mxu0 0
        %3320 = vmatpush1.bf16.msra.mxu0 0
        %3321 = vmatprep.subr.bf16.mxu0 0
        %3322 = vmatpush1.bf16.msra.mxu0 0
        %3323 = vmatprep.mubr.bf16.mxu0 0
        %3324 = vmatmul.mubr.bf16.gmra.mrb[0].mxu0 %v3286
        %v3325 = vpop.f32.mrb[0].mxu0
        %v3326 = vadd.f32 0.0, %v3325
        %v3327 = vpop.f32.mrb[0].mxu0
        %v3328 = vpop.f32.mrb[0].mxu0
        %v3329 = vpop.f32.mrb[0].mxu0
        %3330 = vdwg.mxu0
        %v3332 = vsel %vm2995, %v3089, 0
        %v3335 = vsel %vm3103, %v3097, 0
        %3337 = vmatprep.subr.bf16.mxu0 0
        %3338 = vmatpush1.bf16.msra.mxu0 %v3335
        %3339 = vmatprep.subr.bf16.mxu0 0
        %3340 = vmatpush1.bf16.msra.mxu0 0
        %3341 = vmatprep.subr.bf16.mxu0 0
        %3342 = vmatpush1.bf16.msra.mxu0 0
        %3343 = vmatprep.subr.bf16.mxu0 0
        %3344 = vmatpush1.bf16.msra.mxu0 0
        %3345 = vmatprep.subr.bf16.mxu0 0
        %3346 = vmatpush1.bf16.msra.mxu0 0
        %3347 = vmatprep.subr.bf16.mxu0 0
        %3348 = vmatpush1.bf16.msra.mxu0 0
        %3349 = vmatprep.subr.bf16.mxu0 0
        %3350 = vmatpush1.bf16.msra.mxu0 0
        %3351 = vmatprep.subr.bf16.mxu0 0
        %3352 = vmatpush1.bf16.msra.mxu0 0
        %3353 = vmatprep.subr.bf16.mxu0 0
        %3354 = vmatpush1.bf16.msra.mxu0 0
        %3355 = vmatprep.subr.bf16.mxu0 0
        %3356 = vmatpush1.bf16.msra.mxu0 0
        %3357 = vmatprep.subr.bf16.mxu0 0
        %3358 = vmatpush1.bf16.msra.mxu0 0
        %3359 = vmatprep.subr.bf16.mxu0 0
        %3360 = vmatpush1.bf16.msra.mxu0 0
        %3361 = vmatprep.subr.bf16.mxu0 0
        %3362 = vmatpush1.bf16.msra.mxu0 0
        %3363 = vmatprep.subr.bf16.mxu0 0
        %3364 = vmatpush1.bf16.msra.mxu0 0
        %3365 = vmatprep.subr.bf16.mxu0 0
        %3366 = vmatpush1.bf16.msra.mxu0 0
        %3367 = vmatprep.subr.bf16.mxu0 0
        %3368 = vmatpush1.bf16.msra.mxu0 0
        %3369 = vmatprep.mubr.bf16.mxu0 0
        %3370 = vmatmul.mubr.bf16.gmra.mrb[0].mxu0 %v3332
        %v3371 = vpop.f32.mrb[0].mxu0
        %v3372 = vadd.f32 0.0, %v3371
        %v3373 = vpop.f32.mrb[0].mxu0
        %v3374 = vpop.f32.mrb[0].mxu0
        %v3375 = vpop.f32.mrb[0].mxu0
        %3376 = vdwg.mxu0
        %v3378 = vsel %vm2995, %v3090, 0
        %v3381 = vsel %vm3103, %v3098, 0
        %3383 = vmatprep.subr.bf16.mxu0 0
        %3384 = vmatpush1.bf16.msra.mxu0 %v3381
        %3385 = vmatprep.subr.bf16.mxu0 0
        %3386 = vmatpush1.bf16.msra.mxu0 0
        %3387 = vmatprep.subr.bf16.mxu0 0
        %3388 = vmatpush1.bf16.msra.mxu0 0
        %3389 = vmatprep.subr.bf16.mxu0 0
        %3390 = vmatpush1.bf16.msra.mxu0 0
        %3391 = vmatprep.subr.bf16.mxu0 0
        %3392 = vmatpush1.bf16.msra.mxu0 0
        %3393 = vmatprep.subr.bf16.mxu0 0
        %3394 = vmatpush1.bf16.msra.mxu0 0
        %3395 = vmatprep.subr.bf16.mxu0 0
        %3396 = vmatpush1.bf16.msra.mxu0 0
        %3397 = vmatprep.subr.bf16.mxu0 0
        %3398 = vmatpush1.bf16.msra.mxu0 0
        %3399 = vmatprep.subr.bf16.mxu0 0
        %3400 = vmatpush1.bf16.msra.mxu0 0
        %3401 = vmatprep.subr.bf16.mxu0 0
        %3402 = vmatpush1.bf16.msra.mxu0 0
        %3403 = vmatprep.subr.bf16.mxu0 0
        %3404 = vmatpush1.bf16.msra.mxu0 0
        %3405 = vmatprep.subr.bf16.mxu0 0
        %3406 = vmatpush1.bf16.msra.mxu0 0
        %3407 = vmatprep.subr.bf16.mxu0 0
        %3408 = vmatpush1.bf16.msra.mxu0 0
        %3409 = vmatprep.subr.bf16.mxu0 0
        %3410 = vmatpush1.bf16.msra.mxu0 0
        %3411 = vmatprep.subr.bf16.mxu0 0
        %3412 = vmatpush1.bf16.msra.mxu0 0
        %3413 = vmatprep.subr.bf16.mxu0 0
        %3414 = vmatpush1.bf16.msra.mxu0 0
        %3415 = vmatprep.mubr.bf16.mxu0 0
        %3416 = vmatmul.mubr.bf16.gmra.mrb[0].mxu0 %v3378
        %v3417 = vpop.f32.mrb[0].mxu0
        %v3418 = vadd.f32 0.0, %v3417
        %v3419 = vpop.f32.mrb[0].mxu0
        %v3420 = vpop.f32.mrb[0].mxu0
        %v3421 = vpop.f32.mrb[0].mxu0
        %3422 = vdwg.mxu0
        %v3424 = vsel %vm2995, %v3091, 0
        %v3427 = vsel %vm3103, %v3099, 0
        %3429 = vmatprep.subr.bf16.mxu0 0
        %3430 = vmatpush1.bf16.msra.mxu0 %v3427
        %3431 = vmatprep.subr.bf16.mxu0 0
        %3432 = vmatpush1.bf16.msra.mxu0 0
        %3433 = vmatprep.subr.bf16.mxu0 0
        %3434 = vmatpush1.bf16.msra.mxu0 0
        %3435 = vmatprep.subr.bf16.mxu0 0
        %3436 = vmatpush1.bf16.msra.mxu0 0
        %3437 = vmatprep.subr.bf16.mxu0 0
        %3438 = vmatpush1.bf16.msra.mxu0 0
        %3439 = vmatprep.subr.bf16.mxu0 0
        %3440 = vmatpush1.bf16.msra.mxu0 0
        %3441 = vmatprep.subr.bf16.mxu0 0
        %3442 = vmatpush1.bf16.msra.mxu0 0
        %3443 = vmatprep.subr.bf16.mxu0 0
        %3444 = vmatpush1.bf16.msra.mxu0 0
        %3445 = vmatprep.subr.bf16.mxu0 0
        %3446 = vmatpush1.bf16.msra.mxu0 0
        %3447 = vmatprep.subr.bf16.mxu0 0
        %3448 = vmatpush1.bf16.msra.mxu0 0
        %3449 = vmatprep.subr.bf16.mxu0 0
        %3450 = vmatpush1.bf16.msra.mxu0 0
        %3451 = vmatprep.subr.bf16.mxu0 0
        %3452 = vmatpush1.bf16.msra.mxu0 0
        %3453 = vmatprep.subr.bf16.mxu0 0
        %3454 = vmatpush1.bf16.msra.mxu0 0
        %3455 = vmatprep.subr.bf16.mxu0 0
        %3456 = vmatpush1.bf16.msra.mxu0 0
        %3457 = vmatprep.subr.bf16.mxu0 0
        %3458 = vmatpush1.bf16.msra.mxu0 0
        %3459 = vmatprep.subr.bf16.mxu0 0
        %3460 = vmatpush1.bf16.msra.mxu0 0
        %3461 = vmatprep.mubr.bf16.mxu0 0
        %3462 = vmatmul.mubr.bf16.gmra.mrb[0].mxu0 %v3424
        %v3463 = vpop.f32.mrb[0].mxu0
        %v3464 = vadd.f32 0.0, %v3463
        %v3465 = vpop.f32.mrb[0].mxu0
        %v3466 = vpop.f32.mrb[0].mxu0
        %v3467 = vpop.f32.mrb[0].mxu0
        %3468 = vdwg.mxu0
        %v3469 = vld [vmem:[%s692] sm:$0xf]
        %v3470 = vld [vmem:[%s692 + $0x4] sm:$0xf]
        %v3471 = vld [vmem:[%s692 + $0x8] sm:$0xf]
        %v3472 = vld [vmem:[%s692 + $0xc] sm:$0xf]
        %v3473 = vld [vmem:[%s692 + $0x10] sm:$0xf]
        %v3474 = vld [vmem:[%s692 + $0x14] sm:$0xf]
        %v3475 = vld [vmem:[%s692 + $0x18] sm:$0xf]
        %v3476 = vld [vmem:[%s692 + $0x1c] sm:$0xf]
        %v3477 = vld [vmem:[%s692 + $0x20] sm:$0xf]
        %v3478 = vld [vmem:[%s692 + $0x24] sm:$0xf]
        %v3479 = vld [vmem:[%s692 + $0x28] sm:$0xf]
        %v3480 = vld [vmem:[%s692 + $0x2c] sm:$0xf]
        %v3481 = vld [vmem:[%s692 + $0x30] sm:$0xf]
        %v3482 = vld [vmem:[%s692 + $0x34] sm:$0xf]
        %v3483 = vld [vmem:[%s692 + $0x38] sm:$0xf]
        %v3484 = vld [vmem:[%s692 + $0x3c] sm:$0xf]
        %v3485 = vpack.c.bf16 %v3142, %v3142
        %v3486 = vpack.c.bf16 %v3188, %v3188
        %v3487 = vpack.c.bf16 %v3234, %v3234
        %v3488 = vpack.c.bf16 %v3280, %v3280
        %v3489 = vpack.c.bf16 %v3326, %v3326
        %v3490 = vpack.c.bf16 %v3372, %v3372
        %v3491 = vpack.c.bf16 %v3418, %v3418
        %v3492 = vpack.c.bf16 %v3464, %v3464
        %v3497 = vunpack.c.l.b16 %v3469
        %v3498 = vunpack.c.l.b16 %v3470
        %v3499 = vunpack.c.l.b16 %v3471
        %v3500 = vunpack.c.l.b16 %v3472
        %v3501 = vpack.c.b16 %v3498, %v3497
        %v3502 = vpack.c.b16 %v3500, %v3499
        %v3506 = vsel %vm2546, %v3485, 0
        %3508 = vmatprep.subr.bf16.mxu0 0
        %3509 = vmatpush1.bf16.msra.mxu0 %v3501
        %3510 = vmatprep.subr.bf16.mxu0 0
        %3511 = vmatpush1.bf16.msra.mxu0 %v3502
        %3512 = vmatprep.subr.bf16.mxu0 0
        %3513 = vmatpush1.bf16.msra.mxu0 0
        %3514 = vmatprep.subr.bf16.mxu0 0
        %3515 = vmatpush1.bf16.msra.mxu0 0
        %3516 = vmatprep.subr.bf16.mxu0 0
        %3517 = vmatpush1.bf16.msra.mxu0 0
        %3518 = vmatprep.subr.bf16.mxu0 0
        %3519 = vmatpush1.bf16.msra.mxu0 0
        %3520 = vmatprep.subr.bf16.mxu0 0
        %3521 = vmatpush1.bf16.msra.mxu0 0
        %3522 = vmatprep.subr.bf16.mxu0 0
        %3523 = vmatpush1.bf16.msra.mxu0 0
        %3524 = vmatprep.subr.bf16.mxu0 0
        %3525 = vmatpush1.bf16.msra.mxu0 0
        %3526 = vmatprep.subr.bf16.mxu0 0
        %3527 = vmatpush1.bf16.msra.mxu0 0
        %3528 = vmatprep.subr.bf16.mxu0 0
        %3529 = vmatpush1.bf16.msra.mxu0 0
        %3530 = vmatprep.subr.bf16.mxu0 0
        %3531 = vmatpush1.bf16.msra.mxu0 0
        %3532 = vmatprep.subr.bf16.mxu0 0
        %3533 = vmatpush1.bf16.msra.mxu0 0
        %3534 = vmatprep.subr.bf16.mxu0 0
        %3535 = vmatpush1.bf16.msra.mxu0 0
        %3536 = vmatprep.subr.bf16.mxu0 0
        %3537 = vmatpush1.bf16.msra.mxu0 0
        %3538 = vmatprep.subr.bf16.mxu0 0
        %3539 = vmatpush1.bf16.msra.mxu0 0
        %3540 = vmatprep.mubr.bf16.mxu0 0
        %3541 = vmatmul.mubr.bf16.gmra.mrb[0].mxu0 %v3506
        %v3542 = vpop.f32.mrb[0].mxu0
        %v3543 = vadd.f32 0.0, %v3542
        %v3544 = vpop.f32.mrb[0].mxu0
        %v3545 = vpop.f32.mrb[0].mxu0
        %v3546 = vpop.f32.mrb[0].mxu0
        %3547 = vdwg.mxu0
        %v3552 = vunpack.c.l.b16 %v3473
        %v3553 = vunpack.c.l.b16 %v3474
        %v3554 = vunpack.c.l.b16 %v3475
        %v3555 = vunpack.c.l.b16 %v3476
        %v3556 = vpack.c.b16 %v3553, %v3552
        %v3557 = vpack.c.b16 %v3555, %v3554
        %v3561 = vsel %vm2546, %v3486, 0
        %3563 = vmatprep.subr.bf16.mxu0 0
        %3564 = vmatpush1.bf16.msra.mxu0 %v3556
        %3565 = vmatprep.subr.bf16.mxu0 0
        %3566 = vmatpush1.bf16.msra.mxu0 %v3557
        %3567 = vmatprep.subr.bf16.mxu0 0
        %3568 = vmatpush1.bf16.msra.mxu0 0
        %3569 = vmatprep.subr.bf16.mxu0 0
        %3570 = vmatpush1.bf16.msra.mxu0 0
        %3571 = vmatprep.subr.bf16.mxu0 0
        %3572 = vmatpush1.bf16.msra.mxu0 0
        %3573 = vmatprep.subr.bf16.mxu0 0
        %3574 = vmatpush1.bf16.msra.mxu0 0
        %3575 = vmatprep.subr.bf16.mxu0 0
        %3576 = vmatpush1.bf16.msra.mxu0 0
        %3577 = vmatprep.subr.bf16.mxu0 0
        %3578 = vmatpush1.bf16.msra.mxu0 0
        %3579 = vmatprep.subr.bf16.mxu0 0
        %3580 = vmatpush1.bf16.msra.mxu0 0
        %3581 = vmatprep.subr.bf16.mxu0 0
        %3582 = vmatpush1.bf16.msra.mxu0 0
        %3583 = vmatprep.subr.bf16.mxu0 0
        %3584 = vmatpush1.bf16.msra.mxu0 0
        %3585 = vmatprep.subr.bf16.mxu0 0
        %3586 = vmatpush1.bf16.msra.mxu0 0
        %3587 = vmatprep.subr.bf16.mxu0 0
        %3588 = vmatpush1.bf16.msra.mxu0 0
        %3589 = vmatprep.subr.bf16.mxu0 0
        %3590 = vmatpush1.bf16.msra.mxu0 0
        %3591 = vmatprep.subr.bf16.mxu0 0
        %3592 = vmatpush1.bf16.msra.mxu0 0
        %3593 = vmatprep.subr.bf16.mxu0 0
        %3594 = vmatpush1.bf16.msra.mxu0 0
        %3595 = vmatprep.mubr.bf16.mxu0 0
        %3596 = vmatmul.mubr.bf16.gmra.mrb[0].mxu0 %v3561
        %v3597 = vpop.f32.mrb[0].mxu0
        %v3598 = vadd.f32 0.0, %v3597
        %v3599 = vpop.f32.mrb[0].mxu0
        %v3600 = vpop.f32.mrb[0].mxu0
        %v3601 = vpop.f32.mrb[0].mxu0
        %3602 = vdwg.mxu0
        %v3607 = vunpack.c.l.b16 %v3477
        %v3608 = vunpack.c.l.b16 %v3478
        %v3609 = vunpack.c.l.b16 %v3479
        %v3610 = vunpack.c.l.b16 %v3480
        %v3611 = vpack.c.b16 %v3608, %v3607
        %v3612 = vpack.c.b16 %v3610, %v3609
        %v3616 = vsel %vm2546, %v3487, 0
        %3618 = vmatprep.subr.bf16.mxu0 0
        %3619 = vmatpush1.bf16.msra.mxu0 %v3611
        %3620 = vmatprep.subr.bf16.mxu0 0
        %3621 = vmatpush1.bf16.msra.mxu0 %v3612
        %3622 = vmatprep.subr.bf16.mxu0 0
        %3623 = vmatpush1.bf16.msra.mxu0 0
        %3624 = vmatprep.subr.bf16.mxu0 0
        %3625 = vmatpush1.bf16.msra.mxu0 0
        %3626 = vmatprep.subr.bf16.mxu0 0
        %3627 = vmatpush1.bf16.msra.mxu0 0
        %3628 = vmatprep.subr.bf16.mxu0 0
        %3629 = vmatpush1.bf16.msra.mxu0 0
        %3630 = vmatprep.subr.bf16.mxu0 0
        %3631 = vmatpush1.bf16.msra.mxu0 0
        %3632 = vmatprep.subr.bf16.mxu0 0
        %3633 = vmatpush1.bf16.msra.mxu0 0
        %3634 = vmatprep.subr.bf16.mxu0 0
        %3635 = vmatpush1.bf16.msra.mxu0 0
        %3636 = vmatprep.subr.bf16.mxu0 0
        %3637 = vmatpush1.bf16.msra.mxu0 0
        %3638 = vmatprep.subr.bf16.mxu0 0
        %3639 = vmatpush1.bf16.msra.mxu0 0
        %3640 = vmatprep.subr.bf16.mxu0 0
        %3641 = vmatpush1.bf16.msra.mxu0 0
        %3642 = vmatprep.subr.bf16.mxu0 0
        %3643 = vmatpush1.bf16.msra.mxu0 0
        %3644 = vmatprep.subr.bf16.mxu0 0
        %3645 = vmatpush1.bf16.msra.mxu0 0
        %3646 = vmatprep.subr.bf16.mxu0 0
        %3647 = vmatpush1.bf16.msra.mxu0 0
        %3648 = vmatprep.subr.bf16.mxu0 0
        %3649 = vmatpush1.bf16.msra.mxu0 0
        %3650 = vmatprep.mubr.bf16.mxu0 0
        %3651 = vmatmul.mubr.bf16.gmra.mrb[0].mxu0 %v3616
        %v3652 = vpop.f32.mrb[0].mxu0
        %v3653 = vadd.f32 0.0, %v3652
        %v3654 = vpop.f32.mrb[0].mxu0
        %v3655 = vpop.f32.mrb[0].mxu0
        %v3656 = vpop.f32.mrb[0].mxu0
        %3657 = vdwg.mxu0
        %v3662 = vunpack.c.l.b16 %v3481
        %v3663 = vunpack.c.l.b16 %v3482
        %v3664 = vunpack.c.l.b16 %v3483
        %v3665 = vunpack.c.l.b16 %v3484
        %v3666 = vpack.c.b16 %v3663, %v3662
        %v3667 = vpack.c.b16 %v3665, %v3664
        %v3671 = vsel %vm2546, %v3488, 0
        %3673 = vmatprep.subr.bf16.mxu0 0
        %3674 = vmatpush1.bf16.msra.mxu0 %v3666
        %3675 = vmatprep.subr.bf16.mxu0 0
        %3676 = vmatpush1.bf16.msra.mxu0 %v3667
        %3677 = vmatprep.subr.bf16.mxu0 0
        %3678 = vmatpush1.bf16.msra.mxu0 0
        %3679 = vmatprep.subr.bf16.mxu0 0
        %3680 = vmatpush1.bf16.msra.mxu0 0
        %3681 = vmatprep.subr.bf16.mxu0 0
        %3682 = vmatpush1.bf16.msra.mxu0 0
        %3683 = vmatprep.subr.bf16.mxu0 0
        %3684 = vmatpush1.bf16.msra.mxu0 0
        %3685 = vmatprep.subr.bf16.mxu0 0
        %3686 = vmatpush1.bf16.msra.mxu0 0
        %3687 = vmatprep.subr.bf16.mxu0 0
        %3688 = vmatpush1.bf16.msra.mxu0 0
        %3689 = vmatprep.subr.bf16.mxu0 0
        %3690 = vmatpush1.bf16.msra.mxu0 0
        %3691 = vmatprep.subr.bf16.mxu0 0
        %3692 = vmatpush1.bf16.msra.mxu0 0
        %3693 = vmatprep.subr.bf16.mxu0 0
        %3694 = vmatpush1.bf16.msra.mxu0 0
        %3695 = vmatprep.subr.bf16.mxu0 0
        %3696 = vmatpush1.bf16.msra.mxu0 0
        %3697 = vmatprep.subr.bf16.mxu0 0
        %3698 = vmatpush1.bf16.msra.mxu0 0
        %3699 = vmatprep.subr.bf16.mxu0 0
        %3700 = vmatpush1.bf16.msra.mxu0 0
        %3701 = vmatprep.subr.bf16.mxu0 0
        %3702 = vmatpush1.bf16.msra.mxu0 0
        %3703 = vmatprep.subr.bf16.mxu0 0
        %3704 = vmatpush1.bf16.msra.mxu0 0
        %3705 = vmatprep.mubr.bf16.mxu0 0
        %3706 = vmatmul.mubr.bf16.gmra.mrb[0].mxu0 %v3671
        %v3707 = vpop.f32.mrb[0].mxu0
        %v3708 = vadd.f32 0.0, %v3707
        %v3709 = vpop.f32.mrb[0].mxu0
        %v3710 = vpop.f32.mrb[0].mxu0
        %v3711 = vpop.f32.mrb[0].mxu0
        %3712 = vdwg.mxu0
        %v3714 = vsel %vm2546, %v3489, 0
        %3716 = vmatprep.subr.bf16.mxu0 0
        %3717 = vmatpush1.bf16.msra.mxu0 %v3501
        %3718 = vmatprep.subr.bf16.mxu0 0
        %3719 = vmatpush1.bf16.msra.mxu0 %v3502
        %3720 = vmatprep.subr.bf16.mxu0 0
        %3721 = vmatpush1.bf16.msra.mxu0 0
        %3722 = vmatprep.subr.bf16.mxu0 0
        %3723 = vmatpush1.bf16.msra.mxu0 0
        %3724 = vmatprep.subr.bf16.mxu0 0
        %3725 = vmatpush1.bf16.msra.mxu0 0
        %3726 = vmatprep.subr.bf16.mxu0 0
        %3727 = vmatpush1.bf16.msra.mxu0 0
        %3728 = vmatprep.subr.bf16.mxu0 0
        %3729 = vmatpush1.bf16.msra.mxu0 0
        %3730 = vmatprep.subr.bf16.mxu0 0
        %3731 = vmatpush1.bf16.msra.mxu0 0
        %3732 = vmatprep.subr.bf16.mxu0 0
        %3733 = vmatpush1.bf16.msra.mxu0 0
        %3734 = vmatprep.subr.bf16.mxu0 0
        %3735 = vmatpush1.bf16.msra.mxu0 0
        %3736 = vmatprep.subr.bf16.mxu0 0
        %3737 = vmatpush1.bf16.msra.mxu0 0
        %3738 = vmatprep.subr.bf16.mxu0 0
        %3739 = vmatpush1.bf16.msra.mxu0 0
        %3740 = vmatprep.subr.bf16.mxu0 0
        %3741 = vmatpush1.bf16.msra.mxu0 0
        %3742 = vmatprep.subr.bf16.mxu0 0
        %3743 = vmatpush1.bf16.msra.mxu0 0
        %3744 = vmatprep.subr.bf16.mxu0 0
        %3745 = vmatpush1.bf16.msra.mxu0 0
        %3746 = vmatprep.subr.bf16.mxu0 0
        %3747 = vmatpush1.bf16.msra.mxu0 0
        %3748 = vmatprep.mubr.bf16.mxu0 0
        %3749 = vmatmul.mubr.bf16.gmra.mrb[0].mxu0 %v3714
        %v3750 = vpop.f32.mrb[0].mxu0
        %v3751 = vadd.f32 0.0, %v3750
        %v3752 = vpop.f32.mrb[0].mxu0
        %v3753 = vpop.f32.mrb[0].mxu0
        %v3754 = vpop.f32.mrb[0].mxu0
        %3755 = vdwg.mxu0
        %v3757 = vsel %vm2546, %v3490, 0
        %3759 = vmatprep.subr.bf16.mxu0 0
        %3760 = vmatpush1.bf16.msra.mxu0 %v3556
        %3761 = vmatprep.subr.bf16.mxu0 0
        %3762 = vmatpush1.bf16.msra.mxu0 %v3557
        %3763 = vmatprep.subr.bf16.mxu0 0
        %3764 = vmatpush1.bf16.msra.mxu0 0
        %3765 = vmatprep.subr.bf16.mxu0 0
        %3766 = vmatpush1.bf16.msra.mxu0 0
        %3767 = vmatprep.subr.bf16.mxu0 0
        %3768 = vmatpush1.bf16.msra.mxu0 0
        %3769 = vmatprep.subr.bf16.mxu0 0
        %3770 = vmatpush1.bf16.msra.mxu0 0
        %3771 = vmatprep.subr.bf16.mxu0 0
        %3772 = vmatpush1.bf16.msra.mxu0 0
        %3773 = vmatprep.subr.bf16.mxu0 0
        %3774 = vmatpush1.bf16.msra.mxu0 0
        %3775 = vmatprep.subr.bf16.mxu0 0
        %3776 = vmatpush1.bf16.msra.mxu0 0
        %3777 = vmatprep.subr.bf16.mxu0 0
        %3778 = vmatpush1.bf16.msra.mxu0 0
        %3779 = vmatprep.subr.bf16.mxu0 0
        %3780 = vmatpush1.bf16.msra.mxu0 0
        %3781 = vmatprep.subr.bf16.mxu0 0
        %3782 = vmatpush1.bf16.msra.mxu0 0
        %3783 = vmatprep.subr.bf16.mxu0 0
        %3784 = vmatpush1.bf16.msra.mxu0 0
        %3785 = vmatprep.subr.bf16.mxu0 0
        %3786 = vmatpush1.bf16.msra.mxu0 0
        %3787 = vmatprep.subr.bf16.mxu0 0
        %3788 = vmatpush1.bf16.msra.mxu0 0
        %3789 = vmatprep.subr.bf16.mxu0 0
        %3790 = vmatpush1.bf16.msra.mxu0 0
        %3791 = vmatprep.mubr.bf16.mxu0 0
        %3792 = vmatmul.mubr.bf16.gmra.mrb[0].mxu0 %v3757
        %v3793 = vpop.f32.mrb[0].mxu0
        %v3794 = vadd.f32 0.0, %v3793
        %v3795 = vpop.f32.mrb[0].mxu0
        %v3796 = vpop.f32.mrb[0].mxu0
        %v3797 = vpop.f32.mrb[0].mxu0
        %3798 = vdwg.mxu0
        %v3800 = vsel %vm2546, %v3491, 0
        %3802 = vmatprep.subr.bf16.mxu0 0
        %3803 = vmatpush1.bf16.msra.mxu0 %v3611
        %3804 = vmatprep.subr.bf16.mxu0 0
        %3805 = vmatpush1.bf16.msra.mxu0 %v3612
        %3806 = vmatprep.subr.bf16.mxu0 0
        %3807 = vmatpush1.bf16.msra.mxu0 0
        %3808 = vmatprep.subr.bf16.mxu0 0
        %3809 = vmatpush1.bf16.msra.mxu0 0
        %3810 = vmatprep.subr.bf16.mxu0 0
        %3811 = vmatpush1.bf16.msra.mxu0 0
        %3812 = vmatprep.subr.bf16.mxu0 0
        %3813 = vmatpush1.bf16.msra.mxu0 0
        %3814 = vmatprep.subr.bf16.mxu0 0
        %3815 = vmatpush1.bf16.msra.mxu0 0
        %3816 = vmatprep.subr.bf16.mxu0 0
        %3817 = vmatpush1.bf16.msra.mxu0 0
        %3818 = vmatprep.subr.bf16.mxu0 0
        %3819 = vmatpush1.bf16.msra.mxu0 0
        %3820 = vmatprep.subr.bf16.mxu0 0
        %3821 = vmatpush1.bf16.msra.mxu0 0
        %3822 = vmatprep.subr.bf16.mxu0 0
        %3823 = vmatpush1.bf16.msra.mxu0 0
        %3824 = vmatprep.subr.bf16.mxu0 0
        %3825 = vmatpush1.bf16.msra.mxu0 0
        %3826 = vmatprep.subr.bf16.mxu0 0
        %3827 = vmatpush1.bf16.msra.mxu0 0
        %3828 = vmatprep.subr.bf16.mxu0 0
        %3829 = vmatpush1.bf16.msra.mxu0 0
        %3830 = vmatprep.subr.bf16.mxu0 0
        %3831 = vmatpush1.bf16.msra.mxu0 0
        %3832 = vmatprep.subr.bf16.mxu0 0
        %3833 = vmatpush1.bf16.msra.mxu0 0
        %3834 = vmatprep.mubr.bf16.mxu0 0
        %3835 = vmatmul.mubr.bf16.gmra.mrb[0].mxu0 %v3800
        %v3836 = vpop.f32.mrb[0].mxu0
        %v3837 = vadd.f32 0.0, %v3836
        %v3838 = vpop.f32.mrb[0].mxu0
        %v3839 = vpop.f32.mrb[0].mxu0
        %v3840 = vpop.f32.mrb[0].mxu0
        %3841 = vdwg.mxu0
        %v3843 = vsel %vm2546, %v3492, 0
        %3845 = vmatprep.subr.bf16.mxu0 0
        %3846 = vmatpush1.bf16.msra.mxu0 %v3666
        %3847 = vmatprep.subr.bf16.mxu0 0
        %3848 = vmatpush1.bf16.msra.mxu0 %v3667
        %3849 = vmatprep.subr.bf16.mxu0 0
        %3850 = vmatpush1.bf16.msra.mxu0 0
        %3851 = vmatprep.subr.bf16.mxu0 0
        %3852 = vmatpush1.bf16.msra.mxu0 0
        %3853 = vmatprep.subr.bf16.mxu0 0
        %3854 = vmatpush1.bf16.msra.mxu0 0
        %3855 = vmatprep.subr.bf16.mxu0 0
        %3856 = vmatpush1.bf16.msra.mxu0 0
        %3857 = vmatprep.subr.bf16.mxu0 0
        %3858 = vmatpush1.bf16.msra.mxu0 0
        %3859 = vmatprep.subr.bf16.mxu0 0
        %3860 = vmatpush1.bf16.msra.mxu0 0
        %3861 = vmatprep.subr.bf16.mxu0 0
        %3862 = vmatpush1.bf16.msra.mxu0 0
        %3863 = vmatprep.subr.bf16.mxu0 0
        %3864 = vmatpush1.bf16.msra.mxu0 0
        %3865 = vmatprep.subr.bf16.mxu0 0
        %3866 = vmatpush1.bf16.msra.mxu0 0
        %3867 = vmatprep.subr.bf16.mxu0 0
        %3868 = vmatpush1.bf16.msra.mxu0 0
        %3869 = vmatprep.subr.bf16.mxu0 0
        %3870 = vmatpush1.bf16.msra.mxu0 0
        %3871 = vmatprep.subr.bf16.mxu0 0
        %3872 = vmatpush1.bf16.msra.mxu0 0
        %3873 = vmatprep.subr.bf16.mxu0 0
        %3874 = vmatpush1.bf16.msra.mxu0 0
        %3875 = vmatprep.subr.bf16.mxu0 0
        %3876 = vmatpush1.bf16.msra.mxu0 0
        %3877 = vmatprep.mubr.bf16.mxu0 0
        %3878 = vmatmul.mubr.bf16.gmra.mrb[0].mxu0 %v3843
        %v3879 = vpop.f32.mrb[0].mxu0
        %v3880 = vadd.f32 0.0, %v3879
        %v3881 = vpop.f32.mrb[0].mxu0
        %v3882 = vpop.f32.mrb[0].mxu0
        %v3883 = vpop.f32.mrb[0].mxu0
        %3884 = vdwg.mxu0
        %v3885 = vadd.f32 %v3543, %v3598
        %v3886 = vadd.f32 %v3885, %v3653
        %v3887 = vadd.f32 %v3886, %v3708
        %v3888 = vadd.f32 %v3751, %v3794
        %v3889 = vadd.f32 %v3888, %v3837
        %v3890 = vadd.f32 %v3889, %v3880
        %v3891 = vadd.f32 %v798, %v3887
        %v3892 = vadd.f32 %v799, %v3890
        %3893 = vadd.xlane.f32.xlu0 %v3891
        %v3894 = vpop.xlane.xlu0 %3893
        %3895 = vadd.xlane.f32.xlu0 %v3892
        %v3896 = vpop.xlane.xlu0 %3895
        %v3897 = vrcp.pop 128.0
        %v3898 = vmul.f32 %v3894, %v3897
        %v3899 = vmul.f32 %v3896, %v3897
        %v3900 = vsub.f32 %v3891, %v3898
        %v3901 = vsub.f32 %v3892, %v3899
        %v3902 = vmul.f32 %v3900, %v3900
        %v3903 = vmul.f32 %v3901, %v3901
        %3904 = vadd.xlane.f32.xlu0 %v3902
        %v3905 = vpop.xlane.xlu0 %3904
        %3906 = vadd.xlane.f32.xlu0 %v3903
        %v3907 = vpop.xlane.xlu0 %3906
        %v3908 = vmul.f32 %v3905, %v3897
        %v3909 = vmul.f32 %v3907, %v3897
        %v3910 = vadd.f32 %v3908, 1e-05
        %v3911 = vadd.f32 %v3909, 1e-05
        %v3912 = vrsqrt.pop %v3910
        %v3913 = vrsqrt.pop %v3911
        %v3914 = vmul.f32 %v3900, %v3912
        %v3915 = vmul.f32 %v3901, %v3913
        %v3916 = vld [vmem:[%s695] sm:$0x1]
        %v3918 = vlaneseq
        %v3919 = vshrl.u32 %v3918, 7
        %v3920 = vsub.s32 0, %v3919
        %v3921 = vrot.slane %v3916, %v3920
        %v3923 = vmul.f32 %v3914, %v3921
        %v3924 = vmul.f32 %v3915, %v3921
        %v3925 = vld [vmem:[%s698] sm:$0x1]
        %v3927 = vlaneseq
        %v3928 = vshrl.u32 %v3927, 7
        %v3929 = vsub.s32 0, %v3928
        %v3930 = vrot.slane %v3925, %v3929
        %v3932 = vadd.f32 %v3923, %v3930
        %v3933 = vadd.f32 %v3924, %v3930
        %v3934 = vpack.c.bf16 %v3933, %v3932
        %v3935 = vld [vmem:[%s703] sm:$0xff]
        %v3936 = vld [vmem:[%s703 + $0x8] sm:$0xff]
        %v3937 = vld [vmem:[%s703 + $0x10] sm:$0xff]
        %v3938 = vld [vmem:[%s703 + $0x18] sm:$0xff]
        %v3939 = vld [vmem:[%s703 + $0x20] sm:$0xff]
        %v3940 = vld [vmem:[%s703 + $0x28] sm:$0xff]
        %v3941 = vld [vmem:[%s703 + $0x30] sm:$0xff]
        %v3942 = vld [vmem:[%s703 + $0x38] sm:$0xff]
        %v3943 = vld [vmem:[%s703 + $0x40] sm:$0xff]
        %v3944 = vld [vmem:[%s703 + $0x48] sm:$0xff]
        %v3945 = vld [vmem:[%s703 + $0x50] sm:$0xff]
        %v3946 = vld [vmem:[%s703 + $0x58] sm:$0xff]
        %v3947 = vld [vmem:[%s703 + $0x60] sm:$0xff]
        %v3948 = vld [vmem:[%s703 + $0x68] sm:$0xff]
        %v3949 = vld [vmem:[%s703 + $0x70] sm:$0xff]
        %v3950 = vld [vmem:[%s703 + $0x78] sm:$0xff]
        %v3951 = vld [vmem:[%s707] sm:$0x3]
        %v3953 = vlaneseq
        %v3954 = vshrl.u32 %v3953, 7
        %v3955 = vsub.s32 0, %v3954
        %v3956 = vrot.slane %v3951, %v3955
        %v3957 = vlaneseq
        %v3958 = vshrl.u32 %v3957, 7
        %v3959 = vsub.s32 1, %v3958
        %v3960 = vrot.slane %v3951, %v3959
        %v3979 = vunpack.c.l.b16 %v3935
        %v3980 = vunpack.c.h.b16 %v3935
        %v3981 = vunpack.c.l.b16 %v3936
        %v3982 = vunpack.c.h.b16 %v3936
        %v3983 = vunpack.c.l.b16 %v3937
        %v3984 = vunpack.c.h.b16 %v3937
        %v3985 = vunpack.c.l.b16 %v3938
        %v3986 = vunpack.c.h.b16 %v3938
        %v3987 = vunpack.c.l.b16 %v3939
        %v3988 = vunpack.c.h.b16 %v3939
        %v3989 = vunpack.c.l.b16 %v3940
        %v3990 = vunpack.c.h.b16 %v3940
        %v3991 = vunpack.c.l.b16 %v3941
        %v3992 = vunpack.c.h.b16 %v3941
        %v3993 = vunpack.c.l.b16 %v3942
        %v3994 = vunpack.c.h.b16 %v3942
        %v3995 = vunpack.c.l.b16 %v3943
        %v3996 = vunpack.c.h.b16 %v3943
        %v3997 = vunpack.c.l.b16 %v3944
        %v3998 = vunpack.c.h.b16 %v3944
        %v3999 = vunpack.c.l.b16 %v3945
        %v4000 = vunpack.c.h.b16 %v3945
        %v4001 = vunpack.c.l.b16 %v3946
        %v4002 = vunpack.c.h.b16 %v3946
        %v4003 = vunpack.c.l.b16 %v3947
        %v4004 = vunpack.c.h.b16 %v3947
        %v4005 = vunpack.c.l.b16 %v3948
        %v4006 = vunpack.c.h.b16 %v3948
        %v4007 = vunpack.c.l.b16 %v3949
        %v4008 = vunpack.c.h.b16 %v3949
        %v4009 = vunpack.c.l.b16 %v3950
        %v4010 = vunpack.c.h.b16 %v3950
        %v4011 = vpack.c.b16 %v3981, %v3979
        %v4012 = vpack.c.b16 %v3982, %v3980
        %v4013 = vpack.c.b16 %v3985, %v3983
        %v4014 = vpack.c.b16 %v3986, %v3984
        %v4015 = vpack.c.b16 %v3989, %v3987
        %v4016 = vpack.c.b16 %v3990, %v3988
        %v4017 = vpack.c.b16 %v3993, %v3991
        %v4018 = vpack.c.b16 %v3994, %v3992
        %v4019 = vpack.c.b16 %v3997, %v3995
        %v4020 = vpack.c.b16 %v3998, %v3996
        %v4021 = vpack.c.b16 %v4001, %v3999
        %v4022 = vpack.c.b16 %v4002, %v4000
        %v4023 = vpack.c.b16 %v4005, %v4003
        %v4024 = vpack.c.b16 %v4006, %v4004
        %v4025 = vpack.c.b16 %v4009, %v4007
        %v4026 = vpack.c.b16 %v4010, %v4008
        %4043 = vmatprep.subr.bf16.mxu0 %v4012
        %4044 = vmatpush1.bf16.msra.mxu0 %v4011
        %4045 = vmatprep.subr.bf16.mxu0 %v4014
        %4046 = vmatpush1.bf16.msra.mxu0 %v4013
        %4047 = vmatprep.subr.bf16.mxu0 %v4016
        %4048 = vmatpush1.bf16.msra.mxu0 %v4015
        %4049 = vmatprep.subr.bf16.mxu0 %v4018
        %4050 = vmatpush1.bf16.msra.mxu0 %v4017
        %4051 = vmatprep.subr.bf16.mxu0 %v4020
        %4052 = vmatpush1.bf16.msra.mxu0 %v4019
        %4053 = vmatprep.subr.bf16.mxu0 %v4022
        %4054 = vmatpush1.bf16.msra.mxu0 %v4021
        %4055 = vmatprep.subr.bf16.mxu0 %v4024
        %4056 = vmatpush1.bf16.msra.mxu0 %v4023
        %4057 = vmatprep.subr.bf16.mxu0 %v4026
        %4058 = vmatpush1.bf16.msra.mxu0 %v4025
        %4059 = vmatprep.subr.bf16.mxu0 0
        %4060 = vmatpush1.bf16.msra.mxu0 0
        %4061 = vmatprep.subr.bf16.mxu0 0
        %4062 = vmatpush1.bf16.msra.mxu0 0
        %4063 = vmatprep.subr.bf16.mxu0 0
        %4064 = vmatpush1.bf16.msra.mxu0 0
        %4065 = vmatprep.subr.bf16.mxu0 0
        %4066 = vmatpush1.bf16.msra.mxu0 0
        %4067 = vmatprep.subr.bf16.mxu0 0
        %4068 = vmatpush1.bf16.msra.mxu0 0
        %4069 = vmatprep.subr.bf16.mxu0 0
        %4070 = vmatpush1.bf16.msra.mxu0 0
        %4071 = vmatprep.subr.bf16.mxu0 0
        %4072 = vmatpush1.bf16.msra.mxu0 0
        %4073 = vmatprep.subr.bf16.mxu0 0
        %4074 = vmatpush1.bf16.msra.mxu0 0
        %4075 = vmatprep.mubr.bf16.mxu0 0
        %4076 = vmatmul.mubr.bf16.gmra.mrb[0].mxu0 %v3934
        %v4077 = vpop.f32.mrb[0].mxu0
        %v4078 = vadd.f32 %v3956, %v4077
        %v4079 = vpop.f32.mrb[0].mxu0
        %v4080 = vadd.f32 %v3960, %v4079
        %v4081 = vpop.f32.mrb[0].mxu0
        %v4082 = vadd.f32 %v3956, %v4081
        %v4083 = vpop.f32.mrb[0].mxu0
        %v4084 = vadd.f32 %v3960, %v4083
        %4085 = vdwg.mxu0
        %v4086 = vmax.f32 %v4078, 0.0
        %v4087 = vmax.f32 %v4080, 0.0
        %v4088 = vmax.f32 %v4082, 0.0
        %v4089 = vmax.f32 %v4084, 0.0
        %v4090 = vpack.c.bf16 %v4088, %v4086
        %v4091 = vpack.c.bf16 %v4089, %v4087
        %v4092 = vld [vmem:[%s712] sm:$0xf]
        %v4093 = vld [vmem:[%s712 + $0x4] sm:$0xf]
        %v4094 = vld [vmem:[%s712 + $0x8] sm:$0xf]
        %v4095 = vld [vmem:[%s712 + $0xc] sm:$0xf]
        %v4096 = vld [vmem:[%s712 + $0x10] sm:$0xf]
        %v4097 = vld [vmem:[%s712 + $0x14] sm:$0xf]
        %v4098 = vld [vmem:[%s712 + $0x18] sm:$0xf]
        %v4099 = vld [vmem:[%s712 + $0x1c] sm:$0xf]
        %v4100 = vld [vmem:[%s712 + $0x20] sm:$0xf]
        %v4101 = vld [vmem:[%s712 + $0x24] sm:$0xf]
        %v4102 = vld [vmem:[%s712 + $0x28] sm:$0xf]
        %v4103 = vld [vmem:[%s712 + $0x2c] sm:$0xf]
        %v4104 = vld [vmem:[%s712 + $0x30] sm:$0xf]
        %v4105 = vld [vmem:[%s712 + $0x34] sm:$0xf]
        %v4106 = vld [vmem:[%s712 + $0x38] sm:$0xf]
        %v4107 = vld [vmem:[%s712 + $0x3c] sm:$0xf]
        %v4108 = vld [vmem:[%s712 + $0x40] sm:$0xf]
        %v4109 = vld [vmem:[%s712 + $0x44] sm:$0xf]
        %v4110 = vld [vmem:[%s712 + $0x48] sm:$0xf]
        %v4111 = vld [vmem:[%s712 + $0x4c] sm:$0xf]
        %v4112 = vld [vmem:[%s712 + $0x50] sm:$0xf]
        %v4113 = vld [vmem:[%s712 + $0x54] sm:$0xf]
        %v4114 = vld [vmem:[%s712 + $0x58] sm:$0xf]
        %v4115 = vld [vmem:[%s712 + $0x5c] sm:$0xf]
        %v4116 = vld [vmem:[%s712 + $0x60] sm:$0xf]
        %v4117 = vld [vmem:[%s712 + $0x64] sm:$0xf]
        %v4118 = vld [vmem:[%s712 + $0x68] sm:$0xf]
        %v4119 = vld [vmem:[%s712 + $0x6c] sm:$0xf]
        %v4120 = vld [vmem:[%s712 + $0x70] sm:$0xf]
        %v4121 = vld [vmem:[%s712 + $0x74] sm:$0xf]
        %v4122 = vld [vmem:[%s712 + $0x78] sm:$0xf]
        %v4123 = vld [vmem:[%s712 + $0x7c] sm:$0xf]
        %v4124 = vld [vmem:[%s715] sm:$0x1]
        %v4126 = vlaneseq
        %v4127 = vshrl.u32 %v4126, 7
        %v4128 = vsub.s32 0, %v4127
        %v4129 = vrot.slane %v4124, %v4128
        %v4163 = vunpack.c.l.b16 %v4092
        %v4164 = vunpack.c.l.b16 %v4093
        %v4165 = vunpack.c.l.b16 %v4094
        %v4166 = vunpack.c.l.b16 %v4095
        %v4167 = vunpack.c.l.b16 %v4096
        %v4168 = vunpack.c.l.b16 %v4097
        %v4169 = vunpack.c.l.b16 %v4098
        %v4170 = vunpack.c.l.b16 %v4099
        %v4171 = vunpack.c.l.b16 %v4100
        %v4172 = vunpack.c.l.b16 %v4101
        %v4173 = vunpack.c.l.b16 %v4102
        %v4174 = vunpack.c.l.b16 %v4103
        %v4175 = vunpack.c.l.b16 %v4104
        %v4176 = vunpack.c.l.b16 %v4105
        %v4177 = vunpack.c.l.b16 %v4106
        %v4178 = vunpack.c.l.b16 %v4107
        %v4179 = vunpack.c.l.b16 %v4108
        %v4180 = vunpack.c.l.b16 %v4109
        %v4181 = vunpack.c.l.b16 %v4110
        %v4182 = vunpack.c.l.b16 %v4111
        %v4183 = vunpack.c.l.b16 %v4112
        %v4184 = vunpack.c.l.b16 %v4113
        %v4185 = vunpack.c.l.b16 %v4114
        %v4186 = vunpack.c.l.b16 %v4115
        %v4187 = vunpack.c.l.b16 %v4116
        %v4188 = vunpack.c.l.b16 %v4117
        %v4189 = vunpack.c.l.b16 %v4118
        %v4190 = vunpack.c.l.b16 %v4119
        %v4191 = vunpack.c.l.b16 %v4120
        %v4192 = vunpack.c.l.b16 %v4121
        %v4193 = vunpack.c.l.b16 %v4122
        %v4194 = vunpack.c.l.b16 %v4123
        %v4195 = vpack.c.b16 %v4164, %v4163
        %v4196 = vpack.c.b16 %v4166, %v4165
        %v4197 = vpack.c.b16 %v4168, %v4167
        %v4198 = vpack.c.b16 %v4170, %v4169
        %v4199 = vpack.c.b16 %v4172, %v4171
        %v4200 = vpack.c.b16 %v4174, %v4173
        %v4201 = vpack.c.b16 %v4176, %v4175
        %v4202 = vpack.c.b16 %v4178, %v4177
        %v4203 = vpack.c.b16 %v4180, %v4179
        %v4204 = vpack.c.b16 %v4182, %v4181
        %v4205 = vpack.c.b16 %v4184, %v4183
        %v4206 = vpack.c.b16 %v4186, %v4185
        %v4207 = vpack.c.b16 %v4188, %v4187
        %v4208 = vpack.c.b16 %v4190, %v4189
        %v4209 = vpack.c.b16 %v4192, %v4191
        %v4210 = vpack.c.b16 %v4194, %v4193
        %4227 = vmatprep.subr.bf16.mxu0 0
        %4228 = vmatpush1.bf16.msra.mxu0 %v4195
        %4229 = vmatprep.subr.bf16.mxu0 0
        %4230 = vmatpush1.bf16.msra.mxu0 %v4196
        %4231 = vmatprep.subr.bf16.mxu0 0
        %4232 = vmatpush1.bf16.msra.mxu0 %v4197
        %4233 = vmatprep.subr.bf16.mxu0 0
        %4234 = vmatpush1.bf16.msra.mxu0 %v4198
        %4235 = vmatprep.subr.bf16.mxu0 0
        %4236 = vmatpush1.bf16.msra.mxu0 %v4199
        %4237 = vmatprep.subr.bf16.mxu0 0
        %4238 = vmatpush1.bf16.msra.mxu0 %v4200
        %4239 = vmatprep.subr.bf16.mxu0 0
        %4240 = vmatpush1.bf16.msra.mxu0 %v4201
        %4241 = vmatprep.subr.bf16.mxu0 0
        %4242 = vmatpush1.bf16.msra.mxu0 %v4202
        %4243 = vmatprep.subr.bf16.mxu0 0
        %4244 = vmatpush1.bf16.msra.mxu0 %v4203
        %4245 = vmatprep.subr.bf16.mxu0 0
        %4246 = vmatpush1.bf16.msra.mxu0 %v4204
        %4247 = vmatprep.subr.bf16.mxu0 0
        %4248 = vmatpush1.bf16.msra.mxu0 %v4205
        %4249 = vmatprep.subr.bf16.mxu0 0
        %4250 = vmatpush1.bf16.msra.mxu0 %v4206
        %4251 = vmatprep.subr.bf16.mxu0 0
        %4252 = vmatpush1.bf16.msra.mxu0 %v4207
        %4253 = vmatprep.subr.bf16.mxu0 0
        %4254 = vmatpush1.bf16.msra.mxu0 %v4208
        %4255 = vmatprep.subr.bf16.mxu0 0
        %4256 = vmatpush1.bf16.msra.mxu0 %v4209
        %4257 = vmatprep.subr.bf16.mxu0 0
        %4258 = vmatpush1.bf16.msra.mxu0 %v4210
        %4259 = vmatprep.mubr.bf16.mxu0 %v4091
        %4260 = vmatmul.mubr.bf16.gmra.mrb[0].mxu0 %v4090
        %v4261 = vpop.f32.mrb[0].mxu0
        %v4262 = vadd.f32 %v4129, %v4261
        %v4263 = vpop.f32.mrb[0].mxu0
        %v4264 = vpop.f32.mrb[0].mxu0
        %v4265 = vadd.f32 %v4129, %v4264
        %v4266 = vpop.f32.mrb[0].mxu0
        %4267 = vdwg.mxu0
        %v4268 = vadd.f32 %v3932, %v4262
        %v4269 = vadd.f32 %v3933, %v4265
        %4270 = vadd.xlane.f32.xlu0 %v4268
        %v4271 = vpop.xlane.xlu0 %4270
        %4272 = vadd.xlane.f32.xlu0 %v4269
        %v4273 = vpop.xlane.xlu0 %4272
        %v4274 = vmul.f32 %v4271, %v3897
        %v4275 = vmul.f32 %v4273, %v3897
        %v4276 = vsub.f32 %v4268, %v4274
        %v4277 = vsub.f32 %v4269, %v4275
        %v4278 = vmul.f32 %v4276, %v4276
        %v4279 = vmul.f32 %v4277, %v4277
        %4280 = vadd.xlane.f32.xlu0 %v4278
        %v4281 = vpop.xlane.xlu0 %4280
        %4282 = vadd.xlane.f32.xlu0 %v4279
        %v4283 = vpop.xlane.xlu0 %4282
        %v4284 = vmul.f32 %v4281, %v3897
        %v4285 = vmul.f32 %v4283, %v3897
        %v4286 = vadd.f32 %v4284, 1e-05
        %v4287 = vadd.f32 %v4285, 1e-05
        %v4288 = vrsqrt.pop %v4286
        %v4289 = vrsqrt.pop %v4287
        %v4290 = vmul.f32 %v4276, %v4288
        %v4291 = vmul.f32 %v4277, %v4289
        %v4292 = vld [vmem:[%s718] sm:$0x1]
        %v4294 = vlaneseq
        %v4295 = vshrl.u32 %v4294, 7
        %v4296 = vsub.s32 0, %v4295
        %v4297 = vrot.slane %v4292, %v4296
        %v4299 = vmul.f32 %v4290, %v4297
        %v4300 = vmul.f32 %v4291, %v4297
        %v4301 = vld [vmem:[%s721] sm:$0x1]
        %v4303 = vlaneseq
        %v4304 = vshrl.u32 %v4303, 7
        %v4305 = vsub.s32 0, %v4304
        %v4306 = vrot.slane %v4301, %v4305
        %v4308 = vadd.f32 %v4299, %v4306
        %v4309 = vadd.f32 %v4300, %v4306
        %4310 = vst [vmem:[#allocation2] sm:$0xff] %v4308
        %4311 = vst [vmem:[#allocation2 + $0x8] sm:$0xff] %v4309
        %p4312 = scmp.eq.s32.totalorder %s29, 1
        // Predicated region
        $region93: #{tpu_custom_call.1} parent=87 // pred_check
          %p4313 = pneg %p4312
        $region94: #{tpu_custom_call.1} parent=87 // pred_check_branch
          %4315 = sbr.rel (%p4313) target = $region96
        $region95: #{tpu_custom_call.1} parent=87 // pred_region
          %4316 = vst [vmem:[#allocation3] sm:$0xff] %v4308
          %4317 = vst [vmem:[#allocation3 + $0x8] sm:$0xff] %v4309
        $region96: #{tpu_custom_call.1} parent=87 // pred_fallthru
          _
        // Predicated region
        $region97: #{tpu_custom_call.1} parent=87 // pred_check
          %p4318 = pneg %p459
        $region98: #{tpu_custom_call.1} parent=87 // pred_check_branch
          %4320 = sbr.rel (%p4318) target = $region100
        $region99: #{tpu_custom_call.1} parent=87 // pred_region
          %s4322 = ssub.s32 256, 256
          %4323 = vsyncadd [#allocation4], %s4322
          %s4324 = sshll.u32 [#allocation3], 4
          %s4325 = int_to_ptr.vmem [resolvable:$true] %s4324
          %4330 = dma.vmem_to_hbm [thread:$0]  %s4325, 256, %s17, [#allocation4], 128, 128, 8
        $region100: #{tpu_custom_call.1} parent=87 // pred_fallthru
          _
        // Predicated region
        $region101: #{tpu_custom_call.1} parent=87 // pred_check
          %p4331 = pneg %p459
        $region102: #{tpu_custom_call.1} parent=87 // pred_check_branch
          %4333 = sbr.rel (%p4331) target = $region104
        $region103: #{tpu_custom_call.1} parent=87 // pred_region
          %4334 = dma.done [#allocation4], 256
        $region104: #{tpu_custom_call.1} parent=87 // pred_fallthru
          _
      $region88: #{tpu_custom_call.1} parent=5 // pred_fallthru
        _
      %p4335 = scmp.le.s32.totalorder 2, %s24
      // Predicated region
      $region105: #{tpu_custom_call.1} parent=5 // pred_check
        %p4336 = pneg %p4335
      $region106: #{tpu_custom_call.1} parent=5 // pred_check_branch
        %4338 = sbr.rel (%p4336) target = $region108
      $region107: #{tpu_custom_call.1} parent=5 // pred_region
        %s4339 = ssub.s32 %s24, 2
      $region108: #{tpu_custom_call.1} parent=5 // pred_fallthru
        _
    $region6: #{tpu_custom_call.1} parent=1 // loop_footer
      %s28 = sadd.s32 1, %s24
    $region7: #{tpu_custom_call.1} parent=1 // loop_footer_branch
      %23 = sbr.rel target = $region3
    $region8: #{tpu_custom_call.1} parent=1 // loop_exit
      _
    %4340 = vsyncpa [#allocation4], 1
    %s4341 = scalar_lea.sflag [#allocation4], 1
    %4342 = vsyncpa %s4341, 1

</llo_original>
